<compile_context>
chip_gen: v6e
topology: v6e:2x2x1
jax: 0.10.0
libtpu: 0.0.40
codegen_flags: <defaults>
</compile_context>

<pallas_src>
import jax
import jax.numpy as jnp
from jax import lax
from jax.experimental import pallas as pl
from jax.experimental.pallas import tpu as pltpu
import numpy as np


# ---------------------------------------------------------------------------
# Fused kernel (one batch element per grid step).
#   x2_ref, x1_ref : (1, H, W, C)
#   w1_ref         : (9*2C, C)      -- conv1 weight reshaped (kh, kw, cin) x cout
#   b1_ref         : (1, C)
#   w2_ref         : (9*C, C)       -- conv2 weight reshaped
#   b2_ref         : (1, C)
#   wu_ref         : (C, 4*Cout)    -- up-conv weight, columns ordered (dh, dw, cout)
#   bu_ref         : (1, 4*Cout)    -- up-conv bias tiled over the 4 phases
#   o_ref          : (1, H, 2, W, 2*Cout)  -- row-major identical to (1, 2H, 2W, Cout)
#   xpad_ref       : VMEM (H+2, W+2, 2C) scratch (zero-padded concat input)
#   h1pad_ref      : VMEM (H+2, W+2, C)  scratch (zero-padded conv1 output)
# ---------------------------------------------------------------------------
def upblock_kernel(x2_ref, x1_ref, w1_ref, b1_ref, w2_ref, b2_ref,
                   wu_ref, bu_ref, o_ref, xpad_ref, h1pad_ref):
    _, H, W, C = x1_ref.shape
    C2 = 2 * C
    HW = H * W
    two_cout = o_ref.shape[-1]            # 2 * Cout

    # --- stage 0: channel-concat(x2, x1) into zero-padded VMEM scratch -----
    xpad_ref[...] = jnp.zeros_like(xpad_ref)
    xcat = jnp.concatenate([x2_ref[0], x1_ref[0]], axis=-1)        # (H, W, 2C)
    xpad_ref[pl.ds(1, H), pl.ds(1, W), :] = xcat
    xp = xpad_ref[...]                                             # (H+2, W+2, 2C)

    # --- conv1 3x3 + ReLU: one im2col matmul, K = 9*2C ---------------------
    cols = [xp[kh:kh + H, kw:kw + W, :].reshape(HW, C2)
            for kh in range(3) for kw in range(3)]
    slab = jnp.concatenate(cols, axis=-1)                          # (HW, 9*2C)
    h1 = jnp.dot(slab, w1_ref[...], preferred_element_type=jnp.float32)
    h1 = jnp.maximum(h1 + b1_ref[...], 0.0)                        # (HW, C)

    # --- conv2 3x3 + ReLU: pad in VMEM, one im2col matmul, K = 9*C ---------
    h1pad_ref[...] = jnp.zeros_like(h1pad_ref)
    h1pad_ref[pl.ds(1, H), pl.ds(1, W), :] = h1.reshape(H, W, C)
    hp = h1pad_ref[...]                                            # (H+2, W+2, C)
    cols2 = [hp[kh:kh + H, kw:kw + W, :].reshape(HW, C)
             for kh in range(3) for kw in range(3)]
    slab2 = jnp.concatenate(cols2, axis=-1)                        # (HW, 9*C)
    h2 = jnp.dot(slab2, w2_ref[...], preferred_element_type=jnp.float32)
    h2 = jnp.maximum(h2 + b2_ref[...], 0.0)                        # (HW, C)

    # --- ConvTranspose2d k=2 s=2 + ReLU: one matmul + in-kernel interleave -
    # y[m, dh*2Cout + dw*Cout + c] = out[2i+dh, 2j+dw, c], m = i*W + j
    y = jnp.dot(h2, wu_ref[...], preferred_element_type=jnp.float32)
    y = jnp.maximum(y + bu_ref[...], 0.0)                          # (HW, 4*Cout)
    pe = y[:, :two_cout].reshape(H, W, two_cout)                   # dh = 0 phases
    po = y[:, two_cout:].reshape(H, W, two_cout)                   # dh = 1 phases
    # (H, 2, W, 2*Cout) is row-major identical to (2H, 2W, Cout): interleave is free.
    o_ref[0] = jnp.concatenate(
        [pe.reshape(H, 1, W, two_cout), po.reshape(H, 1, W, two_cout)], axis=1)


# ---------------------------------------------------------------------------
# Wrapper: weight re-layout (host side, free) + single pallas_call.
# ---------------------------------------------------------------------------
def up_block_forward(x1, x2, params):
    """UpBlock.forward: cat([x2, x1], channel) -> conv3x3+ReLU -> conv3x3+ReLU
       -> ConvTranspose2d(k=2,s=2)+ReLU."""
    N, H, W, C = x1.shape
    C2 = 2 * C
    Cout = params["wu"].shape[-1]

    w1f = params["w1"].reshape(9 * C2, C)                          # (kh,kw,cin) x cout
    w2f = params["w2"].reshape(9 * C, C)
    wuf = params["wu"].transpose(2, 0, 1, 3).reshape(C, 4 * Cout)  # cin x (dh,dw,cout)
    b1r = params["b1"].reshape(1, C)
    b2r = params["b2"].reshape(1, C)
    bur = jnp.tile(params["bu"], 4).reshape(1, 4 * Cout)

    out5 = pl.pallas_call(
        upblock_kernel,
        out_shape=jax.ShapeDtypeStruct((N, H, 2, W, 2 * Cout), jnp.float32),
        grid=(N,),
        in_specs=[
            pl.BlockSpec((1, H, W, C), lambda n: (n, 0, 0, 0)),
            pl.BlockSpec((1, H, W, C), lambda n: (n, 0, 0, 0)),
            pl.BlockSpec((9 * C2, C), lambda n: (0, 0)),
            pl.BlockSpec((1, C), lambda n: (0, 0)),
            pl.BlockSpec((9 * C, C), lambda n: (0, 0)),
            pl.BlockSpec((1, C), lambda n: (0, 0)),
            pl.BlockSpec((C, 4 * Cout), lambda n: (0, 0)),
            pl.BlockSpec((1, 4 * Cout), lambda n: (0, 0)),
        ],
        out_specs=pl.BlockSpec((1, H, 2, W, 2 * Cout), lambda n: (n, 0, 0, 0, 0)),
        scratch_shapes=[
            pltpu.VMEM((H + 2, W + 2, C2), jnp.float32),
            pltpu.VMEM((H + 2, W + 2, C), jnp.float32),
        ],
        compiler_params=pltpu.CompilerParams(dimension_semantics=("parallel",)),
    )(x2, x1, w1f, b1r, w2f, b2r, wuf, bur)

    # Pure metadata reshape (contiguity preserving): (N,H,2,W,2*Cout) -> (N,2H,2W,Cout)
    return out5.reshape(N, 2 * H, 2 * W, Cout)


# ---------------------------------------------------------------------------
# Pure-JAX reference (independent code path: XLA conv + einsum)
# ---------------------------------------------------------------------------
def ref_forward(x1, x2, params):
    x = jnp.concatenate([x2, x1], axis=-1)
    dn = lax.conv_dimension_numbers(x.shape, params["w1"].shape,
                                    ("NHWC", "HWIO", "NHWC"))
    h = lax.conv_general_dilated(x, params["w1"], (1, 1), "SAME",
                                 dimension_numbers=dn) + params["b1"]
    h = jnp.maximum(h, 0.0)
    h = lax.conv_general_dilated(h, params["w2"], (1, 1), "SAME",
                                 dimension_numbers=dn) + params["b2"]
    h = jnp.maximum(h, 0.0)
    N, H, W, _ = h.shape
    Cout = params["wu"].shape[-1]
    y = jnp.einsum("nhwi,abio->nhawbo", h, params["wu"])
    y = y.reshape(N, 2 * H, 2 * W, Cout) + params["bu"]
    return jnp.maximum(y, 0.0)


if __name__ == "__main__":
    # UpBlock(in_channels=4, out_channels=6); x1, x2 each have 4 channels, 16x16 spatial.
    N, C_in, C_out, H, W = 2, 4, 6, 16, 16

    key = jax.random.PRNGKey(0)
    k1, k2, k3, k4, k5 = jax.random.split(key, 5)

    params = {
        # DoubleConvBlock(2*C_in -> C_in): conv1 (2*C_in -> C_in), conv2 (C_in -> C_in)
        "w1": jax.random.normal(k1, (3, 3, 2 * C_in, C_in), jnp.float32) * 0.1,
        "b1": jax.random.normal(k2, (C_in,), jnp.float32) * 0.1,
        "w2": jax.random.normal(k3, (3, 3, C_in, C_in), jnp.float32) * 0.1,
        "b2": jax.random.normal(k4, (C_in,), jnp.float32) * 0.1,
        # ConvTranspose2d(C_in -> C_out, kernel=2, stride=2)
        "wu": jax.random.normal(k5, (2, 2, C_in, C_out), jnp.float32) * 0.1,
        "bu": jnp.linspace(-0.1, 0.1, C_out, dtype=jnp.float32),
    }

    kx1, kx2 = jax.random.split(jax.random.PRNGKey(42))
    x1 = jax.random.normal(kx1, (N, H, W, C_in), jnp.float32)
    x2 = jax.random.normal(kx2, (N, H, W, C_in), jnp.float32)

    out = jax.block_until_ready(up_block_forward(x1, x2, params))
    assert out.shape == (N, 2 * H, 2 * W, C_out), out.shape

    ref = jax.block_until_ready(ref_forward(x1, x2, params))
    np.testing.assert_allclose(np.asarray(out), np.asarray(ref),
                               rtol=1e-4, atol=1e-4)

    print("KERNEL_OK")
</pallas_src>

<mosaic_0001>
module attributes {stable_mosaic.version = 11 : i64} {
  func.func @upblock_kernel(%arg0: i32, %arg1: memref<1x16x16x4xf32, #tpu.memory_space<vmem>>, %arg2: memref<1x16x16x4xf32, #tpu.memory_space<vmem>>, %arg3: memref<72x4xf32, #tpu.memory_space<vmem>>, %arg4: memref<1x4xf32, #tpu.memory_space<vmem>>, %arg5: memref<36x4xf32, #tpu.memory_space<vmem>>, %arg6: memref<1x4xf32, #tpu.memory_space<vmem>>, %arg7: memref<4x24xf32, #tpu.memory_space<vmem>>, %arg8: memref<1x24xf32, #tpu.memory_space<vmem>>, %arg9: memref<1x16x2x16x12xf32, #tpu.memory_space<vmem>>, %arg10: memref<18x18x8xf32, #tpu.memory_space<vmem>>, %arg11: memref<18x18x4xf32, #tpu.memory_space<vmem>>) attributes {dimension_semantics = [#tpu.dimension_semantics<parallel>], iteration_bounds = array<i64: 2>, scalar_prefetch = 0 : i64, scratch_operands = 2 : i64, tpu.core_type = #tpu.core_type<tc>, window_params = [{transform_indices = @transform_0, window_bounds = array<i64: 1, 16, 16, 4>}, {transform_indices = @transform_1, window_bounds = array<i64: 1, 16, 16, 4>}, {pipeline_mode = #tpu.pipeline_mode<synchronous>, transform_indices = @transform_2, window_bounds = array<i64: 72, 4>}, {pipeline_mode = #tpu.pipeline_mode<synchronous>, transform_indices = @transform_3, window_bounds = array<i64: 1, 4>}, {pipeline_mode = #tpu.pipeline_mode<synchronous>, transform_indices = @transform_4, window_bounds = array<i64: 36, 4>}, {pipeline_mode = #tpu.pipeline_mode<synchronous>, transform_indices = @transform_5, window_bounds = array<i64: 1, 4>}, {pipeline_mode = #tpu.pipeline_mode<synchronous>, transform_indices = @transform_6, window_bounds = array<i64: 4, 24>}, {pipeline_mode = #tpu.pipeline_mode<synchronous>, transform_indices = @transform_7, window_bounds = array<i64: 1, 24>}, {transform_indices = @transform_8, window_bounds = array<i64: 1, 16, 2, 16, 12>}]} {
    %cst = arith.constant 0.000000e+00 : f32
    %0 = vector.broadcast %cst : f32 to vector<18x18x8xf32>
    %c0 = arith.constant 0 : index
    %c0_0 = arith.constant 0 : index
    %c0_1 = arith.constant 0 : index
    %1 = vector.load %arg10[%c0, %c0_0, %c0_1] : memref<18x18x8xf32, #tpu.memory_space<vmem>>, vector<18x18x8xf32>
    tpu.vector_store %arg10[%c0, %c0_0, %c0_1], %0 {strides = array<i32>} : memref<18x18x8xf32, #tpu.memory_space<vmem>>, vector<18x18x8xf32>,
    %c0_2 = arith.constant 0 : index
    %c0_3 = arith.constant 0 : index
    %c0_4 = arith.constant 0 : index
    %c0_5 = arith.constant 0 : index
    %2 = vector.load %arg1[%c0_2, %c0_3, %c0_4, %c0_5] : memref<1x16x16x4xf32, #tpu.memory_space<vmem>>, vector<1x16x16x4xf32>
    %3 = vector.shape_cast %2 : vector<1x16x16x4xf32> to vector<16x16x4xf32>
    %c0_6 = arith.constant 0 : index
    %c0_7 = arith.constant 0 : index
    %c0_8 = arith.constant 0 : index
    %c0_9 = arith.constant 0 : index
    %4 = vector.load %arg2[%c0_6, %c0_7, %c0_8, %c0_9] : memref<1x16x16x4xf32, #tpu.memory_space<vmem>>, vector<1x16x16x4xf32>
    %5 = vector.shape_cast %4 : vector<1x16x16x4xf32> to vector<16x16x4xf32>
    %6 = tpu.concatenate %3, %5 in 2 : vector<16x16x4xf32>, vector<16x16x4xf32> -> vector<16x16x8xf32>
    %c1 = arith.constant 1 : index
    %c1_10 = arith.constant 1 : index
    %c0_11 = arith.constant 0 : index
    %7 = vector.load %arg10[%c1, %c1_10, %c0_11] : memref<18x18x8xf32, #tpu.memory_space<vmem>>, vector<16x16x8xf32>
    tpu.vector_store %arg10[%c1, %c1_10, %c0_11], %6 {strides = array<i32>} : memref<18x18x8xf32, #tpu.memory_space<vmem>>, vector<16x16x8xf32>,
    %c0_12 = arith.constant 0 : index
    %c0_13 = arith.constant 0 : index
    %c0_14 = arith.constant 0 : index
    %8 = vector.load %arg10[%c0_12, %c0_13, %c0_14] : memref<18x18x8xf32, #tpu.memory_space<vmem>>, vector<18x18x8xf32>
    %9 = vector.extract_strided_slice %8 {offsets = [0, 0, 0], sizes = [16, 16, 8], strides = [1, 1, 1]} : vector<18x18x8xf32> to vector<16x16x8xf32>
    %10 = vector.shape_cast %9 : vector<16x16x8xf32> to vector<256x8xf32>
    %11 = vector.extract_strided_slice %8 {offsets = [0, 1, 0], sizes = [16, 16, 8], strides = [1, 1, 1]} : vector<18x18x8xf32> to vector<16x16x8xf32>
    %12 = vector.shape_cast %11 : vector<16x16x8xf32> to vector<256x8xf32>
    %13 = vector.extract_strided_slice %8 {offsets = [0, 2, 0], sizes = [16, 16, 8], strides = [1, 1, 1]} : vector<18x18x8xf32> to vector<16x16x8xf32>
    %14 = vector.shape_cast %13 : vector<16x16x8xf32> to vector<256x8xf32>
    %15 = vector.extract_strided_slice %8 {offsets = [1, 0, 0], sizes = [16, 16, 8], strides = [1, 1, 1]} : vector<18x18x8xf32> to vector<16x16x8xf32>
    %16 = vector.shape_cast %15 : vector<16x16x8xf32> to vector<256x8xf32>
    %17 = vector.extract_strided_slice %8 {offsets = [1, 1, 0], sizes = [16, 16, 8], strides = [1, 1, 1]} : vector<18x18x8xf32> to vector<16x16x8xf32>
    %18 = vector.shape_cast %17 : vector<16x16x8xf32> to vector<256x8xf32>
    %19 = vector.extract_strided_slice %8 {offsets = [1, 2, 0], sizes = [16, 16, 8], strides = [1, 1, 1]} : vector<18x18x8xf32> to vector<16x16x8xf32>
    %20 = vector.shape_cast %19 : vector<16x16x8xf32> to vector<256x8xf32>
    %21 = vector.extract_strided_slice %8 {offsets = [2, 0, 0], sizes = [16, 16, 8], strides = [1, 1, 1]} : vector<18x18x8xf32> to vector<16x16x8xf32>
    %22 = vector.shape_cast %21 : vector<16x16x8xf32> to vector<256x8xf32>
    %23 = vector.extract_strided_slice %8 {offsets = [2, 1, 0], sizes = [16, 16, 8], strides = [1, 1, 1]} : vector<18x18x8xf32> to vector<16x16x8xf32>
    %24 = vector.shape_cast %23 : vector<16x16x8xf32> to vector<256x8xf32>
    %25 = vector.extract_strided_slice %8 {offsets = [2, 2, 0], sizes = [16, 16, 8], strides = [1, 1, 1]} : vector<18x18x8xf32> to vector<16x16x8xf32>
    %26 = vector.shape_cast %25 : vector<16x16x8xf32> to vector<256x8xf32>
    %27 = tpu.concatenate %10, %12, %14, %16, %18, %20, %22, %24, %26 in 1 : vector<256x8xf32>, vector<256x8xf32>, vector<256x8xf32>, vector<256x8xf32>, vector<256x8xf32>, vector<256x8xf32>, vector<256x8xf32>, vector<256x8xf32>, vector<256x8xf32> -> vector<256x72xf32>
    %c0_15 = arith.constant 0 : index
    %c0_16 = arith.constant 0 : index
    %28 = vector.load %arg3[%c0_15, %c0_16] : memref<72x4xf32, #tpu.memory_space<vmem>>, vector<72x4xf32>
    %cst_17 = arith.constant dense<0.000000e+00> : vector<256x4xf32>
    %29 = tpu.matmul %27, %28, %cst_17 {dimension_numbers = #tpu.dot_dimension_numbers<[1], [0], [0], [1], [0, 0, 1, 1], [], []>} : vector<256x72xf32>, vector<72x4xf32>, vector<256x4xf32> -> vector<256x4xf32>
    %c0_18 = arith.constant 0 : index
    %c0_19 = arith.constant 0 : index
    %30 = vector.load %arg4[%c0_18, %c0_19] : memref<1x4xf32, #tpu.memory_space<vmem>>, vector<1x4xf32>
    %31 = vector.broadcast %30 : vector<1x4xf32> to vector<256x4xf32>
    %32 = arith.addf %29, %31 : vector<256x4xf32>
    %cst_20 = arith.constant 0.000000e+00 : f32
    %33 = vector.broadcast %cst_20 : f32 to vector<256x4xf32>
    %34 = arith.maximumf %32, %33 : vector<256x4xf32>
    %cst_21 = arith.constant 0.000000e+00 : f32
    %35 = vector.broadcast %cst_21 : f32 to vector<18x18x4xf32>
    %c0_22 = arith.constant 0 : index
    %c0_23 = arith.constant 0 : index
    %c0_24 = arith.constant 0 : index
    %36 = vector.load %arg11[%c0_22, %c0_23, %c0_24] : memref<18x18x4xf32, #tpu.memory_space<vmem>>, vector<18x18x4xf32>
    tpu.vector_store %arg11[%c0_22, %c0_23, %c0_24], %35 {strides = array<i32>} : memref<18x18x4xf32, #tpu.memory_space<vmem>>, vector<18x18x4xf32>,
    %37 = vector.shape_cast %34 : vector<256x4xf32> to vector<16x16x4xf32>
    %c1_25 = arith.constant 1 : index
    %c1_26 = arith.constant 1 : index
    %c0_27 = arith.constant 0 : index
    %38 = vector.load %arg11[%c1_25, %c1_26, %c0_27] : memref<18x18x4xf32, #tpu.memory_space<vmem>>, vector<16x16x4xf32>
    tpu.vector_store %arg11[%c1_25, %c1_26, %c0_27], %37 {strides = array<i32>} : memref<18x18x4xf32, #tpu.memory_space<vmem>>, vector<16x16x4xf32>,
    %c0_28 = arith.constant 0 : index
    %c0_29 = arith.constant 0 : index
    %c0_30 = arith.constant 0 : index
    %39 = vector.load %arg11[%c0_28, %c0_29, %c0_30] : memref<18x18x4xf32, #tpu.memory_space<vmem>>, vector<18x18x4xf32>
    %40 = vector.extract_strided_slice %39 {offsets = [0, 0, 0], sizes = [16, 16, 4], strides = [1, 1, 1]} : vector<18x18x4xf32> to vector<16x16x4xf32>
    %41 = vector.shape_cast %40 : vector<16x16x4xf32> to vector<256x4xf32>
    %42 = vector.extract_strided_slice %39 {offsets = [0, 1, 0], sizes = [16, 16, 4], strides = [1, 1, 1]} : vector<18x18x4xf32> to vector<16x16x4xf32>
    %43 = vector.shape_cast %42 : vector<16x16x4xf32> to vector<256x4xf32>
    %44 = vector.extract_strided_slice %39 {offsets = [0, 2, 0], sizes = [16, 16, 4], strides = [1, 1, 1]} : vector<18x18x4xf32> to vector<16x16x4xf32>
    %45 = vector.shape_cast %44 : vector<16x16x4xf32> to vector<256x4xf32>
    %46 = vector.extract_strided_slice %39 {offsets = [1, 0, 0], sizes = [16, 16, 4], strides = [1, 1, 1]} : vector<18x18x4xf32> to vector<16x16x4xf32>
    %47 = vector.shape_cast %46 : vector<16x16x4xf32> to vector<256x4xf32>
    %48 = vector.extract_strided_slice %39 {offsets = [1, 1, 0], sizes = [16, 16, 4], strides = [1, 1, 1]} : vector<18x18x4xf32> to vector<16x16x4xf32>
    %49 = vector.shape_cast %48 : vector<16x16x4xf32> to vector<256x4xf32>
    %50 = vector.extract_strided_slice %39 {offsets = [1, 2, 0], sizes = [16, 16, 4], strides = [1, 1, 1]} : vector<18x18x4xf32> to vector<16x16x4xf32>
    %51 = vector.shape_cast %50 : vector<16x16x4xf32> to vector<256x4xf32>
    %52 = vector.extract_strided_slice %39 {offsets = [2, 0, 0], sizes = [16, 16, 4], strides = [1, 1, 1]} : vector<18x18x4xf32> to vector<16x16x4xf32>
    %53 = vector.shape_cast %52 : vector<16x16x4xf32> to vector<256x4xf32>
    %54 = vector.extract_strided_slice %39 {offsets = [2, 1, 0], sizes = [16, 16, 4], strides = [1, 1, 1]} : vector<18x18x4xf32> to vector<16x16x4xf32>
    %55 = vector.shape_cast %54 : vector<16x16x4xf32> to vector<256x4xf32>
    %56 = vector.extract_strided_slice %39 {offsets = [2, 2, 0], sizes = [16, 16, 4], strides = [1, 1, 1]} : vector<18x18x4xf32> to vector<16x16x4xf32>
    %57 = vector.shape_cast %56 : vector<16x16x4xf32> to vector<256x4xf32>
    %58 = tpu.concatenate %41, %43, %45, %47, %49, %51, %53, %55, %57 in 1 : vector<256x4xf32>, vector<256x4xf32>, vector<256x4xf32>, vector<256x4xf32>, vector<256x4xf32>, vector<256x4xf32>, vector<256x4xf32>, vector<256x4xf32>, vector<256x4xf32> -> vector<256x36xf32>
    %c0_31 = arith.constant 0 : index
    %c0_32 = arith.constant 0 : index
    %59 = vector.load %arg5[%c0_31, %c0_32] : memref<36x4xf32, #tpu.memory_space<vmem>>, vector<36x4xf32>
    %cst_33 = arith.constant dense<0.000000e+00> : vector<256x4xf32>
    %60 = tpu.matmul %58, %59, %cst_33 {dimension_numbers = #tpu.dot_dimension_numbers<[1], [0], [0], [1], [0, 0, 1, 1], [], []>} : vector<256x36xf32>, vector<36x4xf32>, vector<256x4xf32> -> vector<256x4xf32>
    %c0_34 = arith.constant 0 : index
    %c0_35 = arith.constant 0 : index
    %61 = vector.load %arg6[%c0_34, %c0_35] : memref<1x4xf32, #tpu.memory_space<vmem>>, vector<1x4xf32>
    %62 = vector.broadcast %61 : vector<1x4xf32> to vector<256x4xf32>
    %63 = arith.addf %60, %62 : vector<256x4xf32>
    %cst_36 = arith.constant 0.000000e+00 : f32
    %64 = vector.broadcast %cst_36 : f32 to vector<256x4xf32>
    %65 = arith.maximumf %63, %64 : vector<256x4xf32>
    %c0_37 = arith.constant 0 : index
    %c0_38 = arith.constant 0 : index
    %66 = vector.load %arg7[%c0_37, %c0_38] : memref<4x24xf32, #tpu.memory_space<vmem>>, vector<4x24xf32>
    %cst_39 = arith.constant dense<0.000000e+00> : vector<256x24xf32>
    %67 = tpu.matmul %65, %66, %cst_39 {dimension_numbers = #tpu.dot_dimension_numbers<[1], [0], [0], [1], [0, 0, 1, 1], [], []>} : vector<256x4xf32>, vector<4x24xf32>, vector<256x24xf32> -> vector<256x24xf32>
    %c0_40 = arith.constant 0 : index
    %c0_41 = arith.constant 0 : index
    %68 = vector.load %arg8[%c0_40, %c0_41] : memref<1x24xf32, #tpu.memory_space<vmem>>, vector<1x24xf32>
    %69 = vector.broadcast %68 : vector<1x24xf32> to vector<256x24xf32>
    %70 = arith.addf %67, %69 : vector<256x24xf32>
    %cst_42 = arith.constant 0.000000e+00 : f32
    %71 = vector.broadcast %cst_42 : f32 to vector<256x24xf32>
    %72 = arith.maximumf %70, %71 : vector<256x24xf32>
    %73 = vector.extract_strided_slice %72 {offsets = [0, 0], sizes = [256, 12], strides = [1, 1]} : vector<256x24xf32> to vector<256x12xf32>
    %74 = vector.shape_cast %73 : vector<256x12xf32> to vector<16x16x12xf32>
    %75 = vector.extract_strided_slice %72 {offsets = [0, 12], sizes = [256, 12], strides = [1, 1]} : vector<256x24xf32> to vector<256x12xf32>
    %76 = vector.shape_cast %75 : vector<256x12xf32> to vector<16x16x12xf32>
    %77 = vector.shape_cast %74 : vector<16x16x12xf32> to vector<16x1x16x12xf32>
    %78 = vector.shape_cast %76 : vector<16x16x12xf32> to vector<16x1x16x12xf32>
    %79 = tpu.concatenate %77, %78 in 1 : vector<16x1x16x12xf32>, vector<16x1x16x12xf32> -> vector<16x2x16x12xf32>
    %c0_43 = arith.constant 0 : index
    %c0_44 = arith.constant 0 : index
    %c0_45 = arith.constant 0 : index
    %c0_46 = arith.constant 0 : index
    %c0_47 = arith.constant 0 : index
    %80 = vector.load %arg9[%c0_43, %c0_44, %c0_45, %c0_46, %c0_47] : memref<1x16x2x16x12xf32, #tpu.memory_space<vmem>>, vector<1x16x2x16x12xf32>
    %81 = vector.shape_cast %80 : vector<1x16x2x16x12xf32> to vector<16x2x16x12xf32>
    %82 = vector.shape_cast %79 : vector<16x2x16x12xf32> to vector<1x16x2x16x12xf32>
    tpu.vector_store %arg9[%c0_43, %c0_44, %c0_45, %c0_46, %c0_47], %82 {strides = array<i32>} : memref<1x16x2x16x12xf32, #tpu.memory_space<vmem>>, vector<1x16x2x16x12xf32>,
    return
  }
  func.func @transform_0(%arg0: i32) -> (i32, i32, i32, i32) {
    %c0_i32 = arith.constant 0 : i32
    %c0_i32_0 = arith.constant 0 : i32
    %c0_i32_1 = arith.constant 0 : i32
    %c0_i32_2 = arith.constant 0 : i32
    return %arg0, %c0_i32, %c0_i32_0, %c0_i32_1 : i32, i32, i32, i32
  }
  func.func @transform_1(%arg0: i32) -> (i32, i32, i32, i32) {
    %c0_i32 = arith.constant 0 : i32
    %c0_i32_0 = arith.constant 0 : i32
    %c0_i32_1 = arith.constant 0 : i32
    %c0_i32_2 = arith.constant 0 : i32
    return %arg0, %c0_i32, %c0_i32_0, %c0_i32_1 : i32, i32, i32, i32
  }
  func.func @transform_2(%arg0: i32) -> (i32, i32) {
    %c0_i32 = arith.constant 0 : i32
    %c0_i32_0 = arith.constant 0 : i32
    %c0_i32_1 = arith.constant 0 : i32
    return %c0_i32, %c0_i32_0 : i32, i32
  }
  func.func @transform_3(%arg0: i32) -> (i32, i32) {
    %c0_i32 = arith.constant 0 : i32
    %c0_i32_0 = arith.constant 0 : i32
    %c0_i32_1 = arith.constant 0 : i32
    return %c0_i32, %c0_i32_0 : i32, i32
  }
  func.func @transform_4(%arg0: i32) -> (i32, i32) {
    %c0_i32 = arith.constant 0 : i32
    %c0_i32_0 = arith.constant 0 : i32
    %c0_i32_1 = arith.constant 0 : i32
    return %c0_i32, %c0_i32_0 : i32, i32
  }
  func.func @transform_5(%arg0: i32) -> (i32, i32) {
    %c0_i32 = arith.constant 0 : i32
    %c0_i32_0 = arith.constant 0 : i32
    %c0_i32_1 = arith.constant 0 : i32
    return %c0_i32, %c0_i32_0 : i32, i32
  }
  func.func @transform_6(%arg0: i32) -> (i32, i32) {
    %c0_i32 = arith.constant 0 : i32
    %c0_i32_0 = arith.constant 0 : i32
    %c0_i32_1 = arith.constant 0 : i32
    return %c0_i32, %c0_i32_0 : i32, i32
  }
  func.func @transform_7(%arg0: i32) -> (i32, i32) {
    %c0_i32 = arith.constant 0 : i32
    %c0_i32_0 = arith.constant 0 : i32
    %c0_i32_1 = arith.constant 0 : i32
    return %c0_i32, %c0_i32_0 : i32, i32
  }
  func.func @transform_8(%arg0: i32) -> (i32, i32, i32, i32, i32) {
    %c0_i32 = arith.constant 0 : i32
    %c0_i32_0 = arith.constant 0 : i32
    %c0_i32_1 = arith.constant 0 : i32
    %c0_i32_2 = arith.constant 0 : i32
    %c0_i32_3 = arith.constant 0 : i32
    return %arg0, %c0_i32, %c0_i32_0, %c0_i32_1, %c0_i32_2 : i32, i32, i32, i32, i32
  }
}

</mosaic_0001>

<llo_original>
// kernel: tpu_custom_call.1
$region0: #{tpu_custom_call.1}
  #allocation0 [shape = 'u32[]', space=smem, size = 0x4, offset = 0x4, fixed_abs, tag = 'smem constant byte address 0x4 - core index']
  #allocation1 [shape = 'u32[144,128]{1,0:T(1,128)}', space=vmem, size = 0x12000, scoped, tag = 'internal scratch']
  #allocation2 [shape = 'f32[18,18,8]{2,1,0:T(8,128)}', space=vmem, size = 0x36000, scoped, tag = 'scratch operand']
  #allocation3 [shape = 'f32[18,18,4]{2,1,0:T(8,128)}', space=vmem, size = 0x36000, scoped, tag = 'scratch operand']
  %s0 = inlined_call_operand.vmem [shape: f32[2,16,16,4], index: 0, kind: input, shape index: {}]
  %s1 = inlined_call_operand.vmem [shape: f32[2,16,16,4], index: 1, kind: input, shape index: {}]
  %s2 = inlined_call_operand.vmem [shape: f32[72,4], index: 2, kind: input, shape index: {}]
  %s3 = inlined_call_operand.vmem [shape: f32[1,4], index: 3, kind: input, shape index: {}]
  %s4 = inlined_call_operand.vmem [shape: f32[36,4], index: 4, kind: input, shape index: {}]
  %s5 = inlined_call_operand.vmem [shape: f32[1,4], index: 5, kind: input, shape index: {}]
  %s6 = inlined_call_operand.vmem [shape: f32[4,24], index: 6, kind: input, shape index: {}]
  %s7 = inlined_call_operand.vmem [shape: f32[1,24], index: 7, kind: input, shape index: {}]
  %s8 = inlined_call_operand.vmem [shape: f32[2,16,2,16,12], index: 8, kind: output, shape index: {}]
  %s9 = sld [smem:[#allocation0]]
  $region65: #{tpu_custom_call.1} parent=0
    _
  %s11 = ssub.s32 1, %s9
  %s12 = scalar_select 0, %s11, %s9
  loop: start=0, step=1, limit=4
  $region2: #{tpu_custom_call.1} parent=0 // loop_pre_header
    _
  $region3: #{tpu_custom_call.1} parent=0 // loop_header
    %s14 = sphi 0, %s18
    %p15 = scmp.ge.s32.totalorder %s14, 4
    %s24 = sphi 0, %s26
    %s27 = sphi 0, %s24
    %s28 = sphi 0, %s27
    %s44 = sphi 0, %s28
    %s50 = sphi 0, %s52
    %s53 = sphi 0, %s50
    %s54 = sphi 0, %s53
    %s70 = sphi 0, %s54
    %s74 = sphi 0, %s74
    %s76 = sphi 0, %s74
    %s77 = sphi 0, %s76
    %s91 = sphi 0, %s77
    %s95 = sphi 0, %s95
    %s97 = sphi 0, %s95
    %s98 = sphi 0, %s97
    %s112 = sphi 0, %s98
    %s116 = sphi 0, %s116
    %s118 = sphi 0, %s116
    %s119 = sphi 0, %s118
    %s133 = sphi 0, %s119
    %s137 = sphi 0, %s137
    %s139 = sphi 0, %s137
    %s140 = sphi 0, %s139
    %s154 = sphi 0, %s140
    %s158 = sphi 0, %s158
    %s160 = sphi 0, %s158
    %s161 = sphi 0, %s160
    %s175 = sphi 0, %s161
    %s179 = sphi 0, %s179
    %s181 = sphi 0, %s179
    %s182 = sphi 0, %s181
    %s196 = sphi 0, %s182
    %s202 = sphi 0, %s204
    %s205 = sphi 0, %s202
    %s206 = sphi 0, %s205
    %s222 = sphi 0, %s206
  $region4: #{tpu_custom_call.1} parent=0 // loop_header_branch
    %17 = sbr.rel (%p15) target = $region8
  $region5: #{tpu_custom_call.1} parent=0 // loop_body
    %s19 = ssub.s32 %s14, 1
    %s20 = ssub.s32 %s14, 2
    %s21 = sadd.s32 %s14, 1
    %s22 = ssub.s32 %s14, %s21
    %p23 = scmp.eq.s32.totalorder %s22, 0
    %s25 = sadd.s32 %s24, 1
    %s26 = scalar_select %p23, %s24, %s25
    %p29 = pneg %p23
    %p30 = scmp.eq.s32.totalorder %s14, 1
    %p31 = por %p29, %p30
    %p32 = scmp.ne.s32.totalorder %s24, %s27
    %p33 = scmp.eq.s32.totalorder %s14, 0
    %p34 = por %p32, %p33
    %p35 = scmp.ne.s32.totalorder %s24, %s27
    %p36 = scmp.eq.s32.totalorder %s19, 1
    %p37 = por %p35, %p36
    %p38 = scmp.ne.s32.totalorder %s27, %s28
    %p39 = scmp.eq.s32.totalorder %s19, 0
    %p40 = por %p38, %p39
    %p41 = scmp.ne.s32.totalorder %s27, %s28
    %p42 = scmp.eq.s32.totalorder %s20, 1
    %p43 = por %p41, %p42
    %p45 = scmp.ne.s32.totalorder %s28, %s44
    %p46 = scmp.eq.s32.totalorder %s20, 0
    %p47 = por %p45, %p46
    %s48 = ssub.s32 %s14, %s21
    %p49 = scmp.eq.s32.totalorder %s48, 0
    %s51 = sadd.s32 %s50, 1
    %s52 = scalar_select %p49, %s50, %s51
    %p55 = pneg %p49
    %p56 = scmp.eq.s32.totalorder %s14, 1
    %p57 = por %p55, %p56
    %p58 = scmp.ne.s32.totalorder %s50, %s53
    %p59 = scmp.eq.s32.totalorder %s14, 0
    %p60 = por %p58, %p59
    %p61 = scmp.ne.s32.totalorder %s50, %s53
    %p62 = scmp.eq.s32.totalorder %s19, 1
    %p63 = por %p61, %p62
    %p64 = scmp.ne.s32.totalorder %s53, %s54
    %p65 = scmp.eq.s32.totalorder %s19, 0
    %p66 = por %p64, %p65
    %p67 = scmp.ne.s32.totalorder %s53, %s54
    %p68 = scmp.eq.s32.totalorder %s20, 1
    %p69 = por %p67, %p68
    %p71 = scmp.ne.s32.totalorder %s54, %s70
    %p72 = scmp.eq.s32.totalorder %s20, 0
    %p73 = por %p71, %p72
    %s75 = sadd.s32 %s74, 1
    %p78 = scmp.eq.s32.totalorder %s14, 1
    %p79 = scmp.ne.s32.totalorder %s74, %s76
    %p80 = scmp.eq.s32.totalorder %s14, 0
    %p81 = por %p79, %p80
    %p82 = scmp.ne.s32.totalorder %s74, %s76
    %p83 = scmp.eq.s32.totalorder %s19, 1
    %p84 = por %p82, %p83
    %p85 = scmp.ne.s32.totalorder %s76, %s77
    %p86 = scmp.eq.s32.totalorder %s19, 0
    %p87 = por %p85, %p86
    %p88 = scmp.ne.s32.totalorder %s76, %s77
    %p89 = scmp.eq.s32.totalorder %s20, 1
    %p90 = por %p88, %p89
    %p92 = scmp.ne.s32.totalorder %s77, %s91
    %p93 = scmp.eq.s32.totalorder %s20, 0
    %p94 = por %p92, %p93
    %s96 = sadd.s32 %s95, 1
    %p99 = scmp.eq.s32.totalorder %s14, 1
    %p100 = scmp.ne.s32.totalorder %s95, %s97
    %p101 = scmp.eq.s32.totalorder %s14, 0
    %p102 = por %p100, %p101
    %p103 = scmp.ne.s32.totalorder %s95, %s97
    %p104 = scmp.eq.s32.totalorder %s19, 1
    %p105 = por %p103, %p104
    %p106 = scmp.ne.s32.totalorder %s97, %s98
    %p107 = scmp.eq.s32.totalorder %s19, 0
    %p108 = por %p106, %p107
    %p109 = scmp.ne.s32.totalorder %s97, %s98
    %p110 = scmp.eq.s32.totalorder %s20, 1
    %p111 = por %p109, %p110
    %p113 = scmp.ne.s32.totalorder %s98, %s112
    %p114 = scmp.eq.s32.totalorder %s20, 0
    %p115 = por %p113, %p114
    %s117 = sadd.s32 %s116, 1
    %p120 = scmp.eq.s32.totalorder %s14, 1
    %p121 = scmp.ne.s32.totalorder %s116, %s118
    %p122 = scmp.eq.s32.totalorder %s14, 0
    %p123 = por %p121, %p122
    %p124 = scmp.ne.s32.totalorder %s116, %s118
    %p125 = scmp.eq.s32.totalorder %s19, 1
    %p126 = por %p124, %p125
    %p127 = scmp.ne.s32.totalorder %s118, %s119
    %p128 = scmp.eq.s32.totalorder %s19, 0
    %p129 = por %p127, %p128
    %p130 = scmp.ne.s32.totalorder %s118, %s119
    %p131 = scmp.eq.s32.totalorder %s20, 1
    %p132 = por %p130, %p131
    %p134 = scmp.ne.s32.totalorder %s119, %s133
    %p135 = scmp.eq.s32.totalorder %s20, 0
    %p136 = por %p134, %p135
    %s138 = sadd.s32 %s137, 1
    %p141 = scmp.eq.s32.totalorder %s14, 1
    %p142 = scmp.ne.s32.totalorder %s137, %s139
    %p143 = scmp.eq.s32.totalorder %s14, 0
    %p144 = por %p142, %p143
    %p145 = scmp.ne.s32.totalorder %s137, %s139
    %p146 = scmp.eq.s32.totalorder %s19, 1
    %p147 = por %p145, %p146
    %p148 = scmp.ne.s32.totalorder %s139, %s140
    %p149 = scmp.eq.s32.totalorder %s19, 0
    %p150 = por %p148, %p149
    %p151 = scmp.ne.s32.totalorder %s139, %s140
    %p152 = scmp.eq.s32.totalorder %s20, 1
    %p153 = por %p151, %p152
    %p155 = scmp.ne.s32.totalorder %s140, %s154
    %p156 = scmp.eq.s32.totalorder %s20, 0
    %p157 = por %p155, %p156
    %s159 = sadd.s32 %s158, 1
    %p162 = scmp.eq.s32.totalorder %s14, 1
    %p163 = scmp.ne.s32.totalorder %s158, %s160
    %p164 = scmp.eq.s32.totalorder %s14, 0
    %p165 = por %p163, %p164
    %p166 = scmp.ne.s32.totalorder %s158, %s160
    %p167 = scmp.eq.s32.totalorder %s19, 1
    %p168 = por %p166, %p167
    %p169 = scmp.ne.s32.totalorder %s160, %s161
    %p170 = scmp.eq.s32.totalorder %s19, 0
    %p171 = por %p169, %p170
    %p172 = scmp.ne.s32.totalorder %s160, %s161
    %p173 = scmp.eq.s32.totalorder %s20, 1
    %p174 = por %p172, %p173
    %p176 = scmp.ne.s32.totalorder %s161, %s175
    %p177 = scmp.eq.s32.totalorder %s20, 0
    %p178 = por %p176, %p177
    %s180 = sadd.s32 %s179, 1
    %p183 = scmp.eq.s32.totalorder %s14, 1
    %p184 = scmp.ne.s32.totalorder %s179, %s181
    %p185 = scmp.eq.s32.totalorder %s14, 0
    %p186 = por %p184, %p185
    %p187 = scmp.ne.s32.totalorder %s179, %s181
    %p188 = scmp.eq.s32.totalorder %s19, 1
    %p189 = por %p187, %p188
    %p190 = scmp.ne.s32.totalorder %s181, %s182
    %p191 = scmp.eq.s32.totalorder %s19, 0
    %p192 = por %p190, %p191
    %p193 = scmp.ne.s32.totalorder %s181, %s182
    %p194 = scmp.eq.s32.totalorder %s20, 1
    %p195 = por %p193, %p194
    %p197 = scmp.ne.s32.totalorder %s182, %s196
    %p198 = scmp.eq.s32.totalorder %s20, 0
    %p199 = por %p197, %p198
    %s200 = ssub.s32 %s14, %s21
    %p201 = scmp.eq.s32.totalorder %s200, 0
    %s203 = sadd.s32 %s202, 1
    %s204 = scalar_select %p201, %s202, %s203
    %p207 = pneg %p201
    %p208 = scmp.eq.s32.totalorder %s14, 1
    %p209 = por %p207, %p208
    %p210 = scmp.ne.s32.totalorder %s202, %s205
    %p211 = scmp.eq.s32.totalorder %s14, 0
    %p212 = por %p210, %p211
    %p213 = scmp.ne.s32.totalorder %s202, %s205
    %p214 = scmp.eq.s32.totalorder %s19, 1
    %p215 = por %p213, %p214
    %p216 = scmp.ne.s32.totalorder %s205, %s206
    %p217 = scmp.eq.s32.totalorder %s19, 0
    %p218 = por %p216, %p217
    %p219 = scmp.ne.s32.totalorder %s205, %s206
    %p220 = scmp.eq.s32.totalorder %s20, 1
    %p221 = por %p219, %p220
    %p223 = scmp.ne.s32.totalorder %s206, %s222
    %p224 = scmp.eq.s32.totalorder %s20, 0
    %p225 = por %p223, %p224
    %p226 = scmp.le.s32.totalorder 1, %s14
    %p227 = scmp.lt.s32.totalorder %s14, 3
    %p228 = pnand %p226, %p227
    %p229 = pneg %p228
    // Predicated region
    $region9: #{tpu_custom_call.1} parent=5 // pred_check
      _
    $region10: #{tpu_custom_call.1} parent=5 // pred_check_branch
      %231 = sbr.rel (%p228) target = $region12
    $region11: #{tpu_custom_call.1} parent=5 // pred_region
      %s232 = ssub.s32 %s14, 1
      // Predicated region
      $region13: #{tpu_custom_call.1} parent=11 // pred_check
        %p233 = pneg %p87
      $region14: #{tpu_custom_call.1} parent=11 // pred_check_branch
        %235 = sbr.rel (%p233) target = $region16
      $region15: #{tpu_custom_call.1} parent=11 // pred_region
        _
      $region16: #{tpu_custom_call.1} parent=11 // pred_fallthru
        _
      // Predicated region
      $region17: #{tpu_custom_call.1} parent=11 // pred_check
        %p236 = pneg %p108
      $region18: #{tpu_custom_call.1} parent=11 // pred_check_branch
        %238 = sbr.rel (%p236) target = $region20
      $region19: #{tpu_custom_call.1} parent=11 // pred_region
        _
      $region20: #{tpu_custom_call.1} parent=11 // pred_fallthru
        _
      // Predicated region
      $region21: #{tpu_custom_call.1} parent=11 // pred_check
        %p239 = pneg %p129
      $region22: #{tpu_custom_call.1} parent=11 // pred_check_branch
        %241 = sbr.rel (%p239) target = $region24
      $region23: #{tpu_custom_call.1} parent=11 // pred_region
        _
      $region24: #{tpu_custom_call.1} parent=11 // pred_fallthru
        _
      // Predicated region
      $region25: #{tpu_custom_call.1} parent=11 // pred_check
        %p242 = pneg %p150
      $region26: #{tpu_custom_call.1} parent=11 // pred_check_branch
        %244 = sbr.rel (%p242) target = $region28
      $region27: #{tpu_custom_call.1} parent=11 // pred_region
        _
      $region28: #{tpu_custom_call.1} parent=11 // pred_fallthru
        _
      // Predicated region
      $region29: #{tpu_custom_call.1} parent=11 // pred_check
        %p245 = pneg %p171
      $region30: #{tpu_custom_call.1} parent=11 // pred_check_branch
        %247 = sbr.rel (%p245) target = $region32
      $region31: #{tpu_custom_call.1} parent=11 // pred_region
        _
      $region32: #{tpu_custom_call.1} parent=11 // pred_fallthru
        _
      // Predicated region
      $region33: #{tpu_custom_call.1} parent=11 // pred_check
        %p248 = pneg %p192
      $region34: #{tpu_custom_call.1} parent=11 // pred_check_branch
        %250 = sbr.rel (%p248) target = $region36
      $region35: #{tpu_custom_call.1} parent=11 // pred_region
        _
      $region36: #{tpu_custom_call.1} parent=11 // pred_fallthru
        _
    $region12: #{tpu_custom_call.1} parent=5 // pred_fallthru
      _
    %p251 = scmp.lt.s32.totalorder %s14, 2
    // Predicated region
    $region37: #{tpu_custom_call.1} parent=5 // pred_check
      %p252 = pneg %p251
    $region38: #{tpu_custom_call.1} parent=5 // pred_check_branch
      %254 = sbr.rel (%p252) target = $region40
    $region39: #{tpu_custom_call.1} parent=5 // pred_region
      // Predicated region
      $region41: #{tpu_custom_call.1} parent=39 // pred_check
        %p255 = pneg %p34
      $region42: #{tpu_custom_call.1} parent=39 // pred_check_branch
        %257 = sbr.rel (%p255) target = $region44
      $region43: #{tpu_custom_call.1} parent=39 // pred_region
        %p258 = scmp.lt.s32.totalorder %s14, 1
        %s259 = scalar_select %p258, %s14, 1
        %s260 = smul.addr %s259, 32
        %s261 = smul.addr %s260, 8
        %s262 = scalar_lea.vmem %s0, %s261
      $region44: #{tpu_custom_call.1} parent=39 // pred_fallthru
        _
      // Predicated region
      $region45: #{tpu_custom_call.1} parent=39 // pred_check
        %p263 = pneg %p60
      $region46: #{tpu_custom_call.1} parent=39 // pred_check_branch
        %265 = sbr.rel (%p263) target = $region48
      $region47: #{tpu_custom_call.1} parent=39 // pred_region
        %p266 = scmp.lt.s32.totalorder %s14, 1
        %s267 = scalar_select %p266, %s14, 1
        %s268 = smul.addr %s267, 32
        %s269 = smul.addr %s268, 8
        %s270 = scalar_lea.vmem %s1, %s269
      $region48: #{tpu_custom_call.1} parent=39 // pred_fallthru
        _
    $region40: #{tpu_custom_call.1} parent=5 // pred_fallthru
      _
    %p271 = scmp.le.s32.totalorder 1, %s14
    %p272 = scmp.lt.s32.totalorder %s14, 3
    %p273 = pnand %p271, %p272
    %p274 = pneg %p273
    // Predicated region
    $region49: #{tpu_custom_call.1} parent=5 // pred_check
      _
    $region50: #{tpu_custom_call.1} parent=5 // pred_check_branch
      %276 = sbr.rel (%p273) target = $region52
    $region51: #{tpu_custom_call.1} parent=5 // pred_region
      %s277 = ssub.s32 %s14, 1
      %p278 = scmp.lt.s32.totalorder %s19, 1
      %s279 = scalar_select %p278, %s19, 1
      %s280 = smul.addr %s279, 32
      %s281 = smul.addr %s280, 8
      %s282 = scalar_lea.vmem %s0, %s281
      %p283 = pneg %p40
      %p284 = pneg %p37
      %p285 = scmp.lt.s32.totalorder %s19, 1
      %s286 = scalar_select %p285, %s19, 1
      %s287 = smul.addr %s286, 32
      %s288 = smul.addr %s287, 8
      %s289 = scalar_lea.vmem %s1, %s288
      %p290 = pneg %p66
      %p291 = pneg %p63
      %p292 = pneg %p87
      %p293 = pneg %p84
      %p294 = pneg %p108
      %p295 = pneg %p105
      %p296 = pneg %p129
      %p297 = pneg %p126
      %p298 = pneg %p150
      %p299 = pneg %p147
      %p300 = pneg %p171
      %p301 = pneg %p168
      %p302 = pneg %p192
      %p303 = pneg %p189
      %p304 = pneg %p218
      %p305 = pneg %p215
      %p306 = scmp.lt.s32.totalorder %s19, 1
      %s307 = scalar_select %p306, %s19, 1
      %s308 = smul.addr %s307, 64
      %s309 = smul.addr %s308, 8
      %s310 = scalar_lea.vmem %s8, %s309
      %p311 = scmp.lt.s32.totalorder %s19, 1
      %s312 = scalar_select %p311, %s19, 1
      %s313 = smul.addr %s312, 32
      %s314 = smul.addr %s313, 8
      %s315 = scalar_lea.vmem %s0, %s314
      %p316 = scmp.lt.s32.totalorder %s19, 1
      %s317 = scalar_select %p316, %s19, 1
      %s318 = smul.addr %s317, 32
      %s319 = smul.addr %s318, 8
      %s320 = scalar_lea.vmem %s1, %s319
      %p321 = scmp.lt.s32.totalorder %s19, 1
      %s322 = scalar_select %p321, %s19, 1
      %s323 = smul.addr %s322, 64
      %s324 = smul.addr %s323, 8
      %s325 = scalar_lea.vmem %s8, %s324
      %vm326 = vcmask 64512
      %327 = vst.msk [vmem:[#allocation2] sm:$0xff] %vm326, 0.0
      %328 = vst.msk [vmem:[#allocation2 + $0x8] sm:$0xff] %vm326, 0.0
      %vm329 = vcmask 58368
      %330 = vst.msk [vmem:[#allocation2 + $0x10] sm:$0x3] %vm329, 0.0
      %331 = vst.msk [vmem:[#allocation2 + $0x18] sm:$0xff] %vm326, 0.0
      %332 = vst.msk [vmem:[#allocation2 + $0x20] sm:$0xff] %vm326, 0.0
      %333 = vst.msk [vmem:[#allocation2 + $0x28] sm:$0x3] %vm329, 0.0
      %334 = vst.msk [vmem:[#allocation2 + $0x30] sm:$0xff] %vm326, 0.0
      %335 = vst.msk [vmem:[#allocation2 + $0x38] sm:$0xff] %vm326, 0.0
      %336 = vst.msk [vmem:[#allocation2 + $0x40] sm:$0x3] %vm329, 0.0
      %337 = vst.msk [vmem:[#allocation2 + $0x48] sm:$0xff] %vm326, 0.0
      %338 = vst.msk [vmem:[#allocation2 + $0x50] sm:$0xff] %vm326, 0.0
      %339 = vst.msk [vmem:[#allocation2 + $0x58] sm:$0x3] %vm329, 0.0
      %340 = vst.msk [vmem:[#allocation2 + $0x60] sm:$0xff] %vm326, 0.0
      %341 = vst.msk [vmem:[#allocation2 + $0x68] sm:$0xff] %vm326, 0.0
      %342 = vst.msk [vmem:[#allocation2 + $0x70] sm:$0x3] %vm329, 0.0
      %343 = vst.msk [vmem:[#allocation2 + $0x78] sm:$0xff] %vm326, 0.0
      %344 = vst.msk [vmem:[#allocation2 + $0x80] sm:$0xff] %vm326, 0.0
      %345 = vst.msk [vmem:[#allocation2 + $0x88] sm:$0x3] %vm329, 0.0
      %346 = vst.msk [vmem:[#allocation2 + $0x90] sm:$0xff] %vm326, 0.0
      %347 = vst.msk [vmem:[#allocation2 + $0x98] sm:$0xff] %vm326, 0.0
      %348 = vst.msk [vmem:[#allocation2 + $0xa0] sm:$0x3] %vm329, 0.0
      %349 = vst.msk [vmem:[#allocation2 + $0xa8] sm:$0xff] %vm326, 0.0
      %350 = vst.msk [vmem:[#allocation2 + $0xb0] sm:$0xff] %vm326, 0.0
      %351 = vst.msk [vmem:[#allocation2 + $0xb8] sm:$0x3] %vm329, 0.0
      %352 = vst.msk [vmem:[#allocation2 + $0xc0] sm:$0xff] %vm326, 0.0
      %353 = vst.msk [vmem:[#allocation2 + $0xc8] sm:$0xff] %vm326, 0.0
      %354 = vst.msk [vmem:[#allocation2 + $0xd0] sm:$0x3] %vm329, 0.0
      %355 = vst.msk [vmem:[#allocation2 + $0xd8] sm:$0xff] %vm326, 0.0
      %356 = vst.msk [vmem:[#allocation2 + $0xe0] sm:$0xff] %vm326, 0.0
      %357 = vst.msk [vmem:[#allocation2 + $0xe8] sm:$0x3] %vm329, 0.0
      %358 = vst.msk [vmem:[#allocation2 + $0xf0] sm:$0xff] %vm326, 0.0
      %359 = vst.msk [vmem:[#allocation2 + $0xf8] sm:$0xff] %vm326, 0.0
      %360 = vst.msk [vmem:[#allocation2 + $0x100] sm:$0x3] %vm329, 0.0
      %361 = vst.msk [vmem:[#allocation2 + $0x108] sm:$0xff] %vm326, 0.0
      %362 = vst.msk [vmem:[#allocation2 + $0x110] sm:$0xff] %vm326, 0.0
      %363 = vst.msk [vmem:[#allocation2 + $0x118] sm:$0x3] %vm329, 0.0
      %364 = vst.msk [vmem:[#allocation2 + $0x120] sm:$0xff] %vm326, 0.0
      %365 = vst.msk [vmem:[#allocation2 + $0x128] sm:$0xff] %vm326, 0.0
      %366 = vst.msk [vmem:[#allocation2 + $0x130] sm:$0x3] %vm329, 0.0
      %367 = vst.msk [vmem:[#allocation2 + $0x138] sm:$0xff] %vm326, 0.0
      %368 = vst.msk [vmem:[#allocation2 + $0x140] sm:$0xff] %vm326, 0.0
      %369 = vst.msk [vmem:[#allocation2 + $0x148] sm:$0x3] %vm329, 0.0
      %370 = vst.msk [vmem:[#allocation2 + $0x150] sm:$0xff] %vm326, 0.0
      %371 = vst.msk [vmem:[#allocation2 + $0x158] sm:$0xff] %vm326, 0.0
      %372 = vst.msk [vmem:[#allocation2 + $0x160] sm:$0x3] %vm329, 0.0
      %373 = vst.msk [vmem:[#allocation2 + $0x168] sm:$0xff] %vm326, 0.0
      %374 = vst.msk [vmem:[#allocation2 + $0x170] sm:$0xff] %vm326, 0.0
      %375 = vst.msk [vmem:[#allocation2 + $0x178] sm:$0x3] %vm329, 0.0
      %376 = vst.msk [vmem:[#allocation2 + $0x180] sm:$0xff] %vm326, 0.0
      %377 = vst.msk [vmem:[#allocation2 + $0x188] sm:$0xff] %vm326, 0.0
      %378 = vst.msk [vmem:[#allocation2 + $0x190] sm:$0x3] %vm329, 0.0
      %379 = vst.msk [vmem:[#allocation2 + $0x198] sm:$0xff] %vm326, 0.0
      %380 = vst.msk [vmem:[#allocation2 + $0x1a0] sm:$0xff] %vm326, 0.0
      %381 = vst.msk [vmem:[#allocation2 + $0x1a8] sm:$0x3] %vm329, 0.0
      %v382 = vld [vmem:[%s315] sm:$0xff]
      %v383 = vld [vmem:[%s315 + $0x8] sm:$0xff]
      %v384 = vld [vmem:[%s315 + $0x10] sm:$0xff]
      %v385 = vld [vmem:[%s315 + $0x18] sm:$0xff]
      %v386 = vld [vmem:[%s315 + $0x20] sm:$0xff]
      %v387 = vld [vmem:[%s315 + $0x28] sm:$0xff]
      %v388 = vld [vmem:[%s315 + $0x30] sm:$0xff]
      %v389 = vld [vmem:[%s315 + $0x38] sm:$0xff]
      %v390 = vld [vmem:[%s315 + $0x40] sm:$0xff]
      %v391 = vld [vmem:[%s315 + $0x48] sm:$0xff]
      %v392 = vld [vmem:[%s315 + $0x50] sm:$0xff]
      %v393 = vld [vmem:[%s315 + $0x58] sm:$0xff]
      %v394 = vld [vmem:[%s315 + $0x60] sm:$0xff]
      %v395 = vld [vmem:[%s315 + $0x68] sm:$0xff]
      %v396 = vld [vmem:[%s315 + $0x70] sm:$0xff]
      %v397 = vld [vmem:[%s315 + $0x78] sm:$0xff]
      %v398 = vld [vmem:[%s315 + $0x80] sm:$0xff]
      %v399 = vld [vmem:[%s315 + $0x88] sm:$0xff]
      %v400 = vld [vmem:[%s315 + $0x90] sm:$0xff]
      %v401 = vld [vmem:[%s315 + $0x98] sm:$0xff]
      %v402 = vld [vmem:[%s315 + $0xa0] sm:$0xff]
      %v403 = vld [vmem:[%s315 + $0xa8] sm:$0xff]
      %v404 = vld [vmem:[%s315 + $0xb0] sm:$0xff]
      %v405 = vld [vmem:[%s315 + $0xb8] sm:$0xff]
      %v406 = vld [vmem:[%s315 + $0xc0] sm:$0xff]
      %v407 = vld [vmem:[%s315 + $0xc8] sm:$0xff]
      %v408 = vld [vmem:[%s315 + $0xd0] sm:$0xff]
      %v409 = vld [vmem:[%s315 + $0xd8] sm:$0xff]
      %v410 = vld [vmem:[%s315 + $0xe0] sm:$0xff]
      %v411 = vld [vmem:[%s315 + $0xe8] sm:$0xff]
      %v412 = vld [vmem:[%s315 + $0xf0] sm:$0xff]
      %v413 = vld [vmem:[%s315 + $0xf8] sm:$0xff]
      %v414 = vld [vmem:[%s320] sm:$0xff]
      %v415 = vld [vmem:[%s320 + $0x8] sm:$0xff]
      %v416 = vld [vmem:[%s320 + $0x10] sm:$0xff]
      %v417 = vld [vmem:[%s320 + $0x18] sm:$0xff]
      %v418 = vld [vmem:[%s320 + $0x20] sm:$0xff]
      %v419 = vld [vmem:[%s320 + $0x28] sm:$0xff]
      %v420 = vld [vmem:[%s320 + $0x30] sm:$0xff]
      %v421 = vld [vmem:[%s320 + $0x38] sm:$0xff]
      %v422 = vld [vmem:[%s320 + $0x40] sm:$0xff]
      %v423 = vld [vmem:[%s320 + $0x48] sm:$0xff]
      %v424 = vld [vmem:[%s320 + $0x50] sm:$0xff]
      %v425 = vld [vmem:[%s320 + $0x58] sm:$0xff]
      %v426 = vld [vmem:[%s320 + $0x60] sm:$0xff]
      %v427 = vld [vmem:[%s320 + $0x68] sm:$0xff]
      %v428 = vld [vmem:[%s320 + $0x70] sm:$0xff]
      %v429 = vld [vmem:[%s320 + $0x78] sm:$0xff]
      %v430 = vld [vmem:[%s320 + $0x80] sm:$0xff]
      %v431 = vld [vmem:[%s320 + $0x88] sm:$0xff]
      %v432 = vld [vmem:[%s320 + $0x90] sm:$0xff]
      %v433 = vld [vmem:[%s320 + $0x98] sm:$0xff]
      %v434 = vld [vmem:[%s320 + $0xa0] sm:$0xff]
      %v435 = vld [vmem:[%s320 + $0xa8] sm:$0xff]
      %v436 = vld [vmem:[%s320 + $0xb0] sm:$0xff]
      %v437 = vld [vmem:[%s320 + $0xb8] sm:$0xff]
      %v438 = vld [vmem:[%s320 + $0xc0] sm:$0xff]
      %v439 = vld [vmem:[%s320 + $0xc8] sm:$0xff]
      %v440 = vld [vmem:[%s320 + $0xd0] sm:$0xff]
      %v441 = vld [vmem:[%s320 + $0xd8] sm:$0xff]
      %v442 = vld [vmem:[%s320 + $0xe0] sm:$0xff]
      %v443 = vld [vmem:[%s320 + $0xe8] sm:$0xff]
      %v444 = vld [vmem:[%s320 + $0xf0] sm:$0xff]
      %v445 = vld [vmem:[%s320 + $0xf8] sm:$0xff]
      %478 = vrot.lane.b32.xlu0 %v414, 4
      %v479 = vpop.permute.xlu0 %478
      %480 = vrot.lane.b32.xlu0 %v415, 4
      %v481 = vpop.permute.xlu0 %480
      %482 = vrot.lane.b32.xlu0 %v416, 4
      %v483 = vpop.permute.xlu0 %482
      %484 = vrot.lane.b32.xlu0 %v417, 4
      %v485 = vpop.permute.xlu0 %484
      %486 = vrot.lane.b32.xlu0 %v418, 4
      %v487 = vpop.permute.xlu0 %486
      %488 = vrot.lane.b32.xlu0 %v419, 4
      %v489 = vpop.permute.xlu0 %488
      %490 = vrot.lane.b32.xlu0 %v420, 4
      %v491 = vpop.permute.xlu0 %490
      %492 = vrot.lane.b32.xlu0 %v421, 4
      %v493 = vpop.permute.xlu0 %492
      %494 = vrot.lane.b32.xlu0 %v422, 4
      %v495 = vpop.permute.xlu0 %494
      %496 = vrot.lane.b32.xlu0 %v423, 4
      %v497 = vpop.permute.xlu0 %496
      %498 = vrot.lane.b32.xlu0 %v424, 4
      %v499 = vpop.permute.xlu0 %498
      %500 = vrot.lane.b32.xlu0 %v425, 4
      %v501 = vpop.permute.xlu0 %500
      %502 = vrot.lane.b32.xlu0 %v426, 4
      %v503 = vpop.permute.xlu0 %502
      %504 = vrot.lane.b32.xlu0 %v427, 4
      %v505 = vpop.permute.xlu0 %504
      %506 = vrot.lane.b32.xlu0 %v428, 4
      %v507 = vpop.permute.xlu0 %506
      %508 = vrot.lane.b32.xlu0 %v429, 4
      %v509 = vpop.permute.xlu0 %508
      %510 = vrot.lane.b32.xlu0 %v430, 4
      %v511 = vpop.permute.xlu0 %510
      %512 = vrot.lane.b32.xlu0 %v431, 4
      %v513 = vpop.permute.xlu0 %512
      %514 = vrot.lane.b32.xlu0 %v432, 4
      %v515 = vpop.permute.xlu0 %514
      %516 = vrot.lane.b32.xlu0 %v433, 4
      %v517 = vpop.permute.xlu0 %516
      %518 = vrot.lane.b32.xlu0 %v434, 4
      %v519 = vpop.permute.xlu0 %518
      %520 = vrot.lane.b32.xlu0 %v435, 4
      %v521 = vpop.permute.xlu0 %520
      %522 = vrot.lane.b32.xlu0 %v436, 4
      %v523 = vpop.permute.xlu0 %522
      %524 = vrot.lane.b32.xlu0 %v437, 4
      %v525 = vpop.permute.xlu0 %524
      %526 = vrot.lane.b32.xlu0 %v438, 4
      %v527 = vpop.permute.xlu0 %526
      %528 = vrot.lane.b32.xlu0 %v439, 4
      %v529 = vpop.permute.xlu0 %528
      %530 = vrot.lane.b32.xlu0 %v440, 4
      %v531 = vpop.permute.xlu0 %530
      %532 = vrot.lane.b32.xlu0 %v441, 4
      %v533 = vpop.permute.xlu0 %532
      %534 = vrot.lane.b32.xlu0 %v442, 4
      %v535 = vpop.permute.xlu0 %534
      %536 = vrot.lane.b32.xlu0 %v443, 4
      %v537 = vpop.permute.xlu0 %536
      %538 = vrot.lane.b32.xlu0 %v444, 4
      %v539 = vpop.permute.xlu0 %538
      %540 = vrot.lane.b32.xlu0 %v445, 4
      %v541 = vpop.permute.xlu0 %540
      %vm574 = vcmask 31744
      %v575 = vsel %vm574, %v382, %v479
      %v576 = vsel %vm574, %v383, %v481
      %v577 = vsel %vm574, %v384, %v483
      %v578 = vsel %vm574, %v385, %v485
      %v579 = vsel %vm574, %v386, %v487
      %v580 = vsel %vm574, %v387, %v489
      %v581 = vsel %vm574, %v388, %v491
      %v582 = vsel %vm574, %v389, %v493
      %v583 = vsel %vm574, %v390, %v495
      %v584 = vsel %vm574, %v391, %v497
      %v585 = vsel %vm574, %v392, %v499
      %v586 = vsel %vm574, %v393, %v501
      %v587 = vsel %vm574, %v394, %v503
      %v588 = vsel %vm574, %v395, %v505
      %v589 = vsel %vm574, %v396, %v507
      %v590 = vsel %vm574, %v397, %v509
      %v591 = vsel %vm574, %v398, %v511
      %v592 = vsel %vm574, %v399, %v513
      %v593 = vsel %vm574, %v400, %v515
      %v594 = vsel %vm574, %v401, %v517
      %v595 = vsel %vm574, %v402, %v519
      %v596 = vsel %vm574, %v403, %v521
      %v597 = vsel %vm574, %v404, %v523
      %v598 = vsel %vm574, %v405, %v525
      %v599 = vsel %vm574, %v406, %v527
      %v600 = vsel %vm574, %v407, %v529
      %v601 = vsel %vm574, %v408, %v531
      %v602 = vsel %vm574, %v409, %v533
      %v603 = vsel %vm574, %v410, %v535
      %v604 = vsel %vm574, %v411, %v537
      %v605 = vsel %vm574, %v412, %v539
      %v606 = vsel %vm574, %v413, %v541
      %s607 = scalar_lea.vmem [#allocation2], 24
      %608 = vst.msk [vmem:[%s607 + $0x1] sm:$0xff] %vm326, %v575
      %609 = vst.msk [vmem:[%s607 + $0x9] sm:$0xff] %vm326, %v576
      %610 = vst.msk [vmem:[%s607 + $0x19] sm:$0xff] %vm326, %v577
      %611 = vst.msk [vmem:[%s607 + $0x21] sm:$0xff] %vm326, %v578
      %612 = vst.msk [vmem:[%s607 + $0x31] sm:$0xff] %vm326, %v579
      %613 = vst.msk [vmem:[%s607 + $0x39] sm:$0xff] %vm326, %v580
      %614 = vst.msk [vmem:[%s607 + $0x49] sm:$0xff] %vm326, %v581
      %615 = vst.msk [vmem:[%s607 + $0x51] sm:$0xff] %vm326, %v582
      %616 = vst.msk [vmem:[%s607 + $0x61] sm:$0xff] %vm326, %v583
      %617 = vst.msk [vmem:[%s607 + $0x69] sm:$0xff] %vm326, %v584
      %618 = vst.msk [vmem:[%s607 + $0x79] sm:$0xff] %vm326, %v585
      %619 = vst.msk [vmem:[%s607 + $0x81] sm:$0xff] %vm326, %v586
      %620 = vst.msk [vmem:[%s607 + $0x91] sm:$0xff] %vm326, %v587
      %621 = vst.msk [vmem:[%s607 + $0x99] sm:$0xff] %vm326, %v588
      %622 = vst.msk [vmem:[%s607 + $0xa9] sm:$0xff] %vm326, %v589
      %623 = vst.msk [vmem:[%s607 + $0xb1] sm:$0xff] %vm326, %v590
      %624 = vst.msk [vmem:[%s607 + $0xc1] sm:$0xff] %vm326, %v591
      %625 = vst.msk [vmem:[%s607 + $0xc9] sm:$0xff] %vm326, %v592
      %626 = vst.msk [vmem:[%s607 + $0xd9] sm:$0xff] %vm326, %v593
      %627 = vst.msk [vmem:[%s607 + $0xe1] sm:$0xff] %vm326, %v594
      %628 = vst.msk [vmem:[%s607 + $0xf1] sm:$0xff] %vm326, %v595
      %629 = vst.msk [vmem:[%s607 + $0xf9] sm:$0xff] %vm326, %v596
      %630 = vst.msk [vmem:[%s607 + $0x109] sm:$0xff] %vm326, %v597
      %631 = vst.msk [vmem:[%s607 + $0x111] sm:$0xff] %vm326, %v598
      %632 = vst.msk [vmem:[%s607 + $0x121] sm:$0xff] %vm326, %v599
      %633 = vst.msk [vmem:[%s607 + $0x129] sm:$0xff] %vm326, %v600
      %634 = vst.msk [vmem:[%s607 + $0x139] sm:$0xff] %vm326, %v601
      %635 = vst.msk [vmem:[%s607 + $0x141] sm:$0xff] %vm326, %v602
      %636 = vst.msk [vmem:[%s607 + $0x151] sm:$0xff] %vm326, %v603
      %637 = vst.msk [vmem:[%s607 + $0x159] sm:$0xff] %vm326, %v604
      %638 = vst.msk [vmem:[%s607 + $0x169] sm:$0xff] %vm326, %v605
      %639 = vst.msk [vmem:[%s607 + $0x171] sm:$0xff] %vm326, %v606
      %v640 = vld [vmem:[#allocation2] sm:$0xff]
      %v641 = vld [vmem:[#allocation2 + $0x8] sm:$0xff]
      %v642 = vld [vmem:[#allocation2 + $0x10] sm:$0x3]
      %v643 = vld [vmem:[#allocation2 + $0x18] sm:$0xff]
      %v644 = vld [vmem:[#allocation2 + $0x20] sm:$0xff]
      %v645 = vld [vmem:[#allocation2 + $0x28] sm:$0x3]
      %v646 = vld [vmem:[#allocation2 + $0x30] sm:$0xff]
      %v647 = vld [vmem:[#allocation2 + $0x38] sm:$0xff]
      %v648 = vld [vmem:[#allocation2 + $0x40] sm:$0x3]
      %v649 = vld [vmem:[#allocation2 + $0x48] sm:$0xff]
      %v650 = vld [vmem:[#allocation2 + $0x50] sm:$0xff]
      %v651 = vld [vmem:[#allocation2 + $0x58] sm:$0x3]
      %v652 = vld [vmem:[#allocation2 + $0x60] sm:$0xff]
      %v653 = vld [vmem:[#allocation2 + $0x68] sm:$0xff]
      %v654 = vld [vmem:[#allocation2 + $0x70] sm:$0x3]
      %v655 = vld [vmem:[#allocation2 + $0x78] sm:$0xff]
      %v656 = vld [vmem:[#allocation2 + $0x80] sm:$0xff]
      %v657 = vld [vmem:[#allocation2 + $0x88] sm:$0x3]
      %v658 = vld [vmem:[#allocation2 + $0x90] sm:$0xff]
      %v659 = vld [vmem:[#allocation2 + $0x98] sm:$0xff]
      %v660 = vld [vmem:[#allocation2 + $0xa0] sm:$0x3]
      %v661 = vld [vmem:[#allocation2 + $0xa8] sm:$0xff]
      %v662 = vld [vmem:[#allocation2 + $0xb0] sm:$0xff]
      %v663 = vld [vmem:[#allocation2 + $0xb8] sm:$0x3]
      %v664 = vld [vmem:[#allocation2 + $0xc0] sm:$0xff]
      %v665 = vld [vmem:[#allocation2 + $0xc8] sm:$0xff]
      %v666 = vld [vmem:[#allocation2 + $0xd0] sm:$0x3]
      %v667 = vld [vmem:[#allocation2 + $0xd8] sm:$0xff]
      %v668 = vld [vmem:[#allocation2 + $0xe0] sm:$0xff]
      %v669 = vld [vmem:[#allocation2 + $0xe8] sm:$0x3]
      %v670 = vld [vmem:[#allocation2 + $0xf0] sm:$0xff]
      %v671 = vld [vmem:[#allocation2 + $0xf8] sm:$0xff]
      %v672 = vld [vmem:[#allocation2 + $0x100] sm:$0x3]
      %v673 = vld [vmem:[#allocation2 + $0x108] sm:$0xff]
      %v674 = vld [vmem:[#allocation2 + $0x110] sm:$0xff]
      %v675 = vld [vmem:[#allocation2 + $0x118] sm:$0x3]
      %v676 = vld [vmem:[#allocation2 + $0x120] sm:$0xff]
      %v677 = vld [vmem:[#allocation2 + $0x128] sm:$0xff]
      %v678 = vld [vmem:[#allocation2 + $0x130] sm:$0x3]
      %v679 = vld [vmem:[#allocation2 + $0x138] sm:$0xff]
      %v680 = vld [vmem:[#allocation2 + $0x140] sm:$0xff]
      %v681 = vld [vmem:[#allocation2 + $0x148] sm:$0x3]
      %v682 = vld [vmem:[#allocation2 + $0x150] sm:$0xff]
      %v683 = vld [vmem:[#allocation2 + $0x158] sm:$0xff]
      %v684 = vld [vmem:[#allocation2 + $0x160] sm:$0x3]
      %v685 = vld [vmem:[#allocation2 + $0x168] sm:$0xff]
      %v686 = vld [vmem:[#allocation2 + $0x170] sm:$0xff]
      %v687 = vld [vmem:[#allocation2 + $0x178] sm:$0x3]
      %v688 = vld [vmem:[#allocation2 + $0x180] sm:$0xff]
      %v689 = vld [vmem:[#allocation2 + $0x188] sm:$0xff]
      %v690 = vld [vmem:[#allocation2 + $0x190] sm:$0x3]
      %v691 = vld [vmem:[#allocation2 + $0x198] sm:$0xff]
      %v692 = vld [vmem:[#allocation2 + $0x1a0] sm:$0xff]
      %v693 = vld [vmem:[#allocation2 + $0x1a8] sm:$0x3]
      %vm742 = vcmask 1046528
      %v743 = vrot.slane %v640, 1
      %v744 = vrot.slane %v641, 1
      %v745 = vsel %vm742, %v743, %v744
      %v746 = vrot.slane %v642, 1
      %v747 = vsel %vm742, %v744, %v746
      %v748 = vrot.slane %v643, 1
      %v749 = vrot.slane %v644, 1
      %v750 = vsel %vm742, %v748, %v749
      %v751 = vrot.slane %v645, 1
      %v752 = vsel %vm742, %v749, %v751
      %v753 = vrot.slane %v646, 1
      %v754 = vrot.slane %v647, 1
      %v755 = vsel %vm742, %v753, %v754
      %v756 = vrot.slane %v648, 1
      %v757 = vsel %vm742, %v754, %v756
      %v758 = vrot.slane %v649, 1
      %v759 = vrot.slane %v650, 1
      %v760 = vsel %vm742, %v758, %v759
      %v761 = vrot.slane %v651, 1
      %v762 = vsel %vm742, %v759, %v761
      %v763 = vrot.slane %v652, 1
      %v764 = vrot.slane %v653, 1
      %v765 = vsel %vm742, %v763, %v764
      %v766 = vrot.slane %v654, 1
      %v767 = vsel %vm742, %v764, %v766
      %v768 = vrot.slane %v655, 1
      %v769 = vrot.slane %v656, 1
      %v770 = vsel %vm742, %v768, %v769
      %v771 = vrot.slane %v657, 1
      %v772 = vsel %vm742, %v769, %v771
      %v773 = vrot.slane %v658, 1
      %v774 = vrot.slane %v659, 1
      %v775 = vsel %vm742, %v773, %v774
      %v776 = vrot.slane %v660, 1
      %v777 = vsel %vm742, %v774, %v776
      %v778 = vrot.slane %v661, 1
      %v779 = vrot.slane %v662, 1
      %v780 = vsel %vm742, %v778, %v779
      %v781 = vrot.slane %v663, 1
      %v782 = vsel %vm742, %v779, %v781
      %v783 = vrot.slane %v664, 1
      %v784 = vrot.slane %v665, 1
      %v785 = vsel %vm742, %v783, %v784
      %v786 = vrot.slane %v666, 1
      %v787 = vsel %vm742, %v784, %v786
      %v788 = vrot.slane %v667, 1
      %v789 = vrot.slane %v668, 1
      %v790 = vsel %vm742, %v788, %v789
      %v791 = vrot.slane %v669, 1
      %v792 = vsel %vm742, %v789, %v791
      %v793 = vrot.slane %v670, 1
      %v794 = vrot.slane %v671, 1
      %v795 = vsel %vm742, %v793, %v794
      %v796 = vrot.slane %v672, 1
      %v797 = vsel %vm742, %v794, %v796
      %v798 = vrot.slane %v673, 1
      %v799 = vrot.slane %v674, 1
      %v800 = vsel %vm742, %v798, %v799
      %v801 = vrot.slane %v675, 1
      %v802 = vsel %vm742, %v799, %v801
      %v803 = vrot.slane %v676, 1
      %v804 = vrot.slane %v677, 1
      %v805 = vsel %vm742, %v803, %v804
      %v806 = vrot.slane %v678, 1
      %v807 = vsel %vm742, %v804, %v806
      %v808 = vrot.slane %v679, 1
      %v809 = vrot.slane %v680, 1
      %v810 = vsel %vm742, %v808, %v809
      %v811 = vrot.slane %v681, 1
      %v812 = vsel %vm742, %v809, %v811
      %v813 = vrot.slane %v682, 1
      %v814 = vrot.slane %v683, 1
      %v815 = vsel %vm742, %v813, %v814
      %v816 = vrot.slane %v684, 1
      %v817 = vsel %vm742, %v814, %v816
      %v818 = vrot.slane %v685, 1
      %v819 = vrot.slane %v686, 1
      %v820 = vsel %vm742, %v818, %v819
      %v821 = vrot.slane %v687, 1
      %v822 = vsel %vm742, %v819, %v821
      %vm823 = vcmask 1045504
      %v824 = vrot.slane %v640, 2
      %v825 = vrot.slane %v641, 2
      %v826 = vsel %vm823, %v824, %v825
      %v827 = vrot.slane %v642, 2
      %v828 = vsel %vm823, %v825, %v827
      %v829 = vrot.slane %v643, 2
      %v830 = vrot.slane %v644, 2
      %v831 = vsel %vm823, %v829, %v830
      %v832 = vrot.slane %v645, 2
      %v833 = vsel %vm823, %v830, %v832
      %v834 = vrot.slane %v646, 2
      %v835 = vrot.slane %v647, 2
      %v836 = vsel %vm823, %v834, %v835
      %v837 = vrot.slane %v648, 2
      %v838 = vsel %vm823, %v835, %v837
      %v839 = vrot.slane %v649, 2
      %v840 = vrot.slane %v650, 2
      %v841 = vsel %vm823, %v839, %v840
      %v842 = vrot.slane %v651, 2
      %v843 = vsel %vm823, %v840, %v842
      %v844 = vrot.slane %v652, 2
      %v845 = vrot.slane %v653, 2
      %v846 = vsel %vm823, %v844, %v845
      %v847 = vrot.slane %v654, 2
      %v848 = vsel %vm823, %v845, %v847
      %v849 = vrot.slane %v655, 2
      %v850 = vrot.slane %v656, 2
      %v851 = vsel %vm823, %v849, %v850
      %v852 = vrot.slane %v657, 2
      %v853 = vsel %vm823, %v850, %v852
      %v854 = vrot.slane %v658, 2
      %v855 = vrot.slane %v659, 2
      %v856 = vsel %vm823, %v854, %v855
      %v857 = vrot.slane %v660, 2
      %v858 = vsel %vm823, %v855, %v857
      %v859 = vrot.slane %v661, 2
      %v860 = vrot.slane %v662, 2
      %v861 = vsel %vm823, %v859, %v860
      %v862 = vrot.slane %v663, 2
      %v863 = vsel %vm823, %v860, %v862
      %v864 = vrot.slane %v664, 2
      %v865 = vrot.slane %v665, 2
      %v866 = vsel %vm823, %v864, %v865
      %v867 = vrot.slane %v666, 2
      %v868 = vsel %vm823, %v865, %v867
      %v869 = vrot.slane %v667, 2
      %v870 = vrot.slane %v668, 2
      %v871 = vsel %vm823, %v869, %v870
      %v872 = vrot.slane %v669, 2
      %v873 = vsel %vm823, %v870, %v872
      %v874 = vrot.slane %v670, 2
      %v875 = vrot.slane %v671, 2
      %v876 = vsel %vm823, %v874, %v875
      %v877 = vrot.slane %v672, 2
      %v878 = vsel %vm823, %v875, %v877
      %v879 = vrot.slane %v673, 2
      %v880 = vrot.slane %v674, 2
      %v881 = vsel %vm823, %v879, %v880
      %v882 = vrot.slane %v675, 2
      %v883 = vsel %vm823, %v880, %v882
      %v884 = vrot.slane %v676, 2
      %v885 = vrot.slane %v677, 2
      %v886 = vsel %vm823, %v884, %v885
      %v887 = vrot.slane %v678, 2
      %v888 = vsel %vm823, %v885, %v887
      %v889 = vrot.slane %v679, 2
      %v890 = vrot.slane %v680, 2
      %v891 = vsel %vm823, %v889, %v890
      %v892 = vrot.slane %v681, 2
      %v893 = vsel %vm823, %v890, %v892
      %v894 = vrot.slane %v682, 2
      %v895 = vrot.slane %v683, 2
      %v896 = vsel %vm823, %v894, %v895
      %v897 = vrot.slane %v684, 2
      %v898 = vsel %vm823, %v895, %v897
      %v899 = vrot.slane %v685, 2
      %v900 = vrot.slane %v686, 2
      %v901 = vsel %vm823, %v899, %v900
      %v902 = vrot.slane %v687, 2
      %v903 = vsel %vm823, %v900, %v902
      %v907 = vrot.slane %v688, 1
      %v908 = vrot.slane %v689, 1
      %v909 = vsel %vm742, %v907, %v908
      %v910 = vrot.slane %v690, 1
      %v911 = vsel %vm742, %v908, %v910
      %v912 = vrot.slane %v688, 2
      %v913 = vrot.slane %v689, 2
      %v914 = vsel %vm823, %v912, %v913
      %v915 = vrot.slane %v690, 2
      %v916 = vsel %vm823, %v913, %v915
      %v920 = vrot.slane %v691, 1
      %v921 = vrot.slane %v692, 1
      %v922 = vsel %vm742, %v920, %v921
      %v923 = vrot.slane %v693, 1
      %v924 = vsel %vm742, %v921, %v923
      %v925 = vrot.slane %v691, 2
      %v926 = vrot.slane %v692, 2
      %v927 = vsel %vm823, %v925, %v926
      %v928 = vrot.slane %v693, 2
      %v929 = vsel %vm823, %v926, %v928
      %930 = vrot.lane.b32.xlu0 %v745, 8
      %v931 = vpop.permute.xlu0 %930
      %932 = vrot.lane.b32.xlu0 %v747, 8
      %v933 = vpop.permute.xlu0 %932
      %934 = vrot.lane.b32.xlu0 %v750, 8
      %v935 = vpop.permute.xlu0 %934
      %936 = vrot.lane.b32.xlu0 %v752, 8
      %v937 = vpop.permute.xlu0 %936
      %938 = vrot.lane.b32.xlu0 %v755, 8
      %v939 = vpop.permute.xlu0 %938
      %940 = vrot.lane.b32.xlu0 %v757, 8
      %v941 = vpop.permute.xlu0 %940
      %942 = vrot.lane.b32.xlu0 %v760, 8
      %v943 = vpop.permute.xlu0 %942
      %944 = vrot.lane.b32.xlu0 %v762, 8
      %v945 = vpop.permute.xlu0 %944
      %946 = vrot.lane.b32.xlu0 %v765, 8
      %v947 = vpop.permute.xlu0 %946
      %948 = vrot.lane.b32.xlu0 %v767, 8
      %v949 = vpop.permute.xlu0 %948
      %950 = vrot.lane.b32.xlu0 %v770, 8
      %v951 = vpop.permute.xlu0 %950
      %952 = vrot.lane.b32.xlu0 %v772, 8
      %v953 = vpop.permute.xlu0 %952
      %954 = vrot.lane.b32.xlu0 %v775, 8
      %v955 = vpop.permute.xlu0 %954
      %956 = vrot.lane.b32.xlu0 %v777, 8
      %v957 = vpop.permute.xlu0 %956
      %958 = vrot.lane.b32.xlu0 %v780, 8
      %v959 = vpop.permute.xlu0 %958
      %960 = vrot.lane.b32.xlu0 %v782, 8
      %v961 = vpop.permute.xlu0 %960
      %962 = vrot.lane.b32.xlu0 %v785, 8
      %v963 = vpop.permute.xlu0 %962
      %964 = vrot.lane.b32.xlu0 %v787, 8
      %v965 = vpop.permute.xlu0 %964
      %966 = vrot.lane.b32.xlu0 %v790, 8
      %v967 = vpop.permute.xlu0 %966
      %968 = vrot.lane.b32.xlu0 %v792, 8
      %v969 = vpop.permute.xlu0 %968
      %970 = vrot.lane.b32.xlu0 %v795, 8
      %v971 = vpop.permute.xlu0 %970
      %972 = vrot.lane.b32.xlu0 %v797, 8
      %v973 = vpop.permute.xlu0 %972
      %974 = vrot.lane.b32.xlu0 %v800, 8
      %v975 = vpop.permute.xlu0 %974
      %976 = vrot.lane.b32.xlu0 %v802, 8
      %v977 = vpop.permute.xlu0 %976
      %978 = vrot.lane.b32.xlu0 %v805, 8
      %v979 = vpop.permute.xlu0 %978
      %980 = vrot.lane.b32.xlu0 %v807, 8
      %v981 = vpop.permute.xlu0 %980
      %982 = vrot.lane.b32.xlu0 %v810, 8
      %v983 = vpop.permute.xlu0 %982
      %984 = vrot.lane.b32.xlu0 %v812, 8
      %v985 = vpop.permute.xlu0 %984
      %986 = vrot.lane.b32.xlu0 %v815, 8
      %v987 = vpop.permute.xlu0 %986
      %988 = vrot.lane.b32.xlu0 %v817, 8
      %v989 = vpop.permute.xlu0 %988
      %990 = vrot.lane.b32.xlu0 %v820, 8
      %v991 = vpop.permute.xlu0 %990
      %992 = vrot.lane.b32.xlu0 %v822, 8
      %v993 = vpop.permute.xlu0 %992
      %1026 = vrot.lane.b32.xlu0 %v826, 16
      %v1027 = vpop.permute.xlu0 %1026
      %1028 = vrot.lane.b32.xlu0 %v828, 16
      %v1029 = vpop.permute.xlu0 %1028
      %1030 = vrot.lane.b32.xlu0 %v831, 16
      %v1031 = vpop.permute.xlu0 %1030
      %1032 = vrot.lane.b32.xlu0 %v833, 16
      %v1033 = vpop.permute.xlu0 %1032
      %1034 = vrot.lane.b32.xlu0 %v836, 16
      %v1035 = vpop.permute.xlu0 %1034
      %1036 = vrot.lane.b32.xlu0 %v838, 16
      %v1037 = vpop.permute.xlu0 %1036
      %1038 = vrot.lane.b32.xlu0 %v841, 16
      %v1039 = vpop.permute.xlu0 %1038
      %1040 = vrot.lane.b32.xlu0 %v843, 16
      %v1041 = vpop.permute.xlu0 %1040
      %1042 = vrot.lane.b32.xlu0 %v846, 16
      %v1043 = vpop.permute.xlu0 %1042
      %1044 = vrot.lane.b32.xlu0 %v848, 16
      %v1045 = vpop.permute.xlu0 %1044
      %1046 = vrot.lane.b32.xlu0 %v851, 16
      %v1047 = vpop.permute.xlu0 %1046
      %1048 = vrot.lane.b32.xlu0 %v853, 16
      %v1049 = vpop.permute.xlu0 %1048
      %1050 = vrot.lane.b32.xlu0 %v856, 16
      %v1051 = vpop.permute.xlu0 %1050
      %1052 = vrot.lane.b32.xlu0 %v858, 16
      %v1053 = vpop.permute.xlu0 %1052
      %1054 = vrot.lane.b32.xlu0 %v861, 16
      %v1055 = vpop.permute.xlu0 %1054
      %1056 = vrot.lane.b32.xlu0 %v863, 16
      %v1057 = vpop.permute.xlu0 %1056
      %1058 = vrot.lane.b32.xlu0 %v866, 16
      %v1059 = vpop.permute.xlu0 %1058
      %1060 = vrot.lane.b32.xlu0 %v868, 16
      %v1061 = vpop.permute.xlu0 %1060
      %1062 = vrot.lane.b32.xlu0 %v871, 16
      %v1063 = vpop.permute.xlu0 %1062
      %1064 = vrot.lane.b32.xlu0 %v873, 16
      %v1065 = vpop.permute.xlu0 %1064
      %1066 = vrot.lane.b32.xlu0 %v876, 16
      %v1067 = vpop.permute.xlu0 %1066
      %1068 = vrot.lane.b32.xlu0 %v878, 16
      %v1069 = vpop.permute.xlu0 %1068
      %1070 = vrot.lane.b32.xlu0 %v881, 16
      %v1071 = vpop.permute.xlu0 %1070
      %1072 = vrot.lane.b32.xlu0 %v883, 16
      %v1073 = vpop.permute.xlu0 %1072
      %1074 = vrot.lane.b32.xlu0 %v886, 16
      %v1075 = vpop.permute.xlu0 %1074
      %1076 = vrot.lane.b32.xlu0 %v888, 16
      %v1077 = vpop.permute.xlu0 %1076
      %1078 = vrot.lane.b32.xlu0 %v891, 16
      %v1079 = vpop.permute.xlu0 %1078
      %1080 = vrot.lane.b32.xlu0 %v893, 16
      %v1081 = vpop.permute.xlu0 %1080
      %1082 = vrot.lane.b32.xlu0 %v896, 16
      %v1083 = vpop.permute.xlu0 %1082
      %1084 = vrot.lane.b32.xlu0 %v898, 16
      %v1085 = vpop.permute.xlu0 %1084
      %1086 = vrot.lane.b32.xlu0 %v901, 16
      %v1087 = vpop.permute.xlu0 %1086
      %1088 = vrot.lane.b32.xlu0 %v903, 16
      %v1089 = vpop.permute.xlu0 %1088
      %1122 = vrot.lane.b32.xlu0 %v643, 24
      %v1123 = vpop.permute.xlu0 %1122
      %1124 = vrot.lane.b32.xlu0 %v644, 24
      %v1125 = vpop.permute.xlu0 %1124
      %1126 = vrot.lane.b32.xlu0 %v646, 24
      %v1127 = vpop.permute.xlu0 %1126
      %1128 = vrot.lane.b32.xlu0 %v647, 24
      %v1129 = vpop.permute.xlu0 %1128
      %1130 = vrot.lane.b32.xlu0 %v649, 24
      %v1131 = vpop.permute.xlu0 %1130
      %1132 = vrot.lane.b32.xlu0 %v650, 24
      %v1133 = vpop.permute.xlu0 %1132
      %1134 = vrot.lane.b32.xlu0 %v652, 24
      %v1135 = vpop.permute.xlu0 %1134
      %1136 = vrot.lane.b32.xlu0 %v653, 24
      %v1137 = vpop.permute.xlu0 %1136
      %1138 = vrot.lane.b32.xlu0 %v655, 24
      %v1139 = vpop.permute.xlu0 %1138
      %1140 = vrot.lane.b32.xlu0 %v656, 24
      %v1141 = vpop.permute.xlu0 %1140
      %1142 = vrot.lane.b32.xlu0 %v658, 24
      %v1143 = vpop.permute.xlu0 %1142
      %1144 = vrot.lane.b32.xlu0 %v659, 24
      %v1145 = vpop.permute.xlu0 %1144
      %1146 = vrot.lane.b32.xlu0 %v661, 24
      %v1147 = vpop.permute.xlu0 %1146
      %1148 = vrot.lane.b32.xlu0 %v662, 24
      %v1149 = vpop.permute.xlu0 %1148
      %1150 = vrot.lane.b32.xlu0 %v664, 24
      %v1151 = vpop.permute.xlu0 %1150
      %1152 = vrot.lane.b32.xlu0 %v665, 24
      %v1153 = vpop.permute.xlu0 %1152
      %1154 = vrot.lane.b32.xlu0 %v667, 24
      %v1155 = vpop.permute.xlu0 %1154
      %1156 = vrot.lane.b32.xlu0 %v668, 24
      %v1157 = vpop.permute.xlu0 %1156
      %1158 = vrot.lane.b32.xlu0 %v670, 24
      %v1159 = vpop.permute.xlu0 %1158
      %1160 = vrot.lane.b32.xlu0 %v671, 24
      %v1161 = vpop.permute.xlu0 %1160
      %1162 = vrot.lane.b32.xlu0 %v673, 24
      %v1163 = vpop.permute.xlu0 %1162
      %1164 = vrot.lane.b32.xlu0 %v674, 24
      %v1165 = vpop.permute.xlu0 %1164
      %1166 = vrot.lane.b32.xlu0 %v676, 24
      %v1167 = vpop.permute.xlu0 %1166
      %1168 = vrot.lane.b32.xlu0 %v677, 24
      %v1169 = vpop.permute.xlu0 %1168
      %1170 = vrot.lane.b32.xlu0 %v679, 24
      %v1171 = vpop.permute.xlu0 %1170
      %1172 = vrot.lane.b32.xlu0 %v680, 24
      %v1173 = vpop.permute.xlu0 %1172
      %1174 = vrot.lane.b32.xlu0 %v682, 24
      %v1175 = vpop.permute.xlu0 %1174
      %1176 = vrot.lane.b32.xlu0 %v683, 24
      %v1177 = vpop.permute.xlu0 %1176
      %1178 = vrot.lane.b32.xlu0 %v685, 24
      %v1179 = vpop.permute.xlu0 %1178
      %1180 = vrot.lane.b32.xlu0 %v686, 24
      %v1181 = vpop.permute.xlu0 %1180
      %1182 = vrot.lane.b32.xlu0 %v688, 24
      %v1183 = vpop.permute.xlu0 %1182
      %1184 = vrot.lane.b32.xlu0 %v689, 24
      %v1185 = vpop.permute.xlu0 %1184
      %1218 = vrot.lane.b32.xlu0 %v750, 32
      %v1219 = vpop.permute.xlu0 %1218
      %1220 = vrot.lane.b32.xlu0 %v752, 32
      %v1221 = vpop.permute.xlu0 %1220
      %1222 = vrot.lane.b32.xlu0 %v755, 32
      %v1223 = vpop.permute.xlu0 %1222
      %1224 = vrot.lane.b32.xlu0 %v757, 32
      %v1225 = vpop.permute.xlu0 %1224
      %1226 = vrot.lane.b32.xlu0 %v760, 32
      %v1227 = vpop.permute.xlu0 %1226
      %1228 = vrot.lane.b32.xlu0 %v762, 32
      %v1229 = vpop.permute.xlu0 %1228
      %1230 = vrot.lane.b32.xlu0 %v765, 32
      %v1231 = vpop.permute.xlu0 %1230
      %1232 = vrot.lane.b32.xlu0 %v767, 32
      %v1233 = vpop.permute.xlu0 %1232
      %1234 = vrot.lane.b32.xlu0 %v770, 32
      %v1235 = vpop.permute.xlu0 %1234
      %1236 = vrot.lane.b32.xlu0 %v772, 32
      %v1237 = vpop.permute.xlu0 %1236
      %1238 = vrot.lane.b32.xlu0 %v775, 32
      %v1239 = vpop.permute.xlu0 %1238
      %1240 = vrot.lane.b32.xlu0 %v777, 32
      %v1241 = vpop.permute.xlu0 %1240
      %1242 = vrot.lane.b32.xlu0 %v780, 32
      %v1243 = vpop.permute.xlu0 %1242
      %1244 = vrot.lane.b32.xlu0 %v782, 32
      %v1245 = vpop.permute.xlu0 %1244
      %1246 = vrot.lane.b32.xlu0 %v785, 32
      %v1247 = vpop.permute.xlu0 %1246
      %1248 = vrot.lane.b32.xlu0 %v787, 32
      %v1249 = vpop.permute.xlu0 %1248
      %1250 = vrot.lane.b32.xlu0 %v790, 32
      %v1251 = vpop.permute.xlu0 %1250
      %1252 = vrot.lane.b32.xlu0 %v792, 32
      %v1253 = vpop.permute.xlu0 %1252
      %1254 = vrot.lane.b32.xlu0 %v795, 32
      %v1255 = vpop.permute.xlu0 %1254
      %1256 = vrot.lane.b32.xlu0 %v797, 32
      %v1257 = vpop.permute.xlu0 %1256
      %1258 = vrot.lane.b32.xlu0 %v800, 32
      %v1259 = vpop.permute.xlu0 %1258
      %1260 = vrot.lane.b32.xlu0 %v802, 32
      %v1261 = vpop.permute.xlu0 %1260
      %1262 = vrot.lane.b32.xlu0 %v805, 32
      %v1263 = vpop.permute.xlu0 %1262
      %1264 = vrot.lane.b32.xlu0 %v807, 32
      %v1265 = vpop.permute.xlu0 %1264
      %1266 = vrot.lane.b32.xlu0 %v810, 32
      %v1267 = vpop.permute.xlu0 %1266
      %1268 = vrot.lane.b32.xlu0 %v812, 32
      %v1269 = vpop.permute.xlu0 %1268
      %1270 = vrot.lane.b32.xlu0 %v815, 32
      %v1271 = vpop.permute.xlu0 %1270
      %1272 = vrot.lane.b32.xlu0 %v817, 32
      %v1273 = vpop.permute.xlu0 %1272
      %1274 = vrot.lane.b32.xlu0 %v820, 32
      %v1275 = vpop.permute.xlu0 %1274
      %1276 = vrot.lane.b32.xlu0 %v822, 32
      %v1277 = vpop.permute.xlu0 %1276
      %1278 = vrot.lane.b32.xlu0 %v909, 32
      %v1279 = vpop.permute.xlu0 %1278
      %1280 = vrot.lane.b32.xlu0 %v911, 32
      %v1281 = vpop.permute.xlu0 %1280
      %1314 = vrot.lane.b32.xlu0 %v831, 40
      %v1315 = vpop.permute.xlu0 %1314
      %1316 = vrot.lane.b32.xlu0 %v833, 40
      %v1317 = vpop.permute.xlu0 %1316
      %1318 = vrot.lane.b32.xlu0 %v836, 40
      %v1319 = vpop.permute.xlu0 %1318
      %1320 = vrot.lane.b32.xlu0 %v838, 40
      %v1321 = vpop.permute.xlu0 %1320
      %1322 = vrot.lane.b32.xlu0 %v841, 40
      %v1323 = vpop.permute.xlu0 %1322
      %1324 = vrot.lane.b32.xlu0 %v843, 40
      %v1325 = vpop.permute.xlu0 %1324
      %1326 = vrot.lane.b32.xlu0 %v846, 40
      %v1327 = vpop.permute.xlu0 %1326
      %1328 = vrot.lane.b32.xlu0 %v848, 40
      %v1329 = vpop.permute.xlu0 %1328
      %1330 = vrot.lane.b32.xlu0 %v851, 40
      %v1331 = vpop.permute.xlu0 %1330
      %1332 = vrot.lane.b32.xlu0 %v853, 40
      %v1333 = vpop.permute.xlu0 %1332
      %1334 = vrot.lane.b32.xlu0 %v856, 40
      %v1335 = vpop.permute.xlu0 %1334
      %1336 = vrot.lane.b32.xlu0 %v858, 40
      %v1337 = vpop.permute.xlu0 %1336
      %1338 = vrot.lane.b32.xlu0 %v861, 40
      %v1339 = vpop.permute.xlu0 %1338
      %1340 = vrot.lane.b32.xlu0 %v863, 40
      %v1341 = vpop.permute.xlu0 %1340
      %1342 = vrot.lane.b32.xlu0 %v866, 40
      %v1343 = vpop.permute.xlu0 %1342
      %1344 = vrot.lane.b32.xlu0 %v868, 40
      %v1345 = vpop.permute.xlu0 %1344
      %1346 = vrot.lane.b32.xlu0 %v871, 40
      %v1347 = vpop.permute.xlu0 %1346
      %1348 = vrot.lane.b32.xlu0 %v873, 40
      %v1349 = vpop.permute.xlu0 %1348
      %1350 = vrot.lane.b32.xlu0 %v876, 40
      %v1351 = vpop.permute.xlu0 %1350
      %1352 = vrot.lane.b32.xlu0 %v878, 40
      %v1353 = vpop.permute.xlu0 %1352
      %1354 = vrot.lane.b32.xlu0 %v881, 40
      %v1355 = vpop.permute.xlu0 %1354
      %1356 = vrot.lane.b32.xlu0 %v883, 40
      %v1357 = vpop.permute.xlu0 %1356
      %1358 = vrot.lane.b32.xlu0 %v886, 40
      %v1359 = vpop.permute.xlu0 %1358
      %1360 = vrot.lane.b32.xlu0 %v888, 40
      %v1361 = vpop.permute.xlu0 %1360
      %1362 = vrot.lane.b32.xlu0 %v891, 40
      %v1363 = vpop.permute.xlu0 %1362
      %1364 = vrot.lane.b32.xlu0 %v893, 40
      %v1365 = vpop.permute.xlu0 %1364
      %1366 = vrot.lane.b32.xlu0 %v896, 40
      %v1367 = vpop.permute.xlu0 %1366
      %1368 = vrot.lane.b32.xlu0 %v898, 40
      %v1369 = vpop.permute.xlu0 %1368
      %1370 = vrot.lane.b32.xlu0 %v901, 40
      %v1371 = vpop.permute.xlu0 %1370
      %1372 = vrot.lane.b32.xlu0 %v903, 40
      %v1373 = vpop.permute.xlu0 %1372
      %1374 = vrot.lane.b32.xlu0 %v914, 40
      %v1375 = vpop.permute.xlu0 %1374
      %1376 = vrot.lane.b32.xlu0 %v916, 40
      %v1377 = vpop.permute.xlu0 %1376
      %1410 = vrot.lane.b32.xlu0 %v646, 48
      %v1411 = vpop.permute.xlu0 %1410
      %1412 = vrot.lane.b32.xlu0 %v647, 48
      %v1413 = vpop.permute.xlu0 %1412
      %1414 = vrot.lane.b32.xlu0 %v649, 48
      %v1415 = vpop.permute.xlu0 %1414
      %1416 = vrot.lane.b32.xlu0 %v650, 48
      %v1417 = vpop.permute.xlu0 %1416
      %1418 = vrot.lane.b32.xlu0 %v652, 48
      %v1419 = vpop.permute.xlu0 %1418
      %1420 = vrot.lane.b32.xlu0 %v653, 48
      %v1421 = vpop.permute.xlu0 %1420
      %1422 = vrot.lane.b32.xlu0 %v655, 48
      %v1423 = vpop.permute.xlu0 %1422
      %1424 = vrot.lane.b32.xlu0 %v656, 48
      %v1425 = vpop.permute.xlu0 %1424
      %1426 = vrot.lane.b32.xlu0 %v658, 48
      %v1427 = vpop.permute.xlu0 %1426
      %1428 = vrot.lane.b32.xlu0 %v659, 48
      %v1429 = vpop.permute.xlu0 %1428
      %1430 = vrot.lane.b32.xlu0 %v661, 48
      %v1431 = vpop.permute.xlu0 %1430
      %1432 = vrot.lane.b32.xlu0 %v662, 48
      %v1433 = vpop.permute.xlu0 %1432
      %1434 = vrot.lane.b32.xlu0 %v664, 48
      %v1435 = vpop.permute.xlu0 %1434
      %1436 = vrot.lane.b32.xlu0 %v665, 48
      %v1437 = vpop.permute.xlu0 %1436
      %1438 = vrot.lane.b32.xlu0 %v667, 48
      %v1439 = vpop.permute.xlu0 %1438
      %1440 = vrot.lane.b32.xlu0 %v668, 48
      %v1441 = vpop.permute.xlu0 %1440
      %1442 = vrot.lane.b32.xlu0 %v670, 48
      %v1443 = vpop.permute.xlu0 %1442
      %1444 = vrot.lane.b32.xlu0 %v671, 48
      %v1445 = vpop.permute.xlu0 %1444
      %1446 = vrot.lane.b32.xlu0 %v673, 48
      %v1447 = vpop.permute.xlu0 %1446
      %1448 = vrot.lane.b32.xlu0 %v674, 48
      %v1449 = vpop.permute.xlu0 %1448
      %1450 = vrot.lane.b32.xlu0 %v676, 48
      %v1451 = vpop.permute.xlu0 %1450
      %1452 = vrot.lane.b32.xlu0 %v677, 48
      %v1453 = vpop.permute.xlu0 %1452
      %1454 = vrot.lane.b32.xlu0 %v679, 48
      %v1455 = vpop.permute.xlu0 %1454
      %1456 = vrot.lane.b32.xlu0 %v680, 48
      %v1457 = vpop.permute.xlu0 %1456
      %1458 = vrot.lane.b32.xlu0 %v682, 48
      %v1459 = vpop.permute.xlu0 %1458
      %1460 = vrot.lane.b32.xlu0 %v683, 48
      %v1461 = vpop.permute.xlu0 %1460
      %1462 = vrot.lane.b32.xlu0 %v685, 48
      %v1463 = vpop.permute.xlu0 %1462
      %1464 = vrot.lane.b32.xlu0 %v686, 48
      %v1465 = vpop.permute.xlu0 %1464
      %1466 = vrot.lane.b32.xlu0 %v688, 48
      %v1467 = vpop.permute.xlu0 %1466
      %1468 = vrot.lane.b32.xlu0 %v689, 48
      %v1469 = vpop.permute.xlu0 %1468
      %1470 = vrot.lane.b32.xlu0 %v691, 48
      %v1471 = vpop.permute.xlu0 %1470
      %1472 = vrot.lane.b32.xlu0 %v692, 48
      %v1473 = vpop.permute.xlu0 %1472
      %1506 = vrot.lane.b32.xlu0 %v755, 56
      %v1507 = vpop.permute.xlu0 %1506
      %1508 = vrot.lane.b32.xlu0 %v757, 56
      %v1509 = vpop.permute.xlu0 %1508
      %1510 = vrot.lane.b32.xlu0 %v760, 56
      %v1511 = vpop.permute.xlu0 %1510
      %1512 = vrot.lane.b32.xlu0 %v762, 56
      %v1513 = vpop.permute.xlu0 %1512
      %1514 = vrot.lane.b32.xlu0 %v765, 56
      %v1515 = vpop.permute.xlu0 %1514
      %1516 = vrot.lane.b32.xlu0 %v767, 56
      %v1517 = vpop.permute.xlu0 %1516
      %1518 = vrot.lane.b32.xlu0 %v770, 56
      %v1519 = vpop.permute.xlu0 %1518
      %1520 = vrot.lane.b32.xlu0 %v772, 56
      %v1521 = vpop.permute.xlu0 %1520
      %1522 = vrot.lane.b32.xlu0 %v775, 56
      %v1523 = vpop.permute.xlu0 %1522
      %1524 = vrot.lane.b32.xlu0 %v777, 56
      %v1525 = vpop.permute.xlu0 %1524
      %1526 = vrot.lane.b32.xlu0 %v780, 56
      %v1527 = vpop.permute.xlu0 %1526
      %1528 = vrot.lane.b32.xlu0 %v782, 56
      %v1529 = vpop.permute.xlu0 %1528
      %1530 = vrot.lane.b32.xlu0 %v785, 56
      %v1531 = vpop.permute.xlu0 %1530
      %1532 = vrot.lane.b32.xlu0 %v787, 56
      %v1533 = vpop.permute.xlu0 %1532
      %1534 = vrot.lane.b32.xlu0 %v790, 56
      %v1535 = vpop.permute.xlu0 %1534
      %1536 = vrot.lane.b32.xlu0 %v792, 56
      %v1537 = vpop.permute.xlu0 %1536
      %1538 = vrot.lane.b32.xlu0 %v795, 56
      %v1539 = vpop.permute.xlu0 %1538
      %1540 = vrot.lane.b32.xlu0 %v797, 56
      %v1541 = vpop.permute.xlu0 %1540
      %1542 = vrot.lane.b32.xlu0 %v800, 56
      %v1543 = vpop.permute.xlu0 %1542
      %1544 = vrot.lane.b32.xlu0 %v802, 56
      %v1545 = vpop.permute.xlu0 %1544
      %1546 = vrot.lane.b32.xlu0 %v805, 56
      %v1547 = vpop.permute.xlu0 %1546
      %1548 = vrot.lane.b32.xlu0 %v807, 56
      %v1549 = vpop.permute.xlu0 %1548
      %1550 = vrot.lane.b32.xlu0 %v810, 56
      %v1551 = vpop.permute.xlu0 %1550
      %1552 = vrot.lane.b32.xlu0 %v812, 56
      %v1553 = vpop.permute.xlu0 %1552
      %1554 = vrot.lane.b32.xlu0 %v815, 56
      %v1555 = vpop.permute.xlu0 %1554
      %1556 = vrot.lane.b32.xlu0 %v817, 56
      %v1557 = vpop.permute.xlu0 %1556
      %1558 = vrot.lane.b32.xlu0 %v820, 56
      %v1559 = vpop.permute.xlu0 %1558
      %1560 = vrot.lane.b32.xlu0 %v822, 56
      %v1561 = vpop.permute.xlu0 %1560
      %1562 = vrot.lane.b32.xlu0 %v909, 56
      %v1563 = vpop.permute.xlu0 %1562
      %1564 = vrot.lane.b32.xlu0 %v911, 56
      %v1565 = vpop.permute.xlu0 %1564
      %1566 = vrot.lane.b32.xlu0 %v922, 56
      %v1567 = vpop.permute.xlu0 %1566
      %1568 = vrot.lane.b32.xlu0 %v924, 56
      %v1569 = vpop.permute.xlu0 %1568
      %1602 = vrot.lane.b32.xlu0 %v836, 64
      %v1603 = vpop.permute.xlu0 %1602
      %1604 = vrot.lane.b32.xlu0 %v838, 64
      %v1605 = vpop.permute.xlu0 %1604
      %1606 = vrot.lane.b32.xlu0 %v841, 64
      %v1607 = vpop.permute.xlu0 %1606
      %1608 = vrot.lane.b32.xlu0 %v843, 64
      %v1609 = vpop.permute.xlu0 %1608
      %1610 = vrot.lane.b32.xlu0 %v846, 64
      %v1611 = vpop.permute.xlu0 %1610
      %1612 = vrot.lane.b32.xlu0 %v848, 64
      %v1613 = vpop.permute.xlu0 %1612
      %1614 = vrot.lane.b32.xlu0 %v851, 64
      %v1615 = vpop.permute.xlu0 %1614
      %1616 = vrot.lane.b32.xlu0 %v853, 64
      %v1617 = vpop.permute.xlu0 %1616
      %1618 = vrot.lane.b32.xlu0 %v856, 64
      %v1619 = vpop.permute.xlu0 %1618
      %1620 = vrot.lane.b32.xlu0 %v858, 64
      %v1621 = vpop.permute.xlu0 %1620
      %1622 = vrot.lane.b32.xlu0 %v861, 64
      %v1623 = vpop.permute.xlu0 %1622
      %1624 = vrot.lane.b32.xlu0 %v863, 64
      %v1625 = vpop.permute.xlu0 %1624
      %1626 = vrot.lane.b32.xlu0 %v866, 64
      %v1627 = vpop.permute.xlu0 %1626
      %1628 = vrot.lane.b32.xlu0 %v868, 64
      %v1629 = vpop.permute.xlu0 %1628
      %1630 = vrot.lane.b32.xlu0 %v871, 64
      %v1631 = vpop.permute.xlu0 %1630
      %1632 = vrot.lane.b32.xlu0 %v873, 64
      %v1633 = vpop.permute.xlu0 %1632
      %1634 = vrot.lane.b32.xlu0 %v876, 64
      %v1635 = vpop.permute.xlu0 %1634
      %1636 = vrot.lane.b32.xlu0 %v878, 64
      %v1637 = vpop.permute.xlu0 %1636
      %1638 = vrot.lane.b32.xlu0 %v881, 64
      %v1639 = vpop.permute.xlu0 %1638
      %1640 = vrot.lane.b32.xlu0 %v883, 64
      %v1641 = vpop.permute.xlu0 %1640
      %1642 = vrot.lane.b32.xlu0 %v886, 64
      %v1643 = vpop.permute.xlu0 %1642
      %1644 = vrot.lane.b32.xlu0 %v888, 64
      %v1645 = vpop.permute.xlu0 %1644
      %1646 = vrot.lane.b32.xlu0 %v891, 64
      %v1647 = vpop.permute.xlu0 %1646
      %1648 = vrot.lane.b32.xlu0 %v893, 64
      %v1649 = vpop.permute.xlu0 %1648
      %1650 = vrot.lane.b32.xlu0 %v896, 64
      %v1651 = vpop.permute.xlu0 %1650
      %1652 = vrot.lane.b32.xlu0 %v898, 64
      %v1653 = vpop.permute.xlu0 %1652
      %1654 = vrot.lane.b32.xlu0 %v901, 64
      %v1655 = vpop.permute.xlu0 %1654
      %1656 = vrot.lane.b32.xlu0 %v903, 64
      %v1657 = vpop.permute.xlu0 %1656
      %1658 = vrot.lane.b32.xlu0 %v914, 64
      %v1659 = vpop.permute.xlu0 %1658
      %1660 = vrot.lane.b32.xlu0 %v916, 64
      %v1661 = vpop.permute.xlu0 %1660
      %1662 = vrot.lane.b32.xlu0 %v927, 64
      %v1663 = vpop.permute.xlu0 %1662
      %1664 = vrot.lane.b32.xlu0 %v929, 64
      %v1665 = vpop.permute.xlu0 %1664
      %v1698 = vsel %vm326, %v640, %v931
      %v1699 = vsel %vm326, %v641, %v933
      %v1700 = vsel %vm326, %v643, %v935
      %v1701 = vsel %vm326, %v644, %v937
      %v1702 = vsel %vm326, %v646, %v939
      %v1703 = vsel %vm326, %v647, %v941
      %v1704 = vsel %vm326, %v649, %v943
      %v1705 = vsel %vm326, %v650, %v945
      %v1706 = vsel %vm326, %v652, %v947
      %v1707 = vsel %vm326, %v653, %v949
      %v1708 = vsel %vm326, %v655, %v951
      %v1709 = vsel %vm326, %v656, %v953
      %v1710 = vsel %vm326, %v658, %v955
      %v1711 = vsel %vm326, %v659, %v957
      %v1712 = vsel %vm326, %v661, %v959
      %v1713 = vsel %vm326, %v662, %v961
      %v1714 = vsel %vm326, %v664, %v963
      %v1715 = vsel %vm326, %v665, %v965
      %v1716 = vsel %vm326, %v667, %v967
      %v1717 = vsel %vm326, %v668, %v969
      %v1718 = vsel %vm326, %v670, %v971
      %v1719 = vsel %vm326, %v671, %v973
      %v1720 = vsel %vm326, %v673, %v975
      %v1721 = vsel %vm326, %v674, %v977
      %v1722 = vsel %vm326, %v676, %v979
      %v1723 = vsel %vm326, %v677, %v981
      %v1724 = vsel %vm326, %v679, %v983
      %v1725 = vsel %vm326, %v680, %v985
      %v1726 = vsel %vm326, %v682, %v987
      %v1727 = vsel %vm326, %v683, %v989
      %v1728 = vsel %vm326, %v685, %v991
      %v1729 = vsel %vm326, %v686, %v993
      %vm1730 = vcmask 130048
      %v1731 = vsel %vm1730, %v1698, %v1027
      %v1732 = vsel %vm1730, %v1699, %v1029
      %v1733 = vsel %vm1730, %v1700, %v1031
      %v1734 = vsel %vm1730, %v1701, %v1033
      %v1735 = vsel %vm1730, %v1702, %v1035
      %v1736 = vsel %vm1730, %v1703, %v1037
      %v1737 = vsel %vm1730, %v1704, %v1039
      %v1738 = vsel %vm1730, %v1705, %v1041
      %v1739 = vsel %vm1730, %v1706, %v1043
      %v1740 = vsel %vm1730, %v1707, %v1045
      %v1741 = vsel %vm1730, %v1708, %v1047
      %v1742 = vsel %vm1730, %v1709, %v1049
      %v1743 = vsel %vm1730, %v1710, %v1051
      %v1744 = vsel %vm1730, %v1711, %v1053
      %v1745 = vsel %vm1730, %v1712, %v1055
      %v1746 = vsel %vm1730, %v1713, %v1057
      %v1747 = vsel %vm1730, %v1714, %v1059
      %v1748 = vsel %vm1730, %v1715, %v1061
      %v1749 = vsel %vm1730, %v1716, %v1063
      %v1750 = vsel %vm1730, %v1717, %v1065
      %v1751 = vsel %vm1730, %v1718, %v1067
      %v1752 = vsel %vm1730, %v1719, %v1069
      %v1753 = vsel %vm1730, %v1720, %v1071
      %v1754 = vsel %vm1730, %v1721, %v1073
      %v1755 = vsel %vm1730, %v1722, %v1075
      %v1756 = vsel %vm1730, %v1723, %v1077
      %v1757 = vsel %vm1730, %v1724, %v1079
      %v1758 = vsel %vm1730, %v1725, %v1081
      %v1759 = vsel %vm1730, %v1726, %v1083
      %v1760 = vsel %vm1730, %v1727, %v1085
      %v1761 = vsel %vm1730, %v1728, %v1087
      %v1762 = vsel %vm1730, %v1729, %v1089
      %vm1763 = vcmask 195584
      %v1764 = vsel %vm1763, %v1731, %v1123
      %v1765 = vsel %vm1763, %v1732, %v1125
      %v1766 = vsel %vm1763, %v1733, %v1127
      %v1767 = vsel %vm1763, %v1734, %v1129
      %v1768 = vsel %vm1763, %v1735, %v1131
      %v1769 = vsel %vm1763, %v1736, %v1133
      %v1770 = vsel %vm1763, %v1737, %v1135
      %v1771 = vsel %vm1763, %v1738, %v1137
      %v1772 = vsel %vm1763, %v1739, %v1139
      %v1773 = vsel %vm1763, %v1740, %v1141
      %v1774 = vsel %vm1763, %v1741, %v1143
      %v1775 = vsel %vm1763, %v1742, %v1145
      %v1776 = vsel %vm1763, %v1743, %v1147
      %v1777 = vsel %vm1763, %v1744, %v1149
      %v1778 = vsel %vm1763, %v1745, %v1151
      %v1779 = vsel %vm1763, %v1746, %v1153
      %v1780 = vsel %vm1763, %v1747, %v1155
      %v1781 = vsel %vm1763, %v1748, %v1157
      %v1782 = vsel %vm1763, %v1749, %v1159
      %v1783 = vsel %vm1763, %v1750, %v1161
      %v1784 = vsel %vm1763, %v1751, %v1163
      %v1785 = vsel %vm1763, %v1752, %v1165
      %v1786 = vsel %vm1763, %v1753, %v1167
      %v1787 = vsel %vm1763, %v1754, %v1169
      %v1788 = vsel %vm1763, %v1755, %v1171
      %v1789 = vsel %vm1763, %v1756, %v1173
      %v1790 = vsel %vm1763, %v1757, %v1175
      %v1791 = vsel %vm1763, %v1758, %v1177
      %v1792 = vsel %vm1763, %v1759, %v1179
      %v1793 = vsel %vm1763, %v1760, %v1181
      %v1794 = vsel %vm1763, %v1761, %v1183
      %v1795 = vsel %vm1763, %v1762, %v1185
      %vm1796 = vcmask 261120
      %v1797 = vsel %vm1796, %v1764, %v1219
      %v1798 = vsel %vm1796, %v1765, %v1221
      %v1799 = vsel %vm1796, %v1766, %v1223
      %v1800 = vsel %vm1796, %v1767, %v1225
      %v1801 = vsel %vm1796, %v1768, %v1227
      %v1802 = vsel %vm1796, %v1769, %v1229
      %v1803 = vsel %vm1796, %v1770, %v1231
      %v1804 = vsel %vm1796, %v1771, %v1233
      %v1805 = vsel %vm1796, %v1772, %v1235
      %v1806 = vsel %vm1796, %v1773, %v1237
      %v1807 = vsel %vm1796, %v1774, %v1239
      %v1808 = vsel %vm1796, %v1775, %v1241
      %v1809 = vsel %vm1796, %v1776, %v1243
      %v1810 = vsel %vm1796, %v1777, %v1245
      %v1811 = vsel %vm1796, %v1778, %v1247
      %v1812 = vsel %vm1796, %v1779, %v1249
      %v1813 = vsel %vm1796, %v1780, %v1251
      %v1814 = vsel %vm1796, %v1781, %v1253
      %v1815 = vsel %vm1796, %v1782, %v1255
      %v1816 = vsel %vm1796, %v1783, %v1257
      %v1817 = vsel %vm1796, %v1784, %v1259
      %v1818 = vsel %vm1796, %v1785, %v1261
      %v1819 = vsel %vm1796, %v1786, %v1263
      %v1820 = vsel %vm1796, %v1787, %v1265
      %v1821 = vsel %vm1796, %v1788, %v1267
      %v1822 = vsel %vm1796, %v1789, %v1269
      %v1823 = vsel %vm1796, %v1790, %v1271
      %v1824 = vsel %vm1796, %v1791, %v1273
      %v1825 = vsel %vm1796, %v1792, %v1275
      %v1826 = vsel %vm1796, %v1793, %v1277
      %v1827 = vsel %vm1796, %v1794, %v1279
      %v1828 = vsel %vm1796, %v1795, %v1281
      %vm1829 = vcmask 326656
      %v1830 = vsel %vm1829, %v1797, %v1315
      %v1831 = vsel %vm1829, %v1798, %v1317
      %v1832 = vsel %vm1829, %v1799, %v1319
      %v1833 = vsel %vm1829, %v1800, %v1321
      %v1834 = vsel %vm1829, %v1801, %v1323
      %v1835 = vsel %vm1829, %v1802, %v1325
      %v1836 = vsel %vm1829, %v1803, %v1327
      %v1837 = vsel %vm1829, %v1804, %v1329
      %v1838 = vsel %vm1829, %v1805, %v1331
      %v1839 = vsel %vm1829, %v1806, %v1333
      %v1840 = vsel %vm1829, %v1807, %v1335
      %v1841 = vsel %vm1829, %v1808, %v1337
      %v1842 = vsel %vm1829, %v1809, %v1339
      %v1843 = vsel %vm1829, %v1810, %v1341
      %v1844 = vsel %vm1829, %v1811, %v1343
      %v1845 = vsel %vm1829, %v1812, %v1345
      %v1846 = vsel %vm1829, %v1813, %v1347
      %v1847 = vsel %vm1829, %v1814, %v1349
      %v1848 = vsel %vm1829, %v1815, %v1351
      %v1849 = vsel %vm1829, %v1816, %v1353
      %v1850 = vsel %vm1829, %v1817, %v1355
      %v1851 = vsel %vm1829, %v1818, %v1357
      %v1852 = vsel %vm1829, %v1819, %v1359
      %v1853 = vsel %vm1829, %v1820, %v1361
      %v1854 = vsel %vm1829, %v1821, %v1363
      %v1855 = vsel %vm1829, %v1822, %v1365
      %v1856 = vsel %vm1829, %v1823, %v1367
      %v1857 = vsel %vm1829, %v1824, %v1369
      %v1858 = vsel %vm1829, %v1825, %v1371
      %v1859 = vsel %vm1829, %v1826, %v1373
      %v1860 = vsel %vm1829, %v1827, %v1375
      %v1861 = vsel %vm1829, %v1828, %v1377
      %vm1862 = vcmask 392192
      %v1863 = vsel %vm1862, %v1830, %v1411
      %v1864 = vsel %vm1862, %v1831, %v1413
      %v1865 = vsel %vm1862, %v1832, %v1415
      %v1866 = vsel %vm1862, %v1833, %v1417
      %v1867 = vsel %vm1862, %v1834, %v1419
      %v1868 = vsel %vm1862, %v1835, %v1421
      %v1869 = vsel %vm1862, %v1836, %v1423
      %v1870 = vsel %vm1862, %v1837, %v1425
      %v1871 = vsel %vm1862, %v1838, %v1427
      %v1872 = vsel %vm1862, %v1839, %v1429
      %v1873 = vsel %vm1862, %v1840, %v1431
      %v1874 = vsel %vm1862, %v1841, %v1433
      %v1875 = vsel %vm1862, %v1842, %v1435
      %v1876 = vsel %vm1862, %v1843, %v1437
      %v1877 = vsel %vm1862, %v1844, %v1439
      %v1878 = vsel %vm1862, %v1845, %v1441
      %v1879 = vsel %vm1862, %v1846, %v1443
      %v1880 = vsel %vm1862, %v1847, %v1445
      %v1881 = vsel %vm1862, %v1848, %v1447
      %v1882 = vsel %vm1862, %v1849, %v1449
      %v1883 = vsel %vm1862, %v1850, %v1451
      %v1884 = vsel %vm1862, %v1851, %v1453
      %v1885 = vsel %vm1862, %v1852, %v1455
      %v1886 = vsel %vm1862, %v1853, %v1457
      %v1887 = vsel %vm1862, %v1854, %v1459
      %v1888 = vsel %vm1862, %v1855, %v1461
      %v1889 = vsel %vm1862, %v1856, %v1463
      %v1890 = vsel %vm1862, %v1857, %v1465
      %v1891 = vsel %vm1862, %v1858, %v1467
      %v1892 = vsel %vm1862, %v1859, %v1469
      %v1893 = vsel %vm1862, %v1860, %v1471
      %v1894 = vsel %vm1862, %v1861, %v1473
      %vm1895 = vcmask 457728
      %v1896 = vsel %vm1895, %v1863, %v1507
      %v1897 = vsel %vm1895, %v1864, %v1509
      %v1898 = vsel %vm1895, %v1865, %v1511
      %v1899 = vsel %vm1895, %v1866, %v1513
      %v1900 = vsel %vm1895, %v1867, %v1515
      %v1901 = vsel %vm1895, %v1868, %v1517
      %v1902 = vsel %vm1895, %v1869, %v1519
      %v1903 = vsel %vm1895, %v1870, %v1521
      %v1904 = vsel %vm1895, %v1871, %v1523
      %v1905 = vsel %vm1895, %v1872, %v1525
      %v1906 = vsel %vm1895, %v1873, %v1527
      %v1907 = vsel %vm1895, %v1874, %v1529
      %v1908 = vsel %vm1895, %v1875, %v1531
      %v1909 = vsel %vm1895, %v1876, %v1533
      %v1910 = vsel %vm1895, %v1877, %v1535
      %v1911 = vsel %vm1895, %v1878, %v1537
      %v1912 = vsel %vm1895, %v1879, %v1539
      %v1913 = vsel %vm1895, %v1880, %v1541
      %v1914 = vsel %vm1895, %v1881, %v1543
      %v1915 = vsel %vm1895, %v1882, %v1545
      %v1916 = vsel %vm1895, %v1883, %v1547
      %v1917 = vsel %vm1895, %v1884, %v1549
      %v1918 = vsel %vm1895, %v1885, %v1551
      %v1919 = vsel %vm1895, %v1886, %v1553
      %v1920 = vsel %vm1895, %v1887, %v1555
      %v1921 = vsel %vm1895, %v1888, %v1557
      %v1922 = vsel %vm1895, %v1889, %v1559
      %v1923 = vsel %vm1895, %v1890, %v1561
      %v1924 = vsel %vm1895, %v1891, %v1563
      %v1925 = vsel %vm1895, %v1892, %v1565
      %v1926 = vsel %vm1895, %v1893, %v1567
      %v1927 = vsel %vm1895, %v1894, %v1569
      %vm1928 = vcmask 523264
      %v1929 = vsel %vm1928, %v1896, %v1603
      %v1930 = vsel %vm1928, %v1897, %v1605
      %v1931 = vsel %vm1928, %v1898, %v1607
      %v1932 = vsel %vm1928, %v1899, %v1609
      %v1933 = vsel %vm1928, %v1900, %v1611
      %v1934 = vsel %vm1928, %v1901, %v1613
      %v1935 = vsel %vm1928, %v1902, %v1615
      %v1936 = vsel %vm1928, %v1903, %v1617
      %v1937 = vsel %vm1928, %v1904, %v1619
      %v1938 = vsel %vm1928, %v1905, %v1621
      %v1939 = vsel %vm1928, %v1906, %v1623
      %v1940 = vsel %vm1928, %v1907, %v1625
      %v1941 = vsel %vm1928, %v1908, %v1627
      %v1942 = vsel %vm1928, %v1909, %v1629
      %v1943 = vsel %vm1928, %v1910, %v1631
      %v1944 = vsel %vm1928, %v1911, %v1633
      %v1945 = vsel %vm1928, %v1912, %v1635
      %v1946 = vsel %vm1928, %v1913, %v1637
      %v1947 = vsel %vm1928, %v1914, %v1639
      %v1948 = vsel %vm1928, %v1915, %v1641
      %v1949 = vsel %vm1928, %v1916, %v1643
      %v1950 = vsel %vm1928, %v1917, %v1645
      %v1951 = vsel %vm1928, %v1918, %v1647
      %v1952 = vsel %vm1928, %v1919, %v1649
      %v1953 = vsel %vm1928, %v1920, %v1651
      %v1954 = vsel %vm1928, %v1921, %v1653
      %v1955 = vsel %vm1928, %v1922, %v1655
      %v1956 = vsel %vm1928, %v1923, %v1657
      %v1957 = vsel %vm1928, %v1924, %v1659
      %v1958 = vsel %vm1928, %v1925, %v1661
      %v1959 = vsel %vm1928, %v1926, %v1663
      %v1960 = vsel %vm1928, %v1927, %v1665
      %v1961 = vld [vmem:[%s2] sm:$0xff]
      %v1962 = vld [vmem:[%s2 + $0x8] sm:$0xff]
      %v1963 = vld [vmem:[%s2 + $0x10] sm:$0xff]
      %v1964 = vld [vmem:[%s2 + $0x18] sm:$0xff]
      %v1965 = vld [vmem:[%s2 + $0x20] sm:$0xff]
      %v1966 = vld [vmem:[%s2 + $0x28] sm:$0xff]
      %v1967 = vld [vmem:[%s2 + $0x30] sm:$0xff]
      %v1968 = vld [vmem:[%s2 + $0x38] sm:$0xff]
      %v1969 = vld [vmem:[%s2 + $0x40] sm:$0xff]
      %v1970 = vld [vmem:[%s3] sm:$0x1]
      %v1972 = vlaneseq
      %v1973 = vshrl.u32 %v1972, 7
      %v1974 = vsub.s32 0, %v1973
      %v1975 = vrot.slane %v1970, %v1974
      %vm1977 = vcmask 588800
      %v1979 = vsel %vm1977, %v1929, 0
      %v1982 = vsel %vm1977, %v1930, 0
      %v1985 = vsel %vm1977, %v1931, 0
      %v1988 = vsel %vm1977, %v1932, 0
      %v1991 = vsel %vm1977, %v1933, 0
      %v1994 = vsel %vm1977, %v1934, 0
      %v1997 = vsel %vm1977, %v1935, 0
      %v2000 = vsel %vm1977, %v1936, 0
      %v2003 = vsel %vm1977, %v1937, 0
      %v2006 = vsel %vm1977, %v1938, 0
      %v2009 = vsel %vm1977, %v1939, 0
      %v2012 = vsel %vm1977, %v1940, 0
      %v2015 = vsel %vm1977, %v1941, 0
      %v2018 = vsel %vm1977, %v1942, 0
      %v2021 = vsel %vm1977, %v1943, 0
      %v2024 = vsel %vm1977, %v1944, 0
      %v2027 = vsel %vm1977, %v1945, 0
      %v2030 = vsel %vm1977, %v1946, 0
      %v2033 = vsel %vm1977, %v1947, 0
      %v2036 = vsel %vm1977, %v1948, 0
      %v2039 = vsel %vm1977, %v1949, 0
      %v2042 = vsel %vm1977, %v1950, 0
      %v2045 = vsel %vm1977, %v1951, 0
      %v2048 = vsel %vm1977, %v1952, 0
      %v2051 = vsel %vm1977, %v1953, 0
      %v2054 = vsel %vm1977, %v1954, 0
      %v2057 = vsel %vm1977, %v1955, 0
      %v2060 = vsel %vm1977, %v1956, 0
      %v2063 = vsel %vm1977, %v1957, 0
      %v2066 = vsel %vm1977, %v1958, 0
      %v2069 = vsel %vm1977, %v1959, 0
      %v2072 = vsel %vm1977, %v1960, 0
      %2074 = vmatprep.subr.mxu0 0.0
      %2075 = vmatpush1.msra.mxu0 0.0
      %2076 = vmatprep.subr.mxu0 0.0
      %2077 = vmatpush1.msra.mxu0 0.0
      %2078 = vmatprep.subr.mxu0 0.0
      %2079 = vmatpush1.msra.mxu0 0.0
      %2080 = vmatprep.subr.mxu0 0.0
      %2081 = vmatpush1.msra.mxu0 0.0
      %2082 = vmatprep.subr.mxu0 0.0
      %2083 = vmatpush1.msra.mxu0 0.0
      %2084 = vmatprep.subr.mxu0 0.0
      %2085 = vmatpush1.msra.mxu0 0.0
      %2086 = vmatprep.subr.mxu0 0.0
      %2087 = vmatpush1.msra.mxu0 0.0
      %2088 = vmatprep.subr.mxu0 0.0
      %2089 = vmatpush1.msra.mxu0 %v1969
      %2090 = vmatprep.subr.mxu0 0.0
      %2091 = vmatpush1.msra.mxu0 %v1968
      %2092 = vmatprep.subr.mxu0 0.0
      %2093 = vmatpush1.msra.mxu0 %v1967
      %2094 = vmatprep.subr.mxu0 0.0
      %2095 = vmatpush1.msra.mxu0 %v1966
      %2096 = vmatprep.subr.mxu0 0.0
      %2097 = vmatpush1.msra.mxu0 %v1965
      %2098 = vmatprep.subr.mxu0 0.0
      %2099 = vmatpush1.msra.mxu0 %v1964
      %2100 = vmatprep.subr.mxu0 0.0
      %2101 = vmatpush1.msra.mxu0 %v1963
      %2102 = vmatprep.subr.mxu0 0.0
      %2103 = vmatpush1.msra.mxu0 %v1962
      %2104 = vmatprep.subr.mxu0 0.0
      %2105 = vmatpush1.msra.mxu0 %v1961
      %2106 = vmatprep.subr.mxu0 0.0
      %2107 = vmatpush2.msra.mxu0 0.0
      %2108 = vmatprep.subr.mxu0 0.0
      %2109 = vmatpush2.msra.mxu0 0.0
      %2110 = vmatprep.subr.mxu0 0.0
      %2111 = vmatpush2.msra.mxu0 0.0
      %2112 = vmatprep.subr.mxu0 0.0
      %2113 = vmatpush2.msra.mxu0 0.0
      %2114 = vmatprep.subr.mxu0 0.0
      %2115 = vmatpush2.msra.mxu0 0.0
      %2116 = vmatprep.subr.mxu0 0.0
      %2117 = vmatpush2.msra.mxu0 0.0
      %2118 = vmatprep.subr.mxu0 0.0
      %2119 = vmatpush2.msra.mxu0 0.0
      %2120 = vmatprep.subr.mxu0 0.0
      %2121 = vmatpush2.msra.mxu0 0.0
      %2122 = vmatprep.subr.mxu0 0.0
      %2123 = vmatpush2.msra.mxu0 0.0
      %2124 = vmatprep.subr.mxu0 0.0
      %2125 = vmatpush2.msra.mxu0 0.0
      %2126 = vmatprep.subr.mxu0 0.0
      %2127 = vmatpush2.msra.mxu0 0.0
      %2128 = vmatprep.subr.mxu0 0.0
      %2129 = vmatpush2.msra.mxu0 0.0
      %2130 = vmatprep.subr.mxu0 0.0
      %2131 = vmatpush2.msra.mxu0 0.0
      %2132 = vmatprep.subr.mxu0 0.0
      %2133 = vmatpush2.msra.mxu0 0.0
      %2134 = vmatprep.subr.mxu0 0.0
      %2135 = vmatpush2.msra.mxu0 0.0
      %2136 = vmatprep.subr.mxu0 0.0
      %2137 = vmatpush2.msra.mxu0 0.0
      %2138 = vmatprep.mubr.f32.mxu0 0.0
      %2139 = vmatmul.mubr.f32.gmra.mxu0 %v1979
      %v2140 = vpop.f32.mrf.mxu0
      %v2141 = vadd.f32 %v1975, %v2140
      %v2142 = vpop.f32.mrf.mxu0
      %2143 = vmatprep.mubr.f32.mxu0 0.0
      %2144 = vmatmul.mubr.f32.gmra.mxu0 %v1982
      %v2145 = vpop.f32.mrf.mxu0
      %v2146 = vadd.f32 %v1975, %v2145
      %v2147 = vpop.f32.mrf.mxu0
      %2148 = vmatprep.mubr.f32.mxu0 0.0
      %2149 = vmatmul.mubr.f32.gmra.mxu0 %v1985
      %v2150 = vpop.f32.mrf.mxu0
      %v2151 = vadd.f32 %v1975, %v2150
      %v2152 = vpop.f32.mrf.mxu0
      %2153 = vmatprep.mubr.f32.mxu0 0.0
      %2154 = vmatmul.mubr.f32.gmra.mxu0 %v1988
      %v2155 = vpop.f32.mrf.mxu0
      %v2156 = vadd.f32 %v1975, %v2155
      %v2157 = vpop.f32.mrf.mxu0
      %2158 = vmatprep.mubr.f32.mxu0 0.0
      %2159 = vmatmul.mubr.f32.gmra.mxu0 %v1991
      %v2160 = vpop.f32.mrf.mxu0
      %v2161 = vadd.f32 %v1975, %v2160
      %v2162 = vpop.f32.mrf.mxu0
      %2163 = vmatprep.mubr.f32.mxu0 0.0
      %2164 = vmatmul.mubr.f32.gmra.mxu0 %v1994
      %v2165 = vpop.f32.mrf.mxu0
      %v2166 = vadd.f32 %v1975, %v2165
      %v2167 = vpop.f32.mrf.mxu0
      %2168 = vmatprep.mubr.f32.mxu0 0.0
      %2169 = vmatmul.mubr.f32.gmra.mxu0 %v1997
      %v2170 = vpop.f32.mrf.mxu0
      %v2171 = vadd.f32 %v1975, %v2170
      %v2172 = vpop.f32.mrf.mxu0
      %2173 = vmatprep.mubr.f32.mxu0 0.0
      %2174 = vmatmul.mubr.f32.gmra.mxu0 %v2000
      %v2175 = vpop.f32.mrf.mxu0
      %v2176 = vadd.f32 %v1975, %v2175
      %v2177 = vpop.f32.mrf.mxu0
      %2178 = vmatprep.mubr.f32.mxu0 0.0
      %2179 = vmatmul.mubr.f32.gmra.mxu0 %v2003
      %v2180 = vpop.f32.mrf.mxu0
      %v2181 = vadd.f32 %v1975, %v2180
      %v2182 = vpop.f32.mrf.mxu0
      %2183 = vmatprep.mubr.f32.mxu0 0.0
      %2184 = vmatmul.mubr.f32.gmra.mxu0 %v2006
      %v2185 = vpop.f32.mrf.mxu0
      %v2186 = vadd.f32 %v1975, %v2185
      %v2187 = vpop.f32.mrf.mxu0
      %2188 = vmatprep.mubr.f32.mxu0 0.0
      %2189 = vmatmul.mubr.f32.gmra.mxu0 %v2009
      %v2190 = vpop.f32.mrf.mxu0
      %v2191 = vadd.f32 %v1975, %v2190
      %v2192 = vpop.f32.mrf.mxu0
      %2193 = vmatprep.mubr.f32.mxu0 0.0
      %2194 = vmatmul.mubr.f32.gmra.mxu0 %v2012
      %v2195 = vpop.f32.mrf.mxu0
      %v2196 = vadd.f32 %v1975, %v2195
      %v2197 = vpop.f32.mrf.mxu0
      %2198 = vmatprep.mubr.f32.mxu0 0.0
      %2199 = vmatmul.mubr.f32.gmra.mxu0 %v2015
      %v2200 = vpop.f32.mrf.mxu0
      %v2201 = vadd.f32 %v1975, %v2200
      %v2202 = vpop.f32.mrf.mxu0
      %2203 = vmatprep.mubr.f32.mxu0 0.0
      %2204 = vmatmul.mubr.f32.gmra.mxu0 %v2018
      %v2205 = vpop.f32.mrf.mxu0
      %v2206 = vadd.f32 %v1975, %v2205
      %v2207 = vpop.f32.mrf.mxu0
      %2208 = vmatprep.mubr.f32.mxu0 0.0
      %2209 = vmatmul.mubr.f32.gmra.mxu0 %v2021
      %v2210 = vpop.f32.mrf.mxu0
      %v2211 = vadd.f32 %v1975, %v2210
      %v2212 = vpop.f32.mrf.mxu0
      %2213 = vmatprep.mubr.f32.mxu0 0.0
      %2214 = vmatmul.mubr.f32.gmra.mxu0 %v2024
      %v2215 = vpop.f32.mrf.mxu0
      %v2216 = vadd.f32 %v1975, %v2215
      %v2217 = vpop.f32.mrf.mxu0
      %2218 = vmatprep.mubr.f32.mxu0 0.0
      %2219 = vmatmul.mubr.f32.gmra.mxu0 %v2027
      %v2220 = vpop.f32.mrf.mxu0
      %v2221 = vadd.f32 %v1975, %v2220
      %v2222 = vpop.f32.mrf.mxu0
      %2223 = vmatprep.mubr.f32.mxu0 0.0
      %2224 = vmatmul.mubr.f32.gmra.mxu0 %v2030
      %v2225 = vpop.f32.mrf.mxu0
      %v2226 = vadd.f32 %v1975, %v2225
      %v2227 = vpop.f32.mrf.mxu0
      %2228 = vmatprep.mubr.f32.mxu0 0.0
      %2229 = vmatmul.mubr.f32.gmra.mxu0 %v2033
      %v2230 = vpop.f32.mrf.mxu0
      %v2231 = vadd.f32 %v1975, %v2230
      %v2232 = vpop.f32.mrf.mxu0
      %2233 = vmatprep.mubr.f32.mxu0 0.0
      %2234 = vmatmul.mubr.f32.gmra.mxu0 %v2036
      %v2235 = vpop.f32.mrf.mxu0
      %v2236 = vadd.f32 %v1975, %v2235
      %v2237 = vpop.f32.mrf.mxu0
      %2238 = vmatprep.mubr.f32.mxu0 0.0
      %2239 = vmatmul.mubr.f32.gmra.mxu0 %v2039
      %v2240 = vpop.f32.mrf.mxu0
      %v2241 = vadd.f32 %v1975, %v2240
      %v2242 = vpop.f32.mrf.mxu0
      %2243 = vmatprep.mubr.f32.mxu0 0.0
      %2244 = vmatmul.mubr.f32.gmra.mxu0 %v2042
      %v2245 = vpop.f32.mrf.mxu0
      %v2246 = vadd.f32 %v1975, %v2245
      %v2247 = vpop.f32.mrf.mxu0
      %2248 = vmatprep.mubr.f32.mxu0 0.0
      %2249 = vmatmul.mubr.f32.gmra.mxu0 %v2045
      %v2250 = vpop.f32.mrf.mxu0
      %v2251 = vadd.f32 %v1975, %v2250
      %v2252 = vpop.f32.mrf.mxu0
      %2253 = vmatprep.mubr.f32.mxu0 0.0
      %2254 = vmatmul.mubr.f32.gmra.mxu0 %v2048
      %v2255 = vpop.f32.mrf.mxu0
      %v2256 = vadd.f32 %v1975, %v2255
      %v2257 = vpop.f32.mrf.mxu0
      %2258 = vmatprep.mubr.f32.mxu0 0.0
      %2259 = vmatmul.mubr.f32.gmra.mxu0 %v2051
      %v2260 = vpop.f32.mrf.mxu0
      %v2261 = vadd.f32 %v1975, %v2260
      %v2262 = vpop.f32.mrf.mxu0
      %2263 = vmatprep.mubr.f32.mxu0 0.0
      %2264 = vmatmul.mubr.f32.gmra.mxu0 %v2054
      %v2265 = vpop.f32.mrf.mxu0
      %v2266 = vadd.f32 %v1975, %v2265
      %v2267 = vpop.f32.mrf.mxu0
      %2268 = vmatprep.mubr.f32.mxu0 0.0
      %2269 = vmatmul.mubr.f32.gmra.mxu0 %v2057
      %v2270 = vpop.f32.mrf.mxu0
      %v2271 = vadd.f32 %v1975, %v2270
      %v2272 = vpop.f32.mrf.mxu0
      %2273 = vmatprep.mubr.f32.mxu0 0.0
      %2274 = vmatmul.mubr.f32.gmra.mxu0 %v2060
      %v2275 = vpop.f32.mrf.mxu0
      %v2276 = vadd.f32 %v1975, %v2275
      %v2277 = vpop.f32.mrf.mxu0
      %2278 = vmatprep.mubr.f32.mxu0 0.0
      %2279 = vmatmul.mubr.f32.gmra.mxu0 %v2063
      %v2280 = vpop.f32.mrf.mxu0
      %v2281 = vadd.f32 %v1975, %v2280
      %v2282 = vpop.f32.mrf.mxu0
      %2283 = vmatprep.mubr.f32.mxu0 0.0
      %2284 = vmatmul.mubr.f32.gmra.mxu0 %v2066
      %v2285 = vpop.f32.mrf.mxu0
      %v2286 = vadd.f32 %v1975, %v2285
      %v2287 = vpop.f32.mrf.mxu0
      %2288 = vmatprep.mubr.f32.mxu0 0.0
      %2289 = vmatmul.mubr.f32.gmra.mxu0 %v2069
      %v2290 = vpop.f32.mrf.mxu0
      %v2291 = vadd.f32 %v1975, %v2290
      %v2292 = vpop.f32.mrf.mxu0
      %2293 = vmatprep.mubr.f32.mxu0 0.0
      %2294 = vmatmul.mubr.f32.gmra.mxu0 %v2072
      %v2295 = vpop.f32.mrf.mxu0
      %v2296 = vadd.f32 %v1975, %v2295
      %v2297 = vpop.f32.mrf.mxu0
      %2298 = vdwg.mxu0
      %v2299 = vmax.f32 %v2141, 0.0
      %v2300 = vmax.f32 %v2146, 0.0
      %v2301 = vmax.f32 %v2151, 0.0
      %v2302 = vmax.f32 %v2156, 0.0
      %v2303 = vmax.f32 %v2161, 0.0
      %v2304 = vmax.f32 %v2166, 0.0
      %v2305 = vmax.f32 %v2171, 0.0
      %v2306 = vmax.f32 %v2176, 0.0
      %v2307 = vmax.f32 %v2181, 0.0
      %v2308 = vmax.f32 %v2186, 0.0
      %v2309 = vmax.f32 %v2191, 0.0
      %v2310 = vmax.f32 %v2196, 0.0
      %v2311 = vmax.f32 %v2201, 0.0
      %v2312 = vmax.f32 %v2206, 0.0
      %v2313 = vmax.f32 %v2211, 0.0
      %v2314 = vmax.f32 %v2216, 0.0
      %v2315 = vmax.f32 %v2221, 0.0
      %v2316 = vmax.f32 %v2226, 0.0
      %v2317 = vmax.f32 %v2231, 0.0
      %v2318 = vmax.f32 %v2236, 0.0
      %v2319 = vmax.f32 %v2241, 0.0
      %v2320 = vmax.f32 %v2246, 0.0
      %v2321 = vmax.f32 %v2251, 0.0
      %v2322 = vmax.f32 %v2256, 0.0
      %v2323 = vmax.f32 %v2261, 0.0
      %v2324 = vmax.f32 %v2266, 0.0
      %v2325 = vmax.f32 %v2271, 0.0
      %v2326 = vmax.f32 %v2276, 0.0
      %v2327 = vmax.f32 %v2281, 0.0
      %v2328 = vmax.f32 %v2286, 0.0
      %v2329 = vmax.f32 %v2291, 0.0
      %v2330 = vmax.f32 %v2296, 0.0
      %2331 = vst.msk [vmem:[#allocation3] sm:$0xff] %vm574, 0.0
      %2332 = vst.msk [vmem:[#allocation3 + $0x8] sm:$0xff] %vm574, 0.0
      %vm2333 = vcmask 25600
      %2334 = vst.msk [vmem:[#allocation3 + $0x10] sm:$0x3] %vm2333, 0.0
      %2335 = vst.msk [vmem:[#allocation3 + $0x18] sm:$0xff] %vm574, 0.0
      %2336 = vst.msk [vmem:[#allocation3 + $0x20] sm:$0xff] %vm574, 0.0
      %2337 = vst.msk [vmem:[#allocation3 + $0x28] sm:$0x3] %vm2333, 0.0
      %2338 = vst.msk [vmem:[#allocation3 + $0x30] sm:$0xff] %vm574, 0.0
      %2339 = vst.msk [vmem:[#allocation3 + $0x38] sm:$0xff] %vm574, 0.0
      %2340 = vst.msk [vmem:[#allocation3 + $0x40] sm:$0x3] %vm2333, 0.0
      %2341 = vst.msk [vmem:[#allocation3 + $0x48] sm:$0xff] %vm574, 0.0
      %2342 = vst.msk [vmem:[#allocation3 + $0x50] sm:$0xff] %vm574, 0.0
      %2343 = vst.msk [vmem:[#allocation3 + $0x58] sm:$0x3] %vm2333, 0.0
      %2344 = vst.msk [vmem:[#allocation3 + $0x60] sm:$0xff] %vm574, 0.0
      %2345 = vst.msk [vmem:[#allocation3 + $0x68] sm:$0xff] %vm574, 0.0
      %2346 = vst.msk [vmem:[#allocation3 + $0x70] sm:$0x3] %vm2333, 0.0
      %2347 = vst.msk [vmem:[#allocation3 + $0x78] sm:$0xff] %vm574, 0.0
      %2348 = vst.msk [vmem:[#allocation3 + $0x80] sm:$0xff] %vm574, 0.0
      %2349 = vst.msk [vmem:[#allocation3 + $0x88] sm:$0x3] %vm2333, 0.0
      %2350 = vst.msk [vmem:[#allocation3 + $0x90] sm:$0xff] %vm574, 0.0
      %2351 = vst.msk [vmem:[#allocation3 + $0x98] sm:$0xff] %vm574, 0.0
      %2352 = vst.msk [vmem:[#allocation3 + $0xa0] sm:$0x3] %vm2333, 0.0
      %2353 = vst.msk [vmem:[#allocation3 + $0xa8] sm:$0xff] %vm574, 0.0
      %2354 = vst.msk [vmem:[#allocation3 + $0xb0] sm:$0xff] %vm574, 0.0
      %2355 = vst.msk [vmem:[#allocation3 + $0xb8] sm:$0x3] %vm2333, 0.0
      %2356 = vst.msk [vmem:[#allocation3 + $0xc0] sm:$0xff] %vm574, 0.0
      %2357 = vst.msk [vmem:[#allocation3 + $0xc8] sm:$0xff] %vm574, 0.0
      %2358 = vst.msk [vmem:[#allocation3 + $0xd0] sm:$0x3] %vm2333, 0.0
      %2359 = vst.msk [vmem:[#allocation3 + $0xd8] sm:$0xff] %vm574, 0.0
      %2360 = vst.msk [vmem:[#allocation3 + $0xe0] sm:$0xff] %vm574, 0.0
      %2361 = vst.msk [vmem:[#allocation3 + $0xe8] sm:$0x3] %vm2333, 0.0
      %2362 = vst.msk [vmem:[#allocation3 + $0xf0] sm:$0xff] %vm574, 0.0
      %2363 = vst.msk [vmem:[#allocation3 + $0xf8] sm:$0xff] %vm574, 0.0
      %2364 = vst.msk [vmem:[#allocation3 + $0x100] sm:$0x3] %vm2333, 0.0
      %2365 = vst.msk [vmem:[#allocation3 + $0x108] sm:$0xff] %vm574, 0.0
      %2366 = vst.msk [vmem:[#allocation3 + $0x110] sm:$0xff] %vm574, 0.0
      %2367 = vst.msk [vmem:[#allocation3 + $0x118] sm:$0x3] %vm2333, 0.0
      %2368 = vst.msk [vmem:[#allocation3 + $0x120] sm:$0xff] %vm574, 0.0
      %2369 = vst.msk [vmem:[#allocation3 + $0x128] sm:$0xff] %vm574, 0.0
      %2370 = vst.msk [vmem:[#allocation3 + $0x130] sm:$0x3] %vm2333, 0.0
      %2371 = vst.msk [vmem:[#allocation3 + $0x138] sm:$0xff] %vm574, 0.0
      %2372 = vst.msk [vmem:[#allocation3 + $0x140] sm:$0xff] %vm574, 0.0
      %2373 = vst.msk [vmem:[#allocation3 + $0x148] sm:$0x3] %vm2333, 0.0
      %2374 = vst.msk [vmem:[#allocation3 + $0x150] sm:$0xff] %vm574, 0.0
      %2375 = vst.msk [vmem:[#allocation3 + $0x158] sm:$0xff] %vm574, 0.0
      %2376 = vst.msk [vmem:[#allocation3 + $0x160] sm:$0x3] %vm2333, 0.0
      %2377 = vst.msk [vmem:[#allocation3 + $0x168] sm:$0xff] %vm574, 0.0
      %2378 = vst.msk [vmem:[#allocation3 + $0x170] sm:$0xff] %vm574, 0.0
      %2379 = vst.msk [vmem:[#allocation3 + $0x178] sm:$0x3] %vm2333, 0.0
      %2380 = vst.msk [vmem:[#allocation3 + $0x180] sm:$0xff] %vm574, 0.0
      %2381 = vst.msk [vmem:[#allocation3 + $0x188] sm:$0xff] %vm574, 0.0
      %2382 = vst.msk [vmem:[#allocation3 + $0x190] sm:$0x3] %vm2333, 0.0
      %2383 = vst.msk [vmem:[#allocation3 + $0x198] sm:$0xff] %vm574, 0.0
      %2384 = vst.msk [vmem:[#allocation3 + $0x1a0] sm:$0xff] %vm574, 0.0
      %2385 = vst.msk [vmem:[#allocation3 + $0x1a8] sm:$0x3] %vm2333, 0.0
      %s2386 = scalar_lea.vmem [#allocation3], 24
      %2387 = vst.msk [vmem:[%s2386 + $0x1] sm:$0xff] %vm574, %v2299
      %2388 = vst.msk [vmem:[%s2386 + $0x9] sm:$0xff] %vm574, %v2300
      %2389 = vst.msk [vmem:[%s2386 + $0x19] sm:$0xff] %vm574, %v2301
      %2390 = vst.msk [vmem:[%s2386 + $0x21] sm:$0xff] %vm574, %v2302
      %2391 = vst.msk [vmem:[%s2386 + $0x31] sm:$0xff] %vm574, %v2303
      %2392 = vst.msk [vmem:[%s2386 + $0x39] sm:$0xff] %vm574, %v2304
      %2393 = vst.msk [vmem:[%s2386 + $0x49] sm:$0xff] %vm574, %v2305
      %2394 = vst.msk [vmem:[%s2386 + $0x51] sm:$0xff] %vm574, %v2306
      %2395 = vst.msk [vmem:[%s2386 + $0x61] sm:$0xff] %vm574, %v2307
      %2396 = vst.msk [vmem:[%s2386 + $0x69] sm:$0xff] %vm574, %v2308
      %2397 = vst.msk [vmem:[%s2386 + $0x79] sm:$0xff] %vm574, %v2309
      %2398 = vst.msk [vmem:[%s2386 + $0x81] sm:$0xff] %vm574, %v2310
      %2399 = vst.msk [vmem:[%s2386 + $0x91] sm:$0xff] %vm574, %v2311
      %2400 = vst.msk [vmem:[%s2386 + $0x99] sm:$0xff] %vm574, %v2312
      %2401 = vst.msk [vmem:[%s2386 + $0xa9] sm:$0xff] %vm574, %v2313
      %2402 = vst.msk [vmem:[%s2386 + $0xb1] sm:$0xff] %vm574, %v2314
      %2403 = vst.msk [vmem:[%s2386 + $0xc1] sm:$0xff] %vm574, %v2315
      %2404 = vst.msk [vmem:[%s2386 + $0xc9] sm:$0xff] %vm574, %v2316
      %2405 = vst.msk [vmem:[%s2386 + $0xd9] sm:$0xff] %vm574, %v2317
      %2406 = vst.msk [vmem:[%s2386 + $0xe1] sm:$0xff] %vm574, %v2318
      %2407 = vst.msk [vmem:[%s2386 + $0xf1] sm:$0xff] %vm574, %v2319
      %2408 = vst.msk [vmem:[%s2386 + $0xf9] sm:$0xff] %vm574, %v2320
      %2409 = vst.msk [vmem:[%s2386 + $0x109] sm:$0xff] %vm574, %v2321
      %2410 = vst.msk [vmem:[%s2386 + $0x111] sm:$0xff] %vm574, %v2322
      %2411 = vst.msk [vmem:[%s2386 + $0x121] sm:$0xff] %vm574, %v2323
      %2412 = vst.msk [vmem:[%s2386 + $0x129] sm:$0xff] %vm574, %v2324
      %2413 = vst.msk [vmem:[%s2386 + $0x139] sm:$0xff] %vm574, %v2325
      %2414 = vst.msk [vmem:[%s2386 + $0x141] sm:$0xff] %vm574, %v2326
      %2415 = vst.msk [vmem:[%s2386 + $0x151] sm:$0xff] %vm574, %v2327
      %2416 = vst.msk [vmem:[%s2386 + $0x159] sm:$0xff] %vm574, %v2328
      %2417 = vst.msk [vmem:[%s2386 + $0x169] sm:$0xff] %vm574, %v2329
      %2418 = vst.msk [vmem:[%s2386 + $0x171] sm:$0xff] %vm574, %v2330
      %v2419 = vld [vmem:[#allocation3] sm:$0xff]
      %v2420 = vld [vmem:[#allocation3 + $0x8] sm:$0xff]
      %v2421 = vld [vmem:[#allocation3 + $0x10] sm:$0x3]
      %v2422 = vld [vmem:[#allocation3 + $0x18] sm:$0xff]
      %v2423 = vld [vmem:[#allocation3 + $0x20] sm:$0xff]
      %v2424 = vld [vmem:[#allocation3 + $0x28] sm:$0x3]
      %v2425 = vld [vmem:[#allocation3 + $0x30] sm:$0xff]
      %v2426 = vld [vmem:[#allocation3 + $0x38] sm:$0xff]
      %v2427 = vld [vmem:[#allocation3 + $0x40] sm:$0x3]
      %v2428 = vld [vmem:[#allocation3 + $0x48] sm:$0xff]
      %v2429 = vld [vmem:[#allocation3 + $0x50] sm:$0xff]
      %v2430 = vld [vmem:[#allocation3 + $0x58] sm:$0x3]
      %v2431 = vld [vmem:[#allocation3 + $0x60] sm:$0xff]
      %v2432 = vld [vmem:[#allocation3 + $0x68] sm:$0xff]
      %v2433 = vld [vmem:[#allocation3 + $0x70] sm:$0x3]
      %v2434 = vld [vmem:[#allocation3 + $0x78] sm:$0xff]
      %v2435 = vld [vmem:[#allocation3 + $0x80] sm:$0xff]
      %v2436 = vld [vmem:[#allocation3 + $0x88] sm:$0x3]
      %v2437 = vld [vmem:[#allocation3 + $0x90] sm:$0xff]
      %v2438 = vld [vmem:[#allocation3 + $0x98] sm:$0xff]
      %v2439 = vld [vmem:[#allocation3 + $0xa0] sm:$0x3]
      %v2440 = vld [vmem:[#allocation3 + $0xa8] sm:$0xff]
      %v2441 = vld [vmem:[#allocation3 + $0xb0] sm:$0xff]
      %v2442 = vld [vmem:[#allocation3 + $0xb8] sm:$0x3]
      %v2443 = vld [vmem:[#allocation3 + $0xc0] sm:$0xff]
      %v2444 = vld [vmem:[#allocation3 + $0xc8] sm:$0xff]
      %v2445 = vld [vmem:[#allocation3 + $0xd0] sm:$0x3]
      %v2446 = vld [vmem:[#allocation3 + $0xd8] sm:$0xff]
      %v2447 = vld [vmem:[#allocation3 + $0xe0] sm:$0xff]
      %v2448 = vld [vmem:[#allocation3 + $0xe8] sm:$0x3]
      %v2449 = vld [vmem:[#allocation3 + $0xf0] sm:$0xff]
      %v2450 = vld [vmem:[#allocation3 + $0xf8] sm:$0xff]
      %v2451 = vld [vmem:[#allocation3 + $0x100] sm:$0x3]
      %v2452 = vld [vmem:[#allocation3 + $0x108] sm:$0xff]
      %v2453 = vld [vmem:[#allocation3 + $0x110] sm:$0xff]
      %v2454 = vld [vmem:[#allocation3 + $0x118] sm:$0x3]
      %v2455 = vld [vmem:[#allocation3 + $0x120] sm:$0xff]
      %v2456 = vld [vmem:[#allocation3 + $0x128] sm:$0xff]
      %v2457 = vld [vmem:[#allocation3 + $0x130] sm:$0x3]
      %v2458 = vld [vmem:[#allocation3 + $0x138] sm:$0xff]
      %v2459 = vld [vmem:[#allocation3 + $0x140] sm:$0xff]
      %v2460 = vld [vmem:[#allocation3 + $0x148] sm:$0x3]
      %v2461 = vld [vmem:[#allocation3 + $0x150] sm:$0xff]
      %v2462 = vld [vmem:[#allocation3 + $0x158] sm:$0xff]
      %v2463 = vld [vmem:[#allocation3 + $0x160] sm:$0x3]
      %v2464 = vld [vmem:[#allocation3 + $0x168] sm:$0xff]
      %v2465 = vld [vmem:[#allocation3 + $0x170] sm:$0xff]
      %v2466 = vld [vmem:[#allocation3 + $0x178] sm:$0x3]
      %v2467 = vld [vmem:[#allocation3 + $0x180] sm:$0xff]
      %v2468 = vld [vmem:[#allocation3 + $0x188] sm:$0xff]
      %v2469 = vld [vmem:[#allocation3 + $0x190] sm:$0x3]
      %v2470 = vld [vmem:[#allocation3 + $0x198] sm:$0xff]
      %v2471 = vld [vmem:[#allocation3 + $0x1a0] sm:$0xff]
      %v2472 = vld [vmem:[#allocation3 + $0x1a8] sm:$0x3]
      %v2521 = vrot.slane %v2419, 1
      %v2522 = vrot.slane %v2420, 1
      %v2523 = vsel %vm742, %v2521, %v2522
      %v2524 = vrot.slane %v2421, 1
      %v2525 = vsel %vm742, %v2522, %v2524
      %v2526 = vrot.slane %v2422, 1
      %v2527 = vrot.slane %v2423, 1
      %v2528 = vsel %vm742, %v2526, %v2527
      %v2529 = vrot.slane %v2424, 1
      %v2530 = vsel %vm742, %v2527, %v2529
      %v2531 = vrot.slane %v2425, 1
      %v2532 = vrot.slane %v2426, 1
      %v2533 = vsel %vm742, %v2531, %v2532
      %v2534 = vrot.slane %v2427, 1
      %v2535 = vsel %vm742, %v2532, %v2534
      %v2536 = vrot.slane %v2428, 1
      %v2537 = vrot.slane %v2429, 1
      %v2538 = vsel %vm742, %v2536, %v2537
      %v2539 = vrot.slane %v2430, 1
      %v2540 = vsel %vm742, %v2537, %v2539
      %v2541 = vrot.slane %v2431, 1
      %v2542 = vrot.slane %v2432, 1
      %v2543 = vsel %vm742, %v2541, %v2542
      %v2544 = vrot.slane %v2433, 1
      %v2545 = vsel %vm742, %v2542, %v2544
      %v2546 = vrot.slane %v2434, 1
      %v2547 = vrot.slane %v2435, 1
      %v2548 = vsel %vm742, %v2546, %v2547
      %v2549 = vrot.slane %v2436, 1
      %v2550 = vsel %vm742, %v2547, %v2549
      %v2551 = vrot.slane %v2437, 1
      %v2552 = vrot.slane %v2438, 1
      %v2553 = vsel %vm742, %v2551, %v2552
      %v2554 = vrot.slane %v2439, 1
      %v2555 = vsel %vm742, %v2552, %v2554
      %v2556 = vrot.slane %v2440, 1
      %v2557 = vrot.slane %v2441, 1
      %v2558 = vsel %vm742, %v2556, %v2557
      %v2559 = vrot.slane %v2442, 1
      %v2560 = vsel %vm742, %v2557, %v2559
      %v2561 = vrot.slane %v2443, 1
      %v2562 = vrot.slane %v2444, 1
      %v2563 = vsel %vm742, %v2561, %v2562
      %v2564 = vrot.slane %v2445, 1
      %v2565 = vsel %vm742, %v2562, %v2564
      %v2566 = vrot.slane %v2446, 1
      %v2567 = vrot.slane %v2447, 1
      %v2568 = vsel %vm742, %v2566, %v2567
      %v2569 = vrot.slane %v2448, 1
      %v2570 = vsel %vm742, %v2567, %v2569
      %v2571 = vrot.slane %v2449, 1
      %v2572 = vrot.slane %v2450, 1
      %v2573 = vsel %vm742, %v2571, %v2572
      %v2574 = vrot.slane %v2451, 1
      %v2575 = vsel %vm742, %v2572, %v2574
      %v2576 = vrot.slane %v2452, 1
      %v2577 = vrot.slane %v2453, 1
      %v2578 = vsel %vm742, %v2576, %v2577
      %v2579 = vrot.slane %v2454, 1
      %v2580 = vsel %vm742, %v2577, %v2579
      %v2581 = vrot.slane %v2455, 1
      %v2582 = vrot.slane %v2456, 1
      %v2583 = vsel %vm742, %v2581, %v2582
      %v2584 = vrot.slane %v2457, 1
      %v2585 = vsel %vm742, %v2582, %v2584
      %v2586 = vrot.slane %v2458, 1
      %v2587 = vrot.slane %v2459, 1
      %v2588 = vsel %vm742, %v2586, %v2587
      %v2589 = vrot.slane %v2460, 1
      %v2590 = vsel %vm742, %v2587, %v2589
      %v2591 = vrot.slane %v2461, 1
      %v2592 = vrot.slane %v2462, 1
      %v2593 = vsel %vm742, %v2591, %v2592
      %v2594 = vrot.slane %v2463, 1
      %v2595 = vsel %vm742, %v2592, %v2594
      %v2596 = vrot.slane %v2464, 1
      %v2597 = vrot.slane %v2465, 1
      %v2598 = vsel %vm742, %v2596, %v2597
      %v2599 = vrot.slane %v2466, 1
      %v2600 = vsel %vm742, %v2597, %v2599
      %v2601 = vrot.slane %v2419, 2
      %v2602 = vrot.slane %v2420, 2
      %v2603 = vsel %vm823, %v2601, %v2602
      %v2604 = vrot.slane %v2421, 2
      %v2605 = vsel %vm823, %v2602, %v2604
      %v2606 = vrot.slane %v2422, 2
      %v2607 = vrot.slane %v2423, 2
      %v2608 = vsel %vm823, %v2606, %v2607
      %v2609 = vrot.slane %v2424, 2
      %v2610 = vsel %vm823, %v2607, %v2609
      %v2611 = vrot.slane %v2425, 2
      %v2612 = vrot.slane %v2426, 2
      %v2613 = vsel %vm823, %v2611, %v2612
      %v2614 = vrot.slane %v2427, 2
      %v2615 = vsel %vm823, %v2612, %v2614
      %v2616 = vrot.slane %v2428, 2
      %v2617 = vrot.slane %v2429, 2
      %v2618 = vsel %vm823, %v2616, %v2617
      %v2619 = vrot.slane %v2430, 2
      %v2620 = vsel %vm823, %v2617, %v2619
      %v2621 = vrot.slane %v2431, 2
      %v2622 = vrot.slane %v2432, 2
      %v2623 = vsel %vm823, %v2621, %v2622
      %v2624 = vrot.slane %v2433, 2
      %v2625 = vsel %vm823, %v2622, %v2624
      %v2626 = vrot.slane %v2434, 2
      %v2627 = vrot.slane %v2435, 2
      %v2628 = vsel %vm823, %v2626, %v2627
      %v2629 = vrot.slane %v2436, 2
      %v2630 = vsel %vm823, %v2627, %v2629
      %v2631 = vrot.slane %v2437, 2
      %v2632 = vrot.slane %v2438, 2
      %v2633 = vsel %vm823, %v2631, %v2632
      %v2634 = vrot.slane %v2439, 2
      %v2635 = vsel %vm823, %v2632, %v2634
      %v2636 = vrot.slane %v2440, 2
      %v2637 = vrot.slane %v2441, 2
      %v2638 = vsel %vm823, %v2636, %v2637
      %v2639 = vrot.slane %v2442, 2
      %v2640 = vsel %vm823, %v2637, %v2639
      %v2641 = vrot.slane %v2443, 2
      %v2642 = vrot.slane %v2444, 2
      %v2643 = vsel %vm823, %v2641, %v2642
      %v2644 = vrot.slane %v2445, 2
      %v2645 = vsel %vm823, %v2642, %v2644
      %v2646 = vrot.slane %v2446, 2
      %v2647 = vrot.slane %v2447, 2
      %v2648 = vsel %vm823, %v2646, %v2647
      %v2649 = vrot.slane %v2448, 2
      %v2650 = vsel %vm823, %v2647, %v2649
      %v2651 = vrot.slane %v2449, 2
      %v2652 = vrot.slane %v2450, 2
      %v2653 = vsel %vm823, %v2651, %v2652
      %v2654 = vrot.slane %v2451, 2
      %v2655 = vsel %vm823, %v2652, %v2654
      %v2656 = vrot.slane %v2452, 2
      %v2657 = vrot.slane %v2453, 2
      %v2658 = vsel %vm823, %v2656, %v2657
      %v2659 = vrot.slane %v2454, 2
      %v2660 = vsel %vm823, %v2657, %v2659
      %v2661 = vrot.slane %v2455, 2
      %v2662 = vrot.slane %v2456, 2
      %v2663 = vsel %vm823, %v2661, %v2662
      %v2664 = vrot.slane %v2457, 2
      %v2665 = vsel %vm823, %v2662, %v2664
      %v2666 = vrot.slane %v2458, 2
      %v2667 = vrot.slane %v2459, 2
      %v2668 = vsel %vm823, %v2666, %v2667
      %v2669 = vrot.slane %v2460, 2
      %v2670 = vsel %vm823, %v2667, %v2669
      %v2671 = vrot.slane %v2461, 2
      %v2672 = vrot.slane %v2462, 2
      %v2673 = vsel %vm823, %v2671, %v2672
      %v2674 = vrot.slane %v2463, 2
      %v2675 = vsel %vm823, %v2672, %v2674
      %v2676 = vrot.slane %v2464, 2
      %v2677 = vrot.slane %v2465, 2
      %v2678 = vsel %vm823, %v2676, %v2677
      %v2679 = vrot.slane %v2466, 2
      %v2680 = vsel %vm823, %v2677, %v2679
      %v2684 = vrot.slane %v2467, 1
      %v2685 = vrot.slane %v2468, 1
      %v2686 = vsel %vm742, %v2684, %v2685
      %v2687 = vrot.slane %v2469, 1
      %v2688 = vsel %vm742, %v2685, %v2687
      %v2689 = vrot.slane %v2467, 2
      %v2690 = vrot.slane %v2468, 2
      %v2691 = vsel %vm823, %v2689, %v2690
      %v2692 = vrot.slane %v2469, 2
      %v2693 = vsel %vm823, %v2690, %v2692
      %v2697 = vrot.slane %v2470, 1
      %v2698 = vrot.slane %v2471, 1
      %v2699 = vsel %vm742, %v2697, %v2698
      %v2700 = vrot.slane %v2472, 1
      %v2701 = vsel %vm742, %v2698, %v2700
      %v2702 = vrot.slane %v2470, 2
      %v2703 = vrot.slane %v2471, 2
      %v2704 = vsel %vm823, %v2702, %v2703
      %v2705 = vrot.slane %v2472, 2
      %v2706 = vsel %vm823, %v2703, %v2705
      %2707 = vrot.lane.b32.xlu0 %v2523, 4
      %v2708 = vpop.permute.xlu0 %2707
      %2709 = vrot.lane.b32.xlu0 %v2525, 4
      %v2710 = vpop.permute.xlu0 %2709
      %2711 = vrot.lane.b32.xlu0 %v2528, 4
      %v2712 = vpop.permute.xlu0 %2711
      %2713 = vrot.lane.b32.xlu0 %v2530, 4
      %v2714 = vpop.permute.xlu0 %2713
      %2715 = vrot.lane.b32.xlu0 %v2533, 4
      %v2716 = vpop.permute.xlu0 %2715
      %2717 = vrot.lane.b32.xlu0 %v2535, 4
      %v2718 = vpop.permute.xlu0 %2717
      %2719 = vrot.lane.b32.xlu0 %v2538, 4
      %v2720 = vpop.permute.xlu0 %2719
      %2721 = vrot.lane.b32.xlu0 %v2540, 4
      %v2722 = vpop.permute.xlu0 %2721
      %2723 = vrot.lane.b32.xlu0 %v2543, 4
      %v2724 = vpop.permute.xlu0 %2723
      %2725 = vrot.lane.b32.xlu0 %v2545, 4
      %v2726 = vpop.permute.xlu0 %2725
      %2727 = vrot.lane.b32.xlu0 %v2548, 4
      %v2728 = vpop.permute.xlu0 %2727
      %2729 = vrot.lane.b32.xlu0 %v2550, 4
      %v2730 = vpop.permute.xlu0 %2729
      %2731 = vrot.lane.b32.xlu0 %v2553, 4
      %v2732 = vpop.permute.xlu0 %2731
      %2733 = vrot.lane.b32.xlu0 %v2555, 4
      %v2734 = vpop.permute.xlu0 %2733
      %2735 = vrot.lane.b32.xlu0 %v2558, 4
      %v2736 = vpop.permute.xlu0 %2735
      %2737 = vrot.lane.b32.xlu0 %v2560, 4
      %v2738 = vpop.permute.xlu0 %2737
      %2739 = vrot.lane.b32.xlu0 %v2563, 4
      %v2740 = vpop.permute.xlu0 %2739
      %2741 = vrot.lane.b32.xlu0 %v2565, 4
      %v2742 = vpop.permute.xlu0 %2741
      %2743 = vrot.lane.b32.xlu0 %v2568, 4
      %v2744 = vpop.permute.xlu0 %2743
      %2745 = vrot.lane.b32.xlu0 %v2570, 4
      %v2746 = vpop.permute.xlu0 %2745
      %2747 = vrot.lane.b32.xlu0 %v2573, 4
      %v2748 = vpop.permute.xlu0 %2747
      %2749 = vrot.lane.b32.xlu0 %v2575, 4
      %v2750 = vpop.permute.xlu0 %2749
      %2751 = vrot.lane.b32.xlu0 %v2578, 4
      %v2752 = vpop.permute.xlu0 %2751
      %2753 = vrot.lane.b32.xlu0 %v2580, 4
      %v2754 = vpop.permute.xlu0 %2753
      %2755 = vrot.lane.b32.xlu0 %v2583, 4
      %v2756 = vpop.permute.xlu0 %2755
      %2757 = vrot.lane.b32.xlu0 %v2585, 4
      %v2758 = vpop.permute.xlu0 %2757
      %2759 = vrot.lane.b32.xlu0 %v2588, 4
      %v2760 = vpop.permute.xlu0 %2759
      %2761 = vrot.lane.b32.xlu0 %v2590, 4
      %v2762 = vpop.permute.xlu0 %2761
      %2763 = vrot.lane.b32.xlu0 %v2593, 4
      %v2764 = vpop.permute.xlu0 %2763
      %2765 = vrot.lane.b32.xlu0 %v2595, 4
      %v2766 = vpop.permute.xlu0 %2765
      %2767 = vrot.lane.b32.xlu0 %v2598, 4
      %v2768 = vpop.permute.xlu0 %2767
      %2769 = vrot.lane.b32.xlu0 %v2600, 4
      %v2770 = vpop.permute.xlu0 %2769
      %2803 = vrot.lane.b32.xlu0 %v2603, 8
      %v2804 = vpop.permute.xlu0 %2803
      %2805 = vrot.lane.b32.xlu0 %v2605, 8
      %v2806 = vpop.permute.xlu0 %2805
      %2807 = vrot.lane.b32.xlu0 %v2608, 8
      %v2808 = vpop.permute.xlu0 %2807
      %2809 = vrot.lane.b32.xlu0 %v2610, 8
      %v2810 = vpop.permute.xlu0 %2809
      %2811 = vrot.lane.b32.xlu0 %v2613, 8
      %v2812 = vpop.permute.xlu0 %2811
      %2813 = vrot.lane.b32.xlu0 %v2615, 8
      %v2814 = vpop.permute.xlu0 %2813
      %2815 = vrot.lane.b32.xlu0 %v2618, 8
      %v2816 = vpop.permute.xlu0 %2815
      %2817 = vrot.lane.b32.xlu0 %v2620, 8
      %v2818 = vpop.permute.xlu0 %2817
      %2819 = vrot.lane.b32.xlu0 %v2623, 8
      %v2820 = vpop.permute.xlu0 %2819
      %2821 = vrot.lane.b32.xlu0 %v2625, 8
      %v2822 = vpop.permute.xlu0 %2821
      %2823 = vrot.lane.b32.xlu0 %v2628, 8
      %v2824 = vpop.permute.xlu0 %2823
      %2825 = vrot.lane.b32.xlu0 %v2630, 8
      %v2826 = vpop.permute.xlu0 %2825
      %2827 = vrot.lane.b32.xlu0 %v2633, 8
      %v2828 = vpop.permute.xlu0 %2827
      %2829 = vrot.lane.b32.xlu0 %v2635, 8
      %v2830 = vpop.permute.xlu0 %2829
      %2831 = vrot.lane.b32.xlu0 %v2638, 8
      %v2832 = vpop.permute.xlu0 %2831
      %2833 = vrot.lane.b32.xlu0 %v2640, 8
      %v2834 = vpop.permute.xlu0 %2833
      %2835 = vrot.lane.b32.xlu0 %v2643, 8
      %v2836 = vpop.permute.xlu0 %2835
      %2837 = vrot.lane.b32.xlu0 %v2645, 8
      %v2838 = vpop.permute.xlu0 %2837
      %2839 = vrot.lane.b32.xlu0 %v2648, 8
      %v2840 = vpop.permute.xlu0 %2839
      %2841 = vrot.lane.b32.xlu0 %v2650, 8
      %v2842 = vpop.permute.xlu0 %2841
      %2843 = vrot.lane.b32.xlu0 %v2653, 8
      %v2844 = vpop.permute.xlu0 %2843
      %2845 = vrot.lane.b32.xlu0 %v2655, 8
      %v2846 = vpop.permute.xlu0 %2845
      %2847 = vrot.lane.b32.xlu0 %v2658, 8
      %v2848 = vpop.permute.xlu0 %2847
      %2849 = vrot.lane.b32.xlu0 %v2660, 8
      %v2850 = vpop.permute.xlu0 %2849
      %2851 = vrot.lane.b32.xlu0 %v2663, 8
      %v2852 = vpop.permute.xlu0 %2851
      %2853 = vrot.lane.b32.xlu0 %v2665, 8
      %v2854 = vpop.permute.xlu0 %2853
      %2855 = vrot.lane.b32.xlu0 %v2668, 8
      %v2856 = vpop.permute.xlu0 %2855
      %2857 = vrot.lane.b32.xlu0 %v2670, 8
      %v2858 = vpop.permute.xlu0 %2857
      %2859 = vrot.lane.b32.xlu0 %v2673, 8
      %v2860 = vpop.permute.xlu0 %2859
      %2861 = vrot.lane.b32.xlu0 %v2675, 8
      %v2862 = vpop.permute.xlu0 %2861
      %2863 = vrot.lane.b32.xlu0 %v2678, 8
      %v2864 = vpop.permute.xlu0 %2863
      %2865 = vrot.lane.b32.xlu0 %v2680, 8
      %v2866 = vpop.permute.xlu0 %2865
      %2899 = vrot.lane.b32.xlu0 %v2422, 12
      %v2900 = vpop.permute.xlu0 %2899
      %2901 = vrot.lane.b32.xlu0 %v2423, 12
      %v2902 = vpop.permute.xlu0 %2901
      %2903 = vrot.lane.b32.xlu0 %v2425, 12
      %v2904 = vpop.permute.xlu0 %2903
      %2905 = vrot.lane.b32.xlu0 %v2426, 12
      %v2906 = vpop.permute.xlu0 %2905
      %2907 = vrot.lane.b32.xlu0 %v2428, 12
      %v2908 = vpop.permute.xlu0 %2907
      %2909 = vrot.lane.b32.xlu0 %v2429, 12
      %v2910 = vpop.permute.xlu0 %2909
      %2911 = vrot.lane.b32.xlu0 %v2431, 12
      %v2912 = vpop.permute.xlu0 %2911
      %2913 = vrot.lane.b32.xlu0 %v2432, 12
      %v2914 = vpop.permute.xlu0 %2913
      %2915 = vrot.lane.b32.xlu0 %v2434, 12
      %v2916 = vpop.permute.xlu0 %2915
      %2917 = vrot.lane.b32.xlu0 %v2435, 12
      %v2918 = vpop.permute.xlu0 %2917
      %2919 = vrot.lane.b32.xlu0 %v2437, 12
      %v2920 = vpop.permute.xlu0 %2919
      %2921 = vrot.lane.b32.xlu0 %v2438, 12
      %v2922 = vpop.permute.xlu0 %2921
      %2923 = vrot.lane.b32.xlu0 %v2440, 12
      %v2924 = vpop.permute.xlu0 %2923
      %2925 = vrot.lane.b32.xlu0 %v2441, 12
      %v2926 = vpop.permute.xlu0 %2925
      %2927 = vrot.lane.b32.xlu0 %v2443, 12
      %v2928 = vpop.permute.xlu0 %2927
      %2929 = vrot.lane.b32.xlu0 %v2444, 12
      %v2930 = vpop.permute.xlu0 %2929
      %2931 = vrot.lane.b32.xlu0 %v2446, 12
      %v2932 = vpop.permute.xlu0 %2931
      %2933 = vrot.lane.b32.xlu0 %v2447, 12
      %v2934 = vpop.permute.xlu0 %2933
      %2935 = vrot.lane.b32.xlu0 %v2449, 12
      %v2936 = vpop.permute.xlu0 %2935
      %2937 = vrot.lane.b32.xlu0 %v2450, 12
      %v2938 = vpop.permute.xlu0 %2937
      %2939 = vrot.lane.b32.xlu0 %v2452, 12
      %v2940 = vpop.permute.xlu0 %2939
      %2941 = vrot.lane.b32.xlu0 %v2453, 12
      %v2942 = vpop.permute.xlu0 %2941
      %2943 = vrot.lane.b32.xlu0 %v2455, 12
      %v2944 = vpop.permute.xlu0 %2943
      %2945 = vrot.lane.b32.xlu0 %v2456, 12
      %v2946 = vpop.permute.xlu0 %2945
      %2947 = vrot.lane.b32.xlu0 %v2458, 12
      %v2948 = vpop.permute.xlu0 %2947
      %2949 = vrot.lane.b32.xlu0 %v2459, 12
      %v2950 = vpop.permute.xlu0 %2949
      %2951 = vrot.lane.b32.xlu0 %v2461, 12
      %v2952 = vpop.permute.xlu0 %2951
      %2953 = vrot.lane.b32.xlu0 %v2462, 12
      %v2954 = vpop.permute.xlu0 %2953
      %2955 = vrot.lane.b32.xlu0 %v2464, 12
      %v2956 = vpop.permute.xlu0 %2955
      %2957 = vrot.lane.b32.xlu0 %v2465, 12
      %v2958 = vpop.permute.xlu0 %2957
      %2959 = vrot.lane.b32.xlu0 %v2467, 12
      %v2960 = vpop.permute.xlu0 %2959
      %2961 = vrot.lane.b32.xlu0 %v2468, 12
      %v2962 = vpop.permute.xlu0 %2961
      %2995 = vrot.lane.b32.xlu0 %v2528, 16
      %v2996 = vpop.permute.xlu0 %2995
      %2997 = vrot.lane.b32.xlu0 %v2530, 16
      %v2998 = vpop.permute.xlu0 %2997
      %2999 = vrot.lane.b32.xlu0 %v2533, 16
      %v3000 = vpop.permute.xlu0 %2999
      %3001 = vrot.lane.b32.xlu0 %v2535, 16
      %v3002 = vpop.permute.xlu0 %3001
      %3003 = vrot.lane.b32.xlu0 %v2538, 16
      %v3004 = vpop.permute.xlu0 %3003
      %3005 = vrot.lane.b32.xlu0 %v2540, 16
      %v3006 = vpop.permute.xlu0 %3005
      %3007 = vrot.lane.b32.xlu0 %v2543, 16
      %v3008 = vpop.permute.xlu0 %3007
      %3009 = vrot.lane.b32.xlu0 %v2545, 16
      %v3010 = vpop.permute.xlu0 %3009
      %3011 = vrot.lane.b32.xlu0 %v2548, 16
      %v3012 = vpop.permute.xlu0 %3011
      %3013 = vrot.lane.b32.xlu0 %v2550, 16
      %v3014 = vpop.permute.xlu0 %3013
      %3015 = vrot.lane.b32.xlu0 %v2553, 16
      %v3016 = vpop.permute.xlu0 %3015
      %3017 = vrot.lane.b32.xlu0 %v2555, 16
      %v3018 = vpop.permute.xlu0 %3017
      %3019 = vrot.lane.b32.xlu0 %v2558, 16
      %v3020 = vpop.permute.xlu0 %3019
      %3021 = vrot.lane.b32.xlu0 %v2560, 16
      %v3022 = vpop.permute.xlu0 %3021
      %3023 = vrot.lane.b32.xlu0 %v2563, 16
      %v3024 = vpop.permute.xlu0 %3023
      %3025 = vrot.lane.b32.xlu0 %v2565, 16
      %v3026 = vpop.permute.xlu0 %3025
      %3027 = vrot.lane.b32.xlu0 %v2568, 16
      %v3028 = vpop.permute.xlu0 %3027
      %3029 = vrot.lane.b32.xlu0 %v2570, 16
      %v3030 = vpop.permute.xlu0 %3029
      %3031 = vrot.lane.b32.xlu0 %v2573, 16
      %v3032 = vpop.permute.xlu0 %3031
      %3033 = vrot.lane.b32.xlu0 %v2575, 16
      %v3034 = vpop.permute.xlu0 %3033
      %3035 = vrot.lane.b32.xlu0 %v2578, 16
      %v3036 = vpop.permute.xlu0 %3035
      %3037 = vrot.lane.b32.xlu0 %v2580, 16
      %v3038 = vpop.permute.xlu0 %3037
      %3039 = vrot.lane.b32.xlu0 %v2583, 16
      %v3040 = vpop.permute.xlu0 %3039
      %3041 = vrot.lane.b32.xlu0 %v2585, 16
      %v3042 = vpop.permute.xlu0 %3041
      %3043 = vrot.lane.b32.xlu0 %v2588, 16
      %v3044 = vpop.permute.xlu0 %3043
      %3045 = vrot.lane.b32.xlu0 %v2590, 16
      %v3046 = vpop.permute.xlu0 %3045
      %3047 = vrot.lane.b32.xlu0 %v2593, 16
      %v3048 = vpop.permute.xlu0 %3047
      %3049 = vrot.lane.b32.xlu0 %v2595, 16
      %v3050 = vpop.permute.xlu0 %3049
      %3051 = vrot.lane.b32.xlu0 %v2598, 16
      %v3052 = vpop.permute.xlu0 %3051
      %3053 = vrot.lane.b32.xlu0 %v2600, 16
      %v3054 = vpop.permute.xlu0 %3053
      %3055 = vrot.lane.b32.xlu0 %v2686, 16
      %v3056 = vpop.permute.xlu0 %3055
      %3057 = vrot.lane.b32.xlu0 %v2688, 16
      %v3058 = vpop.permute.xlu0 %3057
      %3091 = vrot.lane.b32.xlu0 %v2608, 20
      %v3092 = vpop.permute.xlu0 %3091
      %3093 = vrot.lane.b32.xlu0 %v2610, 20
      %v3094 = vpop.permute.xlu0 %3093
      %3095 = vrot.lane.b32.xlu0 %v2613, 20
      %v3096 = vpop.permute.xlu0 %3095
      %3097 = vrot.lane.b32.xlu0 %v2615, 20
      %v3098 = vpop.permute.xlu0 %3097
      %3099 = vrot.lane.b32.xlu0 %v2618, 20
      %v3100 = vpop.permute.xlu0 %3099
      %3101 = vrot.lane.b32.xlu0 %v2620, 20
      %v3102 = vpop.permute.xlu0 %3101
      %3103 = vrot.lane.b32.xlu0 %v2623, 20
      %v3104 = vpop.permute.xlu0 %3103
      %3105 = vrot.lane.b32.xlu0 %v2625, 20
      %v3106 = vpop.permute.xlu0 %3105
      %3107 = vrot.lane.b32.xlu0 %v2628, 20
      %v3108 = vpop.permute.xlu0 %3107
      %3109 = vrot.lane.b32.xlu0 %v2630, 20
      %v3110 = vpop.permute.xlu0 %3109
      %3111 = vrot.lane.b32.xlu0 %v2633, 20
      %v3112 = vpop.permute.xlu0 %3111
      %3113 = vrot.lane.b32.xlu0 %v2635, 20
      %v3114 = vpop.permute.xlu0 %3113
      %3115 = vrot.lane.b32.xlu0 %v2638, 20
      %v3116 = vpop.permute.xlu0 %3115
      %3117 = vrot.lane.b32.xlu0 %v2640, 20
      %v3118 = vpop.permute.xlu0 %3117
      %3119 = vrot.lane.b32.xlu0 %v2643, 20
      %v3120 = vpop.permute.xlu0 %3119
      %3121 = vrot.lane.b32.xlu0 %v2645, 20
      %v3122 = vpop.permute.xlu0 %3121
      %3123 = vrot.lane.b32.xlu0 %v2648, 20
      %v3124 = vpop.permute.xlu0 %3123
      %3125 = vrot.lane.b32.xlu0 %v2650, 20
      %v3126 = vpop.permute.xlu0 %3125
      %3127 = vrot.lane.b32.xlu0 %v2653, 20
      %v3128 = vpop.permute.xlu0 %3127
      %3129 = vrot.lane.b32.xlu0 %v2655, 20
      %v3130 = vpop.permute.xlu0 %3129
      %3131 = vrot.lane.b32.xlu0 %v2658, 20
      %v3132 = vpop.permute.xlu0 %3131
      %3133 = vrot.lane.b32.xlu0 %v2660, 20
      %v3134 = vpop.permute.xlu0 %3133
      %3135 = vrot.lane.b32.xlu0 %v2663, 20
      %v3136 = vpop.permute.xlu0 %3135
      %3137 = vrot.lane.b32.xlu0 %v2665, 20
      %v3138 = vpop.permute.xlu0 %3137
      %3139 = vrot.lane.b32.xlu0 %v2668, 20
      %v3140 = vpop.permute.xlu0 %3139
      %3141 = vrot.lane.b32.xlu0 %v2670, 20
      %v3142 = vpop.permute.xlu0 %3141
      %3143 = vrot.lane.b32.xlu0 %v2673, 20
      %v3144 = vpop.permute.xlu0 %3143
      %3145 = vrot.lane.b32.xlu0 %v2675, 20
      %v3146 = vpop.permute.xlu0 %3145
      %3147 = vrot.lane.b32.xlu0 %v2678, 20
      %v3148 = vpop.permute.xlu0 %3147
      %3149 = vrot.lane.b32.xlu0 %v2680, 20
      %v3150 = vpop.permute.xlu0 %3149
      %3151 = vrot.lane.b32.xlu0 %v2691, 20
      %v3152 = vpop.permute.xlu0 %3151
      %3153 = vrot.lane.b32.xlu0 %v2693, 20
      %v3154 = vpop.permute.xlu0 %3153
      %3187 = vrot.lane.b32.xlu0 %v2425, 24
      %v3188 = vpop.permute.xlu0 %3187
      %3189 = vrot.lane.b32.xlu0 %v2426, 24
      %v3190 = vpop.permute.xlu0 %3189
      %3191 = vrot.lane.b32.xlu0 %v2428, 24
      %v3192 = vpop.permute.xlu0 %3191
      %3193 = vrot.lane.b32.xlu0 %v2429, 24
      %v3194 = vpop.permute.xlu0 %3193
      %3195 = vrot.lane.b32.xlu0 %v2431, 24
      %v3196 = vpop.permute.xlu0 %3195
      %3197 = vrot.lane.b32.xlu0 %v2432, 24
      %v3198 = vpop.permute.xlu0 %3197
      %3199 = vrot.lane.b32.xlu0 %v2434, 24
      %v3200 = vpop.permute.xlu0 %3199
      %3201 = vrot.lane.b32.xlu0 %v2435, 24
      %v3202 = vpop.permute.xlu0 %3201
      %3203 = vrot.lane.b32.xlu0 %v2437, 24
      %v3204 = vpop.permute.xlu0 %3203
      %3205 = vrot.lane.b32.xlu0 %v2438, 24
      %v3206 = vpop.permute.xlu0 %3205
      %3207 = vrot.lane.b32.xlu0 %v2440, 24
      %v3208 = vpop.permute.xlu0 %3207
      %3209 = vrot.lane.b32.xlu0 %v2441, 24
      %v3210 = vpop.permute.xlu0 %3209
      %3211 = vrot.lane.b32.xlu0 %v2443, 24
      %v3212 = vpop.permute.xlu0 %3211
      %3213 = vrot.lane.b32.xlu0 %v2444, 24
      %v3214 = vpop.permute.xlu0 %3213
      %3215 = vrot.lane.b32.xlu0 %v2446, 24
      %v3216 = vpop.permute.xlu0 %3215
      %3217 = vrot.lane.b32.xlu0 %v2447, 24
      %v3218 = vpop.permute.xlu0 %3217
      %3219 = vrot.lane.b32.xlu0 %v2449, 24
      %v3220 = vpop.permute.xlu0 %3219
      %3221 = vrot.lane.b32.xlu0 %v2450, 24
      %v3222 = vpop.permute.xlu0 %3221
      %3223 = vrot.lane.b32.xlu0 %v2452, 24
      %v3224 = vpop.permute.xlu0 %3223
      %3225 = vrot.lane.b32.xlu0 %v2453, 24
      %v3226 = vpop.permute.xlu0 %3225
      %3227 = vrot.lane.b32.xlu0 %v2455, 24
      %v3228 = vpop.permute.xlu0 %3227
      %3229 = vrot.lane.b32.xlu0 %v2456, 24
      %v3230 = vpop.permute.xlu0 %3229
      %3231 = vrot.lane.b32.xlu0 %v2458, 24
      %v3232 = vpop.permute.xlu0 %3231
      %3233 = vrot.lane.b32.xlu0 %v2459, 24
      %v3234 = vpop.permute.xlu0 %3233
      %3235 = vrot.lane.b32.xlu0 %v2461, 24
      %v3236 = vpop.permute.xlu0 %3235
      %3237 = vrot.lane.b32.xlu0 %v2462, 24
      %v3238 = vpop.permute.xlu0 %3237
      %3239 = vrot.lane.b32.xlu0 %v2464, 24
      %v3240 = vpop.permute.xlu0 %3239
      %3241 = vrot.lane.b32.xlu0 %v2465, 24
      %v3242 = vpop.permute.xlu0 %3241
      %3243 = vrot.lane.b32.xlu0 %v2467, 24
      %v3244 = vpop.permute.xlu0 %3243
      %3245 = vrot.lane.b32.xlu0 %v2468, 24
      %v3246 = vpop.permute.xlu0 %3245
      %3247 = vrot.lane.b32.xlu0 %v2470, 24
      %v3248 = vpop.permute.xlu0 %3247
      %3249 = vrot.lane.b32.xlu0 %v2471, 24
      %v3250 = vpop.permute.xlu0 %3249
      %3283 = vrot.lane.b32.xlu0 %v2533, 28
      %v3284 = vpop.permute.xlu0 %3283
      %3285 = vrot.lane.b32.xlu0 %v2535, 28
      %v3286 = vpop.permute.xlu0 %3285
      %3287 = vrot.lane.b32.xlu0 %v2538, 28
      %v3288 = vpop.permute.xlu0 %3287
      %3289 = vrot.lane.b32.xlu0 %v2540, 28
      %v3290 = vpop.permute.xlu0 %3289
      %3291 = vrot.lane.b32.xlu0 %v2543, 28
      %v3292 = vpop.permute.xlu0 %3291
      %3293 = vrot.lane.b32.xlu0 %v2545, 28
      %v3294 = vpop.permute.xlu0 %3293
      %3295 = vrot.lane.b32.xlu0 %v2548, 28
      %v3296 = vpop.permute.xlu0 %3295
      %3297 = vrot.lane.b32.xlu0 %v2550, 28
      %v3298 = vpop.permute.xlu0 %3297
      %3299 = vrot.lane.b32.xlu0 %v2553, 28
      %v3300 = vpop.permute.xlu0 %3299
      %3301 = vrot.lane.b32.xlu0 %v2555, 28
      %v3302 = vpop.permute.xlu0 %3301
      %3303 = vrot.lane.b32.xlu0 %v2558, 28
      %v3304 = vpop.permute.xlu0 %3303
      %3305 = vrot.lane.b32.xlu0 %v2560, 28
      %v3306 = vpop.permute.xlu0 %3305
      %3307 = vrot.lane.b32.xlu0 %v2563, 28
      %v3308 = vpop.permute.xlu0 %3307
      %3309 = vrot.lane.b32.xlu0 %v2565, 28
      %v3310 = vpop.permute.xlu0 %3309
      %3311 = vrot.lane.b32.xlu0 %v2568, 28
      %v3312 = vpop.permute.xlu0 %3311
      %3313 = vrot.lane.b32.xlu0 %v2570, 28
      %v3314 = vpop.permute.xlu0 %3313
      %3315 = vrot.lane.b32.xlu0 %v2573, 28
      %v3316 = vpop.permute.xlu0 %3315
      %3317 = vrot.lane.b32.xlu0 %v2575, 28
      %v3318 = vpop.permute.xlu0 %3317
      %3319 = vrot.lane.b32.xlu0 %v2578, 28
      %v3320 = vpop.permute.xlu0 %3319
      %3321 = vrot.lane.b32.xlu0 %v2580, 28
      %v3322 = vpop.permute.xlu0 %3321
      %3323 = vrot.lane.b32.xlu0 %v2583, 28
      %v3324 = vpop.permute.xlu0 %3323
      %3325 = vrot.lane.b32.xlu0 %v2585, 28
      %v3326 = vpop.permute.xlu0 %3325
      %3327 = vrot.lane.b32.xlu0 %v2588, 28
      %v3328 = vpop.permute.xlu0 %3327
      %3329 = vrot.lane.b32.xlu0 %v2590, 28
      %v3330 = vpop.permute.xlu0 %3329
      %3331 = vrot.lane.b32.xlu0 %v2593, 28
      %v3332 = vpop.permute.xlu0 %3331
      %3333 = vrot.lane.b32.xlu0 %v2595, 28
      %v3334 = vpop.permute.xlu0 %3333
      %3335 = vrot.lane.b32.xlu0 %v2598, 28
      %v3336 = vpop.permute.xlu0 %3335
      %3337 = vrot.lane.b32.xlu0 %v2600, 28
      %v3338 = vpop.permute.xlu0 %3337
      %3339 = vrot.lane.b32.xlu0 %v2686, 28
      %v3340 = vpop.permute.xlu0 %3339
      %3341 = vrot.lane.b32.xlu0 %v2688, 28
      %v3342 = vpop.permute.xlu0 %3341
      %3343 = vrot.lane.b32.xlu0 %v2699, 28
      %v3344 = vpop.permute.xlu0 %3343
      %3345 = vrot.lane.b32.xlu0 %v2701, 28
      %v3346 = vpop.permute.xlu0 %3345
      %3379 = vrot.lane.b32.xlu0 %v2613, 32
      %v3380 = vpop.permute.xlu0 %3379
      %3381 = vrot.lane.b32.xlu0 %v2615, 32
      %v3382 = vpop.permute.xlu0 %3381
      %3383 = vrot.lane.b32.xlu0 %v2618, 32
      %v3384 = vpop.permute.xlu0 %3383
      %3385 = vrot.lane.b32.xlu0 %v2620, 32
      %v3386 = vpop.permute.xlu0 %3385
      %3387 = vrot.lane.b32.xlu0 %v2623, 32
      %v3388 = vpop.permute.xlu0 %3387
      %3389 = vrot.lane.b32.xlu0 %v2625, 32
      %v3390 = vpop.permute.xlu0 %3389
      %3391 = vrot.lane.b32.xlu0 %v2628, 32
      %v3392 = vpop.permute.xlu0 %3391
      %3393 = vrot.lane.b32.xlu0 %v2630, 32
      %v3394 = vpop.permute.xlu0 %3393
      %3395 = vrot.lane.b32.xlu0 %v2633, 32
      %v3396 = vpop.permute.xlu0 %3395
      %3397 = vrot.lane.b32.xlu0 %v2635, 32
      %v3398 = vpop.permute.xlu0 %3397
      %3399 = vrot.lane.b32.xlu0 %v2638, 32
      %v3400 = vpop.permute.xlu0 %3399
      %3401 = vrot.lane.b32.xlu0 %v2640, 32
      %v3402 = vpop.permute.xlu0 %3401
      %3403 = vrot.lane.b32.xlu0 %v2643, 32
      %v3404 = vpop.permute.xlu0 %3403
      %3405 = vrot.lane.b32.xlu0 %v2645, 32
      %v3406 = vpop.permute.xlu0 %3405
      %3407 = vrot.lane.b32.xlu0 %v2648, 32
      %v3408 = vpop.permute.xlu0 %3407
      %3409 = vrot.lane.b32.xlu0 %v2650, 32
      %v3410 = vpop.permute.xlu0 %3409
      %3411 = vrot.lane.b32.xlu0 %v2653, 32
      %v3412 = vpop.permute.xlu0 %3411
      %3413 = vrot.lane.b32.xlu0 %v2655, 32
      %v3414 = vpop.permute.xlu0 %3413
      %3415 = vrot.lane.b32.xlu0 %v2658, 32
      %v3416 = vpop.permute.xlu0 %3415
      %3417 = vrot.lane.b32.xlu0 %v2660, 32
      %v3418 = vpop.permute.xlu0 %3417
      %3419 = vrot.lane.b32.xlu0 %v2663, 32
      %v3420 = vpop.permute.xlu0 %3419
      %3421 = vrot.lane.b32.xlu0 %v2665, 32
      %v3422 = vpop.permute.xlu0 %3421
      %3423 = vrot.lane.b32.xlu0 %v2668, 32
      %v3424 = vpop.permute.xlu0 %3423
      %3425 = vrot.lane.b32.xlu0 %v2670, 32
      %v3426 = vpop.permute.xlu0 %3425
      %3427 = vrot.lane.b32.xlu0 %v2673, 32
      %v3428 = vpop.permute.xlu0 %3427
      %3429 = vrot.lane.b32.xlu0 %v2675, 32
      %v3430 = vpop.permute.xlu0 %3429
      %3431 = vrot.lane.b32.xlu0 %v2678, 32
      %v3432 = vpop.permute.xlu0 %3431
      %3433 = vrot.lane.b32.xlu0 %v2680, 32
      %v3434 = vpop.permute.xlu0 %3433
      %3435 = vrot.lane.b32.xlu0 %v2691, 32
      %v3436 = vpop.permute.xlu0 %3435
      %3437 = vrot.lane.b32.xlu0 %v2693, 32
      %v3438 = vpop.permute.xlu0 %3437
      %3439 = vrot.lane.b32.xlu0 %v2704, 32
      %v3440 = vpop.permute.xlu0 %3439
      %3441 = vrot.lane.b32.xlu0 %v2706, 32
      %v3442 = vpop.permute.xlu0 %3441
      %v3475 = vsel %vm574, %v2419, %v2708
      %v3476 = vsel %vm574, %v2420, %v2710
      %v3477 = vsel %vm574, %v2422, %v2712
      %v3478 = vsel %vm574, %v2423, %v2714
      %v3479 = vsel %vm574, %v2425, %v2716
      %v3480 = vsel %vm574, %v2426, %v2718
      %v3481 = vsel %vm574, %v2428, %v2720
      %v3482 = vsel %vm574, %v2429, %v2722
      %v3483 = vsel %vm574, %v2431, %v2724
      %v3484 = vsel %vm574, %v2432, %v2726
      %v3485 = vsel %vm574, %v2434, %v2728
      %v3486 = vsel %vm574, %v2435, %v2730
      %v3487 = vsel %vm574, %v2437, %v2732
      %v3488 = vsel %vm574, %v2438, %v2734
      %v3489 = vsel %vm574, %v2440, %v2736
      %v3490 = vsel %vm574, %v2441, %v2738
      %v3491 = vsel %vm574, %v2443, %v2740
      %v3492 = vsel %vm574, %v2444, %v2742
      %v3493 = vsel %vm574, %v2446, %v2744
      %v3494 = vsel %vm574, %v2447, %v2746
      %v3495 = vsel %vm574, %v2449, %v2748
      %v3496 = vsel %vm574, %v2450, %v2750
      %v3497 = vsel %vm574, %v2452, %v2752
      %v3498 = vsel %vm574, %v2453, %v2754
      %v3499 = vsel %vm574, %v2455, %v2756
      %v3500 = vsel %vm574, %v2456, %v2758
      %v3501 = vsel %vm574, %v2458, %v2760
      %v3502 = vsel %vm574, %v2459, %v2762
      %v3503 = vsel %vm574, %v2461, %v2764
      %v3504 = vsel %vm574, %v2462, %v2766
      %v3505 = vsel %vm574, %v2464, %v2768
      %v3506 = vsel %vm574, %v2465, %v2770
      %v3507 = vsel %vm326, %v3475, %v2804
      %v3508 = vsel %vm326, %v3476, %v2806
      %v3509 = vsel %vm326, %v3477, %v2808
      %v3510 = vsel %vm326, %v3478, %v2810
      %v3511 = vsel %vm326, %v3479, %v2812
      %v3512 = vsel %vm326, %v3480, %v2814
      %v3513 = vsel %vm326, %v3481, %v2816
      %v3514 = vsel %vm326, %v3482, %v2818
      %v3515 = vsel %vm326, %v3483, %v2820
      %v3516 = vsel %vm326, %v3484, %v2822
      %v3517 = vsel %vm326, %v3485, %v2824
      %v3518 = vsel %vm326, %v3486, %v2826
      %v3519 = vsel %vm326, %v3487, %v2828
      %v3520 = vsel %vm326, %v3488, %v2830
      %v3521 = vsel %vm326, %v3489, %v2832
      %v3522 = vsel %vm326, %v3490, %v2834
      %v3523 = vsel %vm326, %v3491, %v2836
      %v3524 = vsel %vm326, %v3492, %v2838
      %v3525 = vsel %vm326, %v3493, %v2840
      %v3526 = vsel %vm326, %v3494, %v2842
      %v3527 = vsel %vm326, %v3495, %v2844
      %v3528 = vsel %vm326, %v3496, %v2846
      %v3529 = vsel %vm326, %v3497, %v2848
      %v3530 = vsel %vm326, %v3498, %v2850
      %v3531 = vsel %vm326, %v3499, %v2852
      %v3532 = vsel %vm326, %v3500, %v2854
      %v3533 = vsel %vm326, %v3501, %v2856
      %v3534 = vsel %vm326, %v3502, %v2858
      %v3535 = vsel %vm326, %v3503, %v2860
      %v3536 = vsel %vm326, %v3504, %v2862
      %v3537 = vsel %vm326, %v3505, %v2864
      %v3538 = vsel %vm326, %v3506, %v2866
      %vm3539 = vcmask 97280
      %v3540 = vsel %vm3539, %v3507, %v2900
      %v3541 = vsel %vm3539, %v3508, %v2902
      %v3542 = vsel %vm3539, %v3509, %v2904
      %v3543 = vsel %vm3539, %v3510, %v2906
      %v3544 = vsel %vm3539, %v3511, %v2908
      %v3545 = vsel %vm3539, %v3512, %v2910
      %v3546 = vsel %vm3539, %v3513, %v2912
      %v3547 = vsel %vm3539, %v3514, %v2914
      %v3548 = vsel %vm3539, %v3515, %v2916
      %v3549 = vsel %vm3539, %v3516, %v2918
      %v3550 = vsel %vm3539, %v3517, %v2920
      %v3551 = vsel %vm3539, %v3518, %v2922
      %v3552 = vsel %vm3539, %v3519, %v2924
      %v3553 = vsel %vm3539, %v3520, %v2926
      %v3554 = vsel %vm3539, %v3521, %v2928
      %v3555 = vsel %vm3539, %v3522, %v2930
      %v3556 = vsel %vm3539, %v3523, %v2932
      %v3557 = vsel %vm3539, %v3524, %v2934
      %v3558 = vsel %vm3539, %v3525, %v2936
      %v3559 = vsel %vm3539, %v3526, %v2938
      %v3560 = vsel %vm3539, %v3527, %v2940
      %v3561 = vsel %vm3539, %v3528, %v2942
      %v3562 = vsel %vm3539, %v3529, %v2944
      %v3563 = vsel %vm3539, %v3530, %v2946
      %v3564 = vsel %vm3539, %v3531, %v2948
      %v3565 = vsel %vm3539, %v3532, %v2950
      %v3566 = vsel %vm3539, %v3533, %v2952
      %v3567 = vsel %vm3539, %v3534, %v2954
      %v3568 = vsel %vm3539, %v3535, %v2956
      %v3569 = vsel %vm3539, %v3536, %v2958
      %v3570 = vsel %vm3539, %v3537, %v2960
      %v3571 = vsel %vm3539, %v3538, %v2962
      %v3572 = vsel %vm1730, %v3540, %v2996
      %v3573 = vsel %vm1730, %v3541, %v2998
      %v3574 = vsel %vm1730, %v3542, %v3000
      %v3575 = vsel %vm1730, %v3543, %v3002
      %v3576 = vsel %vm1730, %v3544, %v3004
      %v3577 = vsel %vm1730, %v3545, %v3006
      %v3578 = vsel %vm1730, %v3546, %v3008
      %v3579 = vsel %vm1730, %v3547, %v3010
      %v3580 = vsel %vm1730, %v3548, %v3012
      %v3581 = vsel %vm1730, %v3549, %v3014
      %v3582 = vsel %vm1730, %v3550, %v3016
      %v3583 = vsel %vm1730, %v3551, %v3018
      %v3584 = vsel %vm1730, %v3552, %v3020
      %v3585 = vsel %vm1730, %v3553, %v3022
      %v3586 = vsel %vm1730, %v3554, %v3024
      %v3587 = vsel %vm1730, %v3555, %v3026
      %v3588 = vsel %vm1730, %v3556, %v3028
      %v3589 = vsel %vm1730, %v3557, %v3030
      %v3590 = vsel %vm1730, %v3558, %v3032
      %v3591 = vsel %vm1730, %v3559, %v3034
      %v3592 = vsel %vm1730, %v3560, %v3036
      %v3593 = vsel %vm1730, %v3561, %v3038
      %v3594 = vsel %vm1730, %v3562, %v3040
      %v3595 = vsel %vm1730, %v3563, %v3042
      %v3596 = vsel %vm1730, %v3564, %v3044
      %v3597 = vsel %vm1730, %v3565, %v3046
      %v3598 = vsel %vm1730, %v3566, %v3048
      %v3599 = vsel %vm1730, %v3567, %v3050
      %v3600 = vsel %vm1730, %v3568, %v3052
      %v3601 = vsel %vm1730, %v3569, %v3054
      %v3602 = vsel %vm1730, %v3570, %v3056
      %v3603 = vsel %vm1730, %v3571, %v3058
      %vm3604 = vcmask 162816
      %v3605 = vsel %vm3604, %v3572, %v3092
      %v3606 = vsel %vm3604, %v3573, %v3094
      %v3607 = vsel %vm3604, %v3574, %v3096
      %v3608 = vsel %vm3604, %v3575, %v3098
      %v3609 = vsel %vm3604, %v3576, %v3100
      %v3610 = vsel %vm3604, %v3577, %v3102
      %v3611 = vsel %vm3604, %v3578, %v3104
      %v3612 = vsel %vm3604, %v3579, %v3106
      %v3613 = vsel %vm3604, %v3580, %v3108
      %v3614 = vsel %vm3604, %v3581, %v3110
      %v3615 = vsel %vm3604, %v3582, %v3112
      %v3616 = vsel %vm3604, %v3583, %v3114
      %v3617 = vsel %vm3604, %v3584, %v3116
      %v3618 = vsel %vm3604, %v3585, %v3118
      %v3619 = vsel %vm3604, %v3586, %v3120
      %v3620 = vsel %vm3604, %v3587, %v3122
      %v3621 = vsel %vm3604, %v3588, %v3124
      %v3622 = vsel %vm3604, %v3589, %v3126
      %v3623 = vsel %vm3604, %v3590, %v3128
      %v3624 = vsel %vm3604, %v3591, %v3130
      %v3625 = vsel %vm3604, %v3592, %v3132
      %v3626 = vsel %vm3604, %v3593, %v3134
      %v3627 = vsel %vm3604, %v3594, %v3136
      %v3628 = vsel %vm3604, %v3595, %v3138
      %v3629 = vsel %vm3604, %v3596, %v3140
      %v3630 = vsel %vm3604, %v3597, %v3142
      %v3631 = vsel %vm3604, %v3598, %v3144
      %v3632 = vsel %vm3604, %v3599, %v3146
      %v3633 = vsel %vm3604, %v3600, %v3148
      %v3634 = vsel %vm3604, %v3601, %v3150
      %v3635 = vsel %vm3604, %v3602, %v3152
      %v3636 = vsel %vm3604, %v3603, %v3154
      %v3637 = vsel %vm1763, %v3605, %v3188
      %v3638 = vsel %vm1763, %v3606, %v3190
      %v3639 = vsel %vm1763, %v3607, %v3192
      %v3640 = vsel %vm1763, %v3608, %v3194
      %v3641 = vsel %vm1763, %v3609, %v3196
      %v3642 = vsel %vm1763, %v3610, %v3198
      %v3643 = vsel %vm1763, %v3611, %v3200
      %v3644 = vsel %vm1763, %v3612, %v3202
      %v3645 = vsel %vm1763, %v3613, %v3204
      %v3646 = vsel %vm1763, %v3614, %v3206
      %v3647 = vsel %vm1763, %v3615, %v3208
      %v3648 = vsel %vm1763, %v3616, %v3210
      %v3649 = vsel %vm1763, %v3617, %v3212
      %v3650 = vsel %vm1763, %v3618, %v3214
      %v3651 = vsel %vm1763, %v3619, %v3216
      %v3652 = vsel %vm1763, %v3620, %v3218
      %v3653 = vsel %vm1763, %v3621, %v3220
      %v3654 = vsel %vm1763, %v3622, %v3222
      %v3655 = vsel %vm1763, %v3623, %v3224
      %v3656 = vsel %vm1763, %v3624, %v3226
      %v3657 = vsel %vm1763, %v3625, %v3228
      %v3658 = vsel %vm1763, %v3626, %v3230
      %v3659 = vsel %vm1763, %v3627, %v3232
      %v3660 = vsel %vm1763, %v3628, %v3234
      %v3661 = vsel %vm1763, %v3629, %v3236
      %v3662 = vsel %vm1763, %v3630, %v3238
      %v3663 = vsel %vm1763, %v3631, %v3240
      %v3664 = vsel %vm1763, %v3632, %v3242
      %v3665 = vsel %vm1763, %v3633, %v3244
      %v3666 = vsel %vm1763, %v3634, %v3246
      %v3667 = vsel %vm1763, %v3635, %v3248
      %v3668 = vsel %vm1763, %v3636, %v3250
      %vm3669 = vcmask 228352
      %v3670 = vsel %vm3669, %v3637, %v3284
      %v3671 = vsel %vm3669, %v3638, %v3286
      %v3672 = vsel %vm3669, %v3639, %v3288
      %v3673 = vsel %vm3669, %v3640, %v3290
      %v3674 = vsel %vm3669, %v3641, %v3292
      %v3675 = vsel %vm3669, %v3642, %v3294
      %v3676 = vsel %vm3669, %v3643, %v3296
      %v3677 = vsel %vm3669, %v3644, %v3298
      %v3678 = vsel %vm3669, %v3645, %v3300
      %v3679 = vsel %vm3669, %v3646, %v3302
      %v3680 = vsel %vm3669, %v3647, %v3304
      %v3681 = vsel %vm3669, %v3648, %v3306
      %v3682 = vsel %vm3669, %v3649, %v3308
      %v3683 = vsel %vm3669, %v3650, %v3310
      %v3684 = vsel %vm3669, %v3651, %v3312
      %v3685 = vsel %vm3669, %v3652, %v3314
      %v3686 = vsel %vm3669, %v3653, %v3316
      %v3687 = vsel %vm3669, %v3654, %v3318
      %v3688 = vsel %vm3669, %v3655, %v3320
      %v3689 = vsel %vm3669, %v3656, %v3322
      %v3690 = vsel %vm3669, %v3657, %v3324
      %v3691 = vsel %vm3669, %v3658, %v3326
      %v3692 = vsel %vm3669, %v3659, %v3328
      %v3693 = vsel %vm3669, %v3660, %v3330
      %v3694 = vsel %vm3669, %v3661, %v3332
      %v3695 = vsel %vm3669, %v3662, %v3334
      %v3696 = vsel %vm3669, %v3663, %v3336
      %v3697 = vsel %vm3669, %v3664, %v3338
      %v3698 = vsel %vm3669, %v3665, %v3340
      %v3699 = vsel %vm3669, %v3666, %v3342
      %v3700 = vsel %vm3669, %v3667, %v3344
      %v3701 = vsel %vm3669, %v3668, %v3346
      %v3702 = vsel %vm1796, %v3670, %v3380
      %v3703 = vsel %vm1796, %v3671, %v3382
      %v3704 = vsel %vm1796, %v3672, %v3384
      %v3705 = vsel %vm1796, %v3673, %v3386
      %v3706 = vsel %vm1796, %v3674, %v3388
      %v3707 = vsel %vm1796, %v3675, %v3390
      %v3708 = vsel %vm1796, %v3676, %v3392
      %v3709 = vsel %vm1796, %v3677, %v3394
      %v3710 = vsel %vm1796, %v3678, %v3396
      %v3711 = vsel %vm1796, %v3679, %v3398
      %v3712 = vsel %vm1796, %v3680, %v3400
      %v3713 = vsel %vm1796, %v3681, %v3402
      %v3714 = vsel %vm1796, %v3682, %v3404
      %v3715 = vsel %vm1796, %v3683, %v3406
      %v3716 = vsel %vm1796, %v3684, %v3408
      %v3717 = vsel %vm1796, %v3685, %v3410
      %v3718 = vsel %vm1796, %v3686, %v3412
      %v3719 = vsel %vm1796, %v3687, %v3414
      %v3720 = vsel %vm1796, %v3688, %v3416
      %v3721 = vsel %vm1796, %v3689, %v3418
      %v3722 = vsel %vm1796, %v3690, %v3420
      %v3723 = vsel %vm1796, %v3691, %v3422
      %v3724 = vsel %vm1796, %v3692, %v3424
      %v3725 = vsel %vm1796, %v3693, %v3426
      %v3726 = vsel %vm1796, %v3694, %v3428
      %v3727 = vsel %vm1796, %v3695, %v3430
      %v3728 = vsel %vm1796, %v3696, %v3432
      %v3729 = vsel %vm1796, %v3697, %v3434
      %v3730 = vsel %vm1796, %v3698, %v3436
      %v3731 = vsel %vm1796, %v3699, %v3438
      %v3732 = vsel %vm1796, %v3700, %v3440
      %v3733 = vsel %vm1796, %v3701, %v3442
      %v3734 = vld [vmem:[%s4] sm:$0xff]
      %v3735 = vld [vmem:[%s4 + $0x8] sm:$0xff]
      %v3736 = vld [vmem:[%s4 + $0x10] sm:$0xff]
      %v3737 = vld [vmem:[%s4 + $0x18] sm:$0xff]
      %v3738 = vld [vmem:[%s4 + $0x20] sm:$0xf]
      %v3739 = vld [vmem:[%s5] sm:$0x1]
      %v3741 = vlaneseq
      %v3742 = vshrl.u32 %v3741, 7
      %v3743 = vsub.s32 0, %v3742
      %v3744 = vrot.slane %v3739, %v3743
      %vm3746 = vcmask 293888
      %v3748 = vsel %vm3746, %v3702, 0
      %v3751 = vsel %vm3746, %v3703, 0
      %v3754 = vsel %vm3746, %v3704, 0
      %v3757 = vsel %vm3746, %v3705, 0
      %v3760 = vsel %vm3746, %v3706, 0
      %v3763 = vsel %vm3746, %v3707, 0
      %v3766 = vsel %vm3746, %v3708, 0
      %v3769 = vsel %vm3746, %v3709, 0
      %v3772 = vsel %vm3746, %v3710, 0
      %v3775 = vsel %vm3746, %v3711, 0
      %v3778 = vsel %vm3746, %v3712, 0
      %v3781 = vsel %vm3746, %v3713, 0
      %v3784 = vsel %vm3746, %v3714, 0
      %v3787 = vsel %vm3746, %v3715, 0
      %v3790 = vsel %vm3746, %v3716, 0
      %v3793 = vsel %vm3746, %v3717, 0
      %v3796 = vsel %vm3746, %v3718, 0
      %v3799 = vsel %vm3746, %v3719, 0
      %v3802 = vsel %vm3746, %v3720, 0
      %v3805 = vsel %vm3746, %v3721, 0
      %v3808 = vsel %vm3746, %v3722, 0
      %v3811 = vsel %vm3746, %v3723, 0
      %v3814 = vsel %vm3746, %v3724, 0
      %v3817 = vsel %vm3746, %v3725, 0
      %v3820 = vsel %vm3746, %v3726, 0
      %v3823 = vsel %vm3746, %v3727, 0
      %v3826 = vsel %vm3746, %v3728, 0
      %v3829 = vsel %vm3746, %v3729, 0
      %v3832 = vsel %vm3746, %v3730, 0
      %v3835 = vsel %vm3746, %v3731, 0
      %v3838 = vsel %vm3746, %v3732, 0
      %v3841 = vsel %vm3746, %v3733, 0
      %vm3843 = vcmask 1043456
      %v3845 = vsel %vm3843, %v3738, 0
      %3847 = vmatprep.subr.mxu0 0.0
      %3848 = vmatpush1.msra.mxu0 0.0
      %3849 = vmatprep.subr.mxu0 0.0
      %3850 = vmatpush1.msra.mxu0 0.0
      %3851 = vmatprep.subr.mxu0 0.0
      %3852 = vmatpush1.msra.mxu0 0.0
      %3853 = vmatprep.subr.mxu0 0.0
      %3854 = vmatpush1.msra.mxu0 0.0
      %3855 = vmatprep.subr.mxu0 0.0
      %3856 = vmatpush1.msra.mxu0 0.0
      %3857 = vmatprep.subr.mxu0 0.0
      %3858 = vmatpush1.msra.mxu0 0.0
      %3859 = vmatprep.subr.mxu0 0.0
      %3860 = vmatpush1.msra.mxu0 0.0
      %3861 = vmatprep.subr.mxu0 0.0
      %3862 = vmatpush1.msra.mxu0 0.0
      %3863 = vmatprep.subr.mxu0 0.0
      %3864 = vmatpush1.msra.mxu0 0.0
      %3865 = vmatprep.subr.mxu0 0.0
      %3866 = vmatpush1.msra.mxu0 0.0
      %3867 = vmatprep.subr.mxu0 0.0
      %3868 = vmatpush1.msra.mxu0 0.0
      %3869 = vmatprep.subr.mxu0 0.0
      %3870 = vmatpush1.msra.mxu0 %v3845
      %3871 = vmatprep.subr.mxu0 0.0
      %3872 = vmatpush1.msra.mxu0 %v3737
      %3873 = vmatprep.subr.mxu0 0.0
      %3874 = vmatpush1.msra.mxu0 %v3736
      %3875 = vmatprep.subr.mxu0 0.0
      %3876 = vmatpush1.msra.mxu0 %v3735
      %3877 = vmatprep.subr.mxu0 0.0
      %3878 = vmatpush1.msra.mxu0 %v3734
      %3879 = vmatprep.subr.mxu0 0.0
      %3880 = vmatpush2.msra.mxu0 0.0
      %3881 = vmatprep.subr.mxu0 0.0
      %3882 = vmatpush2.msra.mxu0 0.0
      %3883 = vmatprep.subr.mxu0 0.0
      %3884 = vmatpush2.msra.mxu0 0.0
      %3885 = vmatprep.subr.mxu0 0.0
      %3886 = vmatpush2.msra.mxu0 0.0
      %3887 = vmatprep.subr.mxu0 0.0
      %3888 = vmatpush2.msra.mxu0 0.0
      %3889 = vmatprep.subr.mxu0 0.0
      %3890 = vmatpush2.msra.mxu0 0.0
      %3891 = vmatprep.subr.mxu0 0.0
      %3892 = vmatpush2.msra.mxu0 0.0
      %3893 = vmatprep.subr.mxu0 0.0
      %3894 = vmatpush2.msra.mxu0 0.0
      %3895 = vmatprep.subr.mxu0 0.0
      %3896 = vmatpush2.msra.mxu0 0.0
      %3897 = vmatprep.subr.mxu0 0.0
      %3898 = vmatpush2.msra.mxu0 0.0
      %3899 = vmatprep.subr.mxu0 0.0
      %3900 = vmatpush2.msra.mxu0 0.0
      %3901 = vmatprep.subr.mxu0 0.0
      %3902 = vmatpush2.msra.mxu0 0.0
      %3903 = vmatprep.subr.mxu0 0.0
      %3904 = vmatpush2.msra.mxu0 0.0
      %3905 = vmatprep.subr.mxu0 0.0
      %3906 = vmatpush2.msra.mxu0 0.0
      %3907 = vmatprep.subr.mxu0 0.0
      %3908 = vmatpush2.msra.mxu0 0.0
      %3909 = vmatprep.subr.mxu0 0.0
      %3910 = vmatpush2.msra.mxu0 0.0
      %3911 = vmatprep.mubr.f32.mxu0 0.0
      %3912 = vmatmul.mubr.f32.gmra.mxu0 %v3748
      %v3913 = vpop.f32.mrf.mxu0
      %v3914 = vadd.f32 %v3744, %v3913
      %v3915 = vpop.f32.mrf.mxu0
      %3916 = vmatprep.mubr.f32.mxu0 0.0
      %3917 = vmatmul.mubr.f32.gmra.mxu0 %v3751
      %v3918 = vpop.f32.mrf.mxu0
      %v3919 = vadd.f32 %v3744, %v3918
      %v3920 = vpop.f32.mrf.mxu0
      %3921 = vmatprep.mubr.f32.mxu0 0.0
      %3922 = vmatmul.mubr.f32.gmra.mxu0 %v3754
      %v3923 = vpop.f32.mrf.mxu0
      %v3924 = vadd.f32 %v3744, %v3923
      %v3925 = vpop.f32.mrf.mxu0
      %3926 = vmatprep.mubr.f32.mxu0 0.0
      %3927 = vmatmul.mubr.f32.gmra.mxu0 %v3757
      %v3928 = vpop.f32.mrf.mxu0
      %v3929 = vadd.f32 %v3744, %v3928
      %v3930 = vpop.f32.mrf.mxu0
      %3931 = vmatprep.mubr.f32.mxu0 0.0
      %3932 = vmatmul.mubr.f32.gmra.mxu0 %v3760
      %v3933 = vpop.f32.mrf.mxu0
      %v3934 = vadd.f32 %v3744, %v3933
      %v3935 = vpop.f32.mrf.mxu0
      %3936 = vmatprep.mubr.f32.mxu0 0.0
      %3937 = vmatmul.mubr.f32.gmra.mxu0 %v3763
      %v3938 = vpop.f32.mrf.mxu0
      %v3939 = vadd.f32 %v3744, %v3938
      %v3940 = vpop.f32.mrf.mxu0
      %3941 = vmatprep.mubr.f32.mxu0 0.0
      %3942 = vmatmul.mubr.f32.gmra.mxu0 %v3766
      %v3943 = vpop.f32.mrf.mxu0
      %v3944 = vadd.f32 %v3744, %v3943
      %v3945 = vpop.f32.mrf.mxu0
      %3946 = vmatprep.mubr.f32.mxu0 0.0
      %3947 = vmatmul.mubr.f32.gmra.mxu0 %v3769
      %v3948 = vpop.f32.mrf.mxu0
      %v3949 = vadd.f32 %v3744, %v3948
      %v3950 = vpop.f32.mrf.mxu0
      %3951 = vmatprep.mubr.f32.mxu0 0.0
      %3952 = vmatmul.mubr.f32.gmra.mxu0 %v3772
      %v3953 = vpop.f32.mrf.mxu0
      %v3954 = vadd.f32 %v3744, %v3953
      %v3955 = vpop.f32.mrf.mxu0
      %3956 = vmatprep.mubr.f32.mxu0 0.0
      %3957 = vmatmul.mubr.f32.gmra.mxu0 %v3775
      %v3958 = vpop.f32.mrf.mxu0
      %v3959 = vadd.f32 %v3744, %v3958
      %v3960 = vpop.f32.mrf.mxu0
      %3961 = vmatprep.mubr.f32.mxu0 0.0
      %3962 = vmatmul.mubr.f32.gmra.mxu0 %v3778
      %v3963 = vpop.f32.mrf.mxu0
      %v3964 = vadd.f32 %v3744, %v3963
      %v3965 = vpop.f32.mrf.mxu0
      %3966 = vmatprep.mubr.f32.mxu0 0.0
      %3967 = vmatmul.mubr.f32.gmra.mxu0 %v3781
      %v3968 = vpop.f32.mrf.mxu0
      %v3969 = vadd.f32 %v3744, %v3968
      %v3970 = vpop.f32.mrf.mxu0
      %3971 = vmatprep.mubr.f32.mxu0 0.0
      %3972 = vmatmul.mubr.f32.gmra.mxu0 %v3784
      %v3973 = vpop.f32.mrf.mxu0
      %v3974 = vadd.f32 %v3744, %v3973
      %v3975 = vpop.f32.mrf.mxu0
      %3976 = vmatprep.mubr.f32.mxu0 0.0
      %3977 = vmatmul.mubr.f32.gmra.mxu0 %v3787
      %v3978 = vpop.f32.mrf.mxu0
      %v3979 = vadd.f32 %v3744, %v3978
      %v3980 = vpop.f32.mrf.mxu0
      %3981 = vmatprep.mubr.f32.mxu0 0.0
      %3982 = vmatmul.mubr.f32.gmra.mxu0 %v3790
      %v3983 = vpop.f32.mrf.mxu0
      %v3984 = vadd.f32 %v3744, %v3983
      %v3985 = vpop.f32.mrf.mxu0
      %3986 = vmatprep.mubr.f32.mxu0 0.0
      %3987 = vmatmul.mubr.f32.gmra.mxu0 %v3793
      %v3988 = vpop.f32.mrf.mxu0
      %v3989 = vadd.f32 %v3744, %v3988
      %v3990 = vpop.f32.mrf.mxu0
      %3991 = vmatprep.mubr.f32.mxu0 0.0
      %3992 = vmatmul.mubr.f32.gmra.mxu0 %v3796
      %v3993 = vpop.f32.mrf.mxu0
      %v3994 = vadd.f32 %v3744, %v3993
      %v3995 = vpop.f32.mrf.mxu0
      %3996 = vmatprep.mubr.f32.mxu0 0.0
      %3997 = vmatmul.mubr.f32.gmra.mxu0 %v3799
      %v3998 = vpop.f32.mrf.mxu0
      %v3999 = vadd.f32 %v3744, %v3998
      %v4000 = vpop.f32.mrf.mxu0
      %4001 = vmatprep.mubr.f32.mxu0 0.0
      %4002 = vmatmul.mubr.f32.gmra.mxu0 %v3802
      %v4003 = vpop.f32.mrf.mxu0
      %v4004 = vadd.f32 %v3744, %v4003
      %v4005 = vpop.f32.mrf.mxu0
      %4006 = vmatprep.mubr.f32.mxu0 0.0
      %4007 = vmatmul.mubr.f32.gmra.mxu0 %v3805
      %v4008 = vpop.f32.mrf.mxu0
      %v4009 = vadd.f32 %v3744, %v4008
      %v4010 = vpop.f32.mrf.mxu0
      %4011 = vmatprep.mubr.f32.mxu0 0.0
      %4012 = vmatmul.mubr.f32.gmra.mxu0 %v3808
      %v4013 = vpop.f32.mrf.mxu0
      %v4014 = vadd.f32 %v3744, %v4013
      %v4015 = vpop.f32.mrf.mxu0
      %4016 = vmatprep.mubr.f32.mxu0 0.0
      %4017 = vmatmul.mubr.f32.gmra.mxu0 %v3811
      %v4018 = vpop.f32.mrf.mxu0
      %v4019 = vadd.f32 %v3744, %v4018
      %v4020 = vpop.f32.mrf.mxu0
      %4021 = vmatprep.mubr.f32.mxu0 0.0
      %4022 = vmatmul.mubr.f32.gmra.mxu0 %v3814
      %v4023 = vpop.f32.mrf.mxu0
      %v4024 = vadd.f32 %v3744, %v4023
      %v4025 = vpop.f32.mrf.mxu0
      %4026 = vmatprep.mubr.f32.mxu0 0.0
      %4027 = vmatmul.mubr.f32.gmra.mxu0 %v3817
      %v4028 = vpop.f32.mrf.mxu0
      %v4029 = vadd.f32 %v3744, %v4028
      %v4030 = vpop.f32.mrf.mxu0
      %4031 = vmatprep.mubr.f32.mxu0 0.0
      %4032 = vmatmul.mubr.f32.gmra.mxu0 %v3820
      %v4033 = vpop.f32.mrf.mxu0
      %v4034 = vadd.f32 %v3744, %v4033
      %v4035 = vpop.f32.mrf.mxu0
      %4036 = vmatprep.mubr.f32.mxu0 0.0
      %4037 = vmatmul.mubr.f32.gmra.mxu0 %v3823
      %v4038 = vpop.f32.mrf.mxu0
      %v4039 = vadd.f32 %v3744, %v4038
      %v4040 = vpop.f32.mrf.mxu0
      %4041 = vmatprep.mubr.f32.mxu0 0.0
      %4042 = vmatmul.mubr.f32.gmra.mxu0 %v3826
      %v4043 = vpop.f32.mrf.mxu0
      %v4044 = vadd.f32 %v3744, %v4043
      %v4045 = vpop.f32.mrf.mxu0
      %4046 = vmatprep.mubr.f32.mxu0 0.0
      %4047 = vmatmul.mubr.f32.gmra.mxu0 %v3829
      %v4048 = vpop.f32.mrf.mxu0
      %v4049 = vadd.f32 %v3744, %v4048
      %v4050 = vpop.f32.mrf.mxu0
      %4051 = vmatprep.mubr.f32.mxu0 0.0
      %4052 = vmatmul.mubr.f32.gmra.mxu0 %v3832
      %v4053 = vpop.f32.mrf.mxu0
      %v4054 = vadd.f32 %v3744, %v4053
      %v4055 = vpop.f32.mrf.mxu0
      %4056 = vmatprep.mubr.f32.mxu0 0.0
      %4057 = vmatmul.mubr.f32.gmra.mxu0 %v3835
      %v4058 = vpop.f32.mrf.mxu0
      %v4059 = vadd.f32 %v3744, %v4058
      %v4060 = vpop.f32.mrf.mxu0
      %4061 = vmatprep.mubr.f32.mxu0 0.0
      %4062 = vmatmul.mubr.f32.gmra.mxu0 %v3838
      %v4063 = vpop.f32.mrf.mxu0
      %v4064 = vadd.f32 %v3744, %v4063
      %v4065 = vpop.f32.mrf.mxu0
      %4066 = vmatprep.mubr.f32.mxu0 0.0
      %4067 = vmatmul.mubr.f32.gmra.mxu0 %v3841
      %v4068 = vpop.f32.mrf.mxu0
      %v4069 = vadd.f32 %v3744, %v4068
      %v4070 = vpop.f32.mrf.mxu0
      %4071 = vdwg.mxu0
      %v4072 = vmax.f32 %v3914, 0.0
      %v4073 = vmax.f32 %v3919, 0.0
      %v4074 = vmax.f32 %v3924, 0.0
      %v4075 = vmax.f32 %v3929, 0.0
      %v4076 = vmax.f32 %v3934, 0.0
      %v4077 = vmax.f32 %v3939, 0.0
      %v4078 = vmax.f32 %v3944, 0.0
      %v4079 = vmax.f32 %v3949, 0.0
      %v4080 = vmax.f32 %v3954, 0.0
      %v4081 = vmax.f32 %v3959, 0.0
      %v4082 = vmax.f32 %v3964, 0.0
      %v4083 = vmax.f32 %v3969, 0.0
      %v4084 = vmax.f32 %v3974, 0.0
      %v4085 = vmax.f32 %v3979, 0.0
      %v4086 = vmax.f32 %v3984, 0.0
      %v4087 = vmax.f32 %v3989, 0.0
      %v4088 = vmax.f32 %v3994, 0.0
      %v4089 = vmax.f32 %v3999, 0.0
      %v4090 = vmax.f32 %v4004, 0.0
      %v4091 = vmax.f32 %v4009, 0.0
      %v4092 = vmax.f32 %v4014, 0.0
      %v4093 = vmax.f32 %v4019, 0.0
      %v4094 = vmax.f32 %v4024, 0.0
      %v4095 = vmax.f32 %v4029, 0.0
      %v4096 = vmax.f32 %v4034, 0.0
      %v4097 = vmax.f32 %v4039, 0.0
      %v4098 = vmax.f32 %v4044, 0.0
      %v4099 = vmax.f32 %v4049, 0.0
      %v4100 = vmax.f32 %v4054, 0.0
      %v4101 = vmax.f32 %v4059, 0.0
      %v4102 = vmax.f32 %v4064, 0.0
      %v4103 = vmax.f32 %v4069, 0.0
      %v4104 = vld [vmem:[%s6] sm:$0xf]
      %v4105 = vld [vmem:[%s7] sm:$0x1]
      %v4107 = vlaneseq
      %v4108 = vshrl.u32 %v4107, 7
      %v4109 = vsub.s32 0, %v4108
      %v4110 = vrot.slane %v4105, %v4109
      %v4113 = vsel %vm574, %v4072, 0
      %v4116 = vsel %vm574, %v4073, 0
      %v4119 = vsel %vm574, %v4074, 0
      %v4122 = vsel %vm574, %v4075, 0
      %v4125 = vsel %vm574, %v4076, 0
      %v4128 = vsel %vm574, %v4077, 0
      %v4131 = vsel %vm574, %v4078, 0
      %v4134 = vsel %vm574, %v4079, 0
      %v4137 = vsel %vm574, %v4080, 0
      %v4140 = vsel %vm574, %v4081, 0
      %v4143 = vsel %vm574, %v4082, 0
      %v4146 = vsel %vm574, %v4083, 0
      %v4149 = vsel %vm574, %v4084, 0
      %v4152 = vsel %vm574, %v4085, 0
      %v4155 = vsel %vm574, %v4086, 0
      %v4158 = vsel %vm574, %v4087, 0
      %v4161 = vsel %vm574, %v4088, 0
      %v4164 = vsel %vm574, %v4089, 0
      %v4167 = vsel %vm574, %v4090, 0
      %v4170 = vsel %vm574, %v4091, 0
      %v4173 = vsel %vm574, %v4092, 0
      %v4176 = vsel %vm574, %v4093, 0
      %v4179 = vsel %vm574, %v4094, 0
      %v4182 = vsel %vm574, %v4095, 0
      %v4185 = vsel %vm574, %v4096, 0
      %v4188 = vsel %vm574, %v4097, 0
      %v4191 = vsel %vm574, %v4098, 0
      %v4194 = vsel %vm574, %v4099, 0
      %v4197 = vsel %vm574, %v4100, 0
      %v4200 = vsel %vm574, %v4101, 0
      %v4203 = vsel %vm574, %v4102, 0
      %v4206 = vsel %vm574, %v4103, 0
      %v4209 = vsel %vm3843, %v4104, 0
      %4211 = vmatprep.subr.mxu0 0.0
      %4212 = vmatpush1.msra.mxu0 0.0
      %4213 = vmatprep.subr.mxu0 0.0
      %4214 = vmatpush1.msra.mxu0 0.0
      %4215 = vmatprep.subr.mxu0 0.0
      %4216 = vmatpush1.msra.mxu0 0.0
      %4217 = vmatprep.subr.mxu0 0.0
      %4218 = vmatpush1.msra.mxu0 0.0
      %4219 = vmatprep.subr.mxu0 0.0
      %4220 = vmatpush1.msra.mxu0 0.0
      %4221 = vmatprep.subr.mxu0 0.0
      %4222 = vmatpush1.msra.mxu0 0.0
      %4223 = vmatprep.subr.mxu0 0.0
      %4224 = vmatpush1.msra.mxu0 0.0
      %4225 = vmatprep.subr.mxu0 0.0
      %4226 = vmatpush1.msra.mxu0 0.0
      %4227 = vmatprep.subr.mxu0 0.0
      %4228 = vmatpush1.msra.mxu0 0.0
      %4229 = vmatprep.subr.mxu0 0.0
      %4230 = vmatpush1.msra.mxu0 0.0
      %4231 = vmatprep.subr.mxu0 0.0
      %4232 = vmatpush1.msra.mxu0 0.0
      %4233 = vmatprep.subr.mxu0 0.0
      %4234 = vmatpush1.msra.mxu0 0.0
      %4235 = vmatprep.subr.mxu0 0.0
      %4236 = vmatpush1.msra.mxu0 0.0
      %4237 = vmatprep.subr.mxu0 0.0
      %4238 = vmatpush1.msra.mxu0 0.0
      %4239 = vmatprep.subr.mxu0 0.0
      %4240 = vmatpush1.msra.mxu0 0.0
      %4241 = vmatprep.subr.mxu0 0.0
      %4242 = vmatpush1.msra.mxu0 %v4209
      %4243 = vmatprep.subr.mxu0 0.0
      %4244 = vmatpush2.msra.mxu0 0.0
      %4245 = vmatprep.subr.mxu0 0.0
      %4246 = vmatpush2.msra.mxu0 0.0
      %4247 = vmatprep.subr.mxu0 0.0
      %4248 = vmatpush2.msra.mxu0 0.0
      %4249 = vmatprep.subr.mxu0 0.0
      %4250 = vmatpush2.msra.mxu0 0.0
      %4251 = vmatprep.subr.mxu0 0.0
      %4252 = vmatpush2.msra.mxu0 0.0
      %4253 = vmatprep.subr.mxu0 0.0
      %4254 = vmatpush2.msra.mxu0 0.0
      %4255 = vmatprep.subr.mxu0 0.0
      %4256 = vmatpush2.msra.mxu0 0.0
      %4257 = vmatprep.subr.mxu0 0.0
      %4258 = vmatpush2.msra.mxu0 0.0
      %4259 = vmatprep.subr.mxu0 0.0
      %4260 = vmatpush2.msra.mxu0 0.0
      %4261 = vmatprep.subr.mxu0 0.0
      %4262 = vmatpush2.msra.mxu0 0.0
      %4263 = vmatprep.subr.mxu0 0.0
      %4264 = vmatpush2.msra.mxu0 0.0
      %4265 = vmatprep.subr.mxu0 0.0
      %4266 = vmatpush2.msra.mxu0 0.0
      %4267 = vmatprep.subr.mxu0 0.0
      %4268 = vmatpush2.msra.mxu0 0.0
      %4269 = vmatprep.subr.mxu0 0.0
      %4270 = vmatpush2.msra.mxu0 0.0
      %4271 = vmatprep.subr.mxu0 0.0
      %4272 = vmatpush2.msra.mxu0 0.0
      %4273 = vmatprep.subr.mxu0 0.0
      %4274 = vmatpush2.msra.mxu0 0.0
      %4275 = vmatprep.mubr.f32.mxu0 0.0
      %4276 = vmatmul.mubr.f32.gmra.mxu0 %v4113
      %v4277 = vpop.f32.mrf.mxu0
      %v4278 = vadd.f32 %v4110, %v4277
      %v4279 = vpop.f32.mrf.mxu0
      %4280 = vmatprep.mubr.f32.mxu0 0.0
      %4281 = vmatmul.mubr.f32.gmra.mxu0 %v4116
      %v4282 = vpop.f32.mrf.mxu0
      %v4283 = vadd.f32 %v4110, %v4282
      %v4284 = vpop.f32.mrf.mxu0
      %4285 = vmatprep.mubr.f32.mxu0 0.0
      %4286 = vmatmul.mubr.f32.gmra.mxu0 %v4119
      %v4287 = vpop.f32.mrf.mxu0
      %v4288 = vadd.f32 %v4110, %v4287
      %v4289 = vpop.f32.mrf.mxu0
      %4290 = vmatprep.mubr.f32.mxu0 0.0
      %4291 = vmatmul.mubr.f32.gmra.mxu0 %v4122
      %v4292 = vpop.f32.mrf.mxu0
      %v4293 = vadd.f32 %v4110, %v4292
      %v4294 = vpop.f32.mrf.mxu0
      %4295 = vmatprep.mubr.f32.mxu0 0.0
      %4296 = vmatmul.mubr.f32.gmra.mxu0 %v4125
      %v4297 = vpop.f32.mrf.mxu0
      %v4298 = vadd.f32 %v4110, %v4297
      %v4299 = vpop.f32.mrf.mxu0
      %4300 = vmatprep.mubr.f32.mxu0 0.0
      %4301 = vmatmul.mubr.f32.gmra.mxu0 %v4128
      %v4302 = vpop.f32.mrf.mxu0
      %v4303 = vadd.f32 %v4110, %v4302
      %v4304 = vpop.f32.mrf.mxu0
      %4305 = vmatprep.mubr.f32.mxu0 0.0
      %4306 = vmatmul.mubr.f32.gmra.mxu0 %v4131
      %v4307 = vpop.f32.mrf.mxu0
      %v4308 = vadd.f32 %v4110, %v4307
      %v4309 = vpop.f32.mrf.mxu0
      %4310 = vmatprep.mubr.f32.mxu0 0.0
      %4311 = vmatmul.mubr.f32.gmra.mxu0 %v4134
      %v4312 = vpop.f32.mrf.mxu0
      %v4313 = vadd.f32 %v4110, %v4312
      %v4314 = vpop.f32.mrf.mxu0
      %4315 = vmatprep.mubr.f32.mxu0 0.0
      %4316 = vmatmul.mubr.f32.gmra.mxu0 %v4137
      %v4317 = vpop.f32.mrf.mxu0
      %v4318 = vadd.f32 %v4110, %v4317
      %v4319 = vpop.f32.mrf.mxu0
      %4320 = vmatprep.mubr.f32.mxu0 0.0
      %4321 = vmatmul.mubr.f32.gmra.mxu0 %v4140
      %v4322 = vpop.f32.mrf.mxu0
      %v4323 = vadd.f32 %v4110, %v4322
      %v4324 = vpop.f32.mrf.mxu0
      %4325 = vmatprep.mubr.f32.mxu0 0.0
      %4326 = vmatmul.mubr.f32.gmra.mxu0 %v4143
      %v4327 = vpop.f32.mrf.mxu0
      %v4328 = vadd.f32 %v4110, %v4327
      %v4329 = vpop.f32.mrf.mxu0
      %4330 = vmatprep.mubr.f32.mxu0 0.0
      %4331 = vmatmul.mubr.f32.gmra.mxu0 %v4146
      %v4332 = vpop.f32.mrf.mxu0
      %v4333 = vadd.f32 %v4110, %v4332
      %v4334 = vpop.f32.mrf.mxu0
      %4335 = vmatprep.mubr.f32.mxu0 0.0
      %4336 = vmatmul.mubr.f32.gmra.mxu0 %v4149
      %v4337 = vpop.f32.mrf.mxu0
      %v4338 = vadd.f32 %v4110, %v4337
      %v4339 = vpop.f32.mrf.mxu0
      %4340 = vmatprep.mubr.f32.mxu0 0.0
      %4341 = vmatmul.mubr.f32.gmra.mxu0 %v4152
      %v4342 = vpop.f32.mrf.mxu0
      %v4343 = vadd.f32 %v4110, %v4342
      %v4344 = vpop.f32.mrf.mxu0
      %4345 = vmatprep.mubr.f32.mxu0 0.0
      %4346 = vmatmul.mubr.f32.gmra.mxu0 %v4155
      %v4347 = vpop.f32.mrf.mxu0
      %v4348 = vadd.f32 %v4110, %v4347
      %v4349 = vpop.f32.mrf.mxu0
      %4350 = vmatprep.mubr.f32.mxu0 0.0
      %4351 = vmatmul.mubr.f32.gmra.mxu0 %v4158
      %v4352 = vpop.f32.mrf.mxu0
      %v4353 = vadd.f32 %v4110, %v4352
      %v4354 = vpop.f32.mrf.mxu0
      %4355 = vmatprep.mubr.f32.mxu0 0.0
      %4356 = vmatmul.mubr.f32.gmra.mxu0 %v4161
      %v4357 = vpop.f32.mrf.mxu0
      %v4358 = vadd.f32 %v4110, %v4357
      %v4359 = vpop.f32.mrf.mxu0
      %4360 = vmatprep.mubr.f32.mxu0 0.0
      %4361 = vmatmul.mubr.f32.gmra.mxu0 %v4164
      %v4362 = vpop.f32.mrf.mxu0
      %v4363 = vadd.f32 %v4110, %v4362
      %v4364 = vpop.f32.mrf.mxu0
      %4365 = vmatprep.mubr.f32.mxu0 0.0
      %4366 = vmatmul.mubr.f32.gmra.mxu0 %v4167
      %v4367 = vpop.f32.mrf.mxu0
      %v4368 = vadd.f32 %v4110, %v4367
      %v4369 = vpop.f32.mrf.mxu0
      %4370 = vmatprep.mubr.f32.mxu0 0.0
      %4371 = vmatmul.mubr.f32.gmra.mxu0 %v4170
      %v4372 = vpop.f32.mrf.mxu0
      %v4373 = vadd.f32 %v4110, %v4372
      %v4374 = vpop.f32.mrf.mxu0
      %4375 = vmatprep.mubr.f32.mxu0 0.0
      %4376 = vmatmul.mubr.f32.gmra.mxu0 %v4173
      %v4377 = vpop.f32.mrf.mxu0
      %v4378 = vadd.f32 %v4110, %v4377
      %v4379 = vpop.f32.mrf.mxu0
      %4380 = vmatprep.mubr.f32.mxu0 0.0
      %4381 = vmatmul.mubr.f32.gmra.mxu0 %v4176
      %v4382 = vpop.f32.mrf.mxu0
      %v4383 = vadd.f32 %v4110, %v4382
      %v4384 = vpop.f32.mrf.mxu0
      %4385 = vmatprep.mubr.f32.mxu0 0.0
      %4386 = vmatmul.mubr.f32.gmra.mxu0 %v4179
      %v4387 = vpop.f32.mrf.mxu0
      %v4388 = vadd.f32 %v4110, %v4387
      %v4389 = vpop.f32.mrf.mxu0
      %4390 = vmatprep.mubr.f32.mxu0 0.0
      %4391 = vmatmul.mubr.f32.gmra.mxu0 %v4182
      %v4392 = vpop.f32.mrf.mxu0
      %v4393 = vadd.f32 %v4110, %v4392
      %v4394 = vpop.f32.mrf.mxu0
      %4395 = vmatprep.mubr.f32.mxu0 0.0
      %4396 = vmatmul.mubr.f32.gmra.mxu0 %v4185
      %v4397 = vpop.f32.mrf.mxu0
      %v4398 = vadd.f32 %v4110, %v4397
      %v4399 = vpop.f32.mrf.mxu0
      %4400 = vmatprep.mubr.f32.mxu0 0.0
      %4401 = vmatmul.mubr.f32.gmra.mxu0 %v4188
      %v4402 = vpop.f32.mrf.mxu0
      %v4403 = vadd.f32 %v4110, %v4402
      %v4404 = vpop.f32.mrf.mxu0
      %4405 = vmatprep.mubr.f32.mxu0 0.0
      %4406 = vmatmul.mubr.f32.gmra.mxu0 %v4191
      %v4407 = vpop.f32.mrf.mxu0
      %v4408 = vadd.f32 %v4110, %v4407
      %v4409 = vpop.f32.mrf.mxu0
      %4410 = vmatprep.mubr.f32.mxu0 0.0
      %4411 = vmatmul.mubr.f32.gmra.mxu0 %v4194
      %v4412 = vpop.f32.mrf.mxu0
      %v4413 = vadd.f32 %v4110, %v4412
      %v4414 = vpop.f32.mrf.mxu0
      %4415 = vmatprep.mubr.f32.mxu0 0.0
      %4416 = vmatmul.mubr.f32.gmra.mxu0 %v4197
      %v4417 = vpop.f32.mrf.mxu0
      %v4418 = vadd.f32 %v4110, %v4417
      %v4419 = vpop.f32.mrf.mxu0
      %4420 = vmatprep.mubr.f32.mxu0 0.0
      %4421 = vmatmul.mubr.f32.gmra.mxu0 %v4200
      %v4422 = vpop.f32.mrf.mxu0
      %v4423 = vadd.f32 %v4110, %v4422
      %v4424 = vpop.f32.mrf.mxu0
      %4425 = vmatprep.mubr.f32.mxu0 0.0
      %4426 = vmatmul.mubr.f32.gmra.mxu0 %v4203
      %v4427 = vpop.f32.mrf.mxu0
      %v4428 = vadd.f32 %v4110, %v4427
      %v4429 = vpop.f32.mrf.mxu0
      %4430 = vmatprep.mubr.f32.mxu0 0.0
      %4431 = vmatmul.mubr.f32.gmra.mxu0 %v4206
      %v4432 = vpop.f32.mrf.mxu0
      %v4433 = vadd.f32 %v4110, %v4432
      %v4434 = vpop.f32.mrf.mxu0
      %4435 = vdwg.mxu0
      %v4436 = vmax.f32 %v4278, 0.0
      %v4437 = vmax.f32 %v4283, 0.0
      %v4438 = vmax.f32 %v4288, 0.0
      %v4439 = vmax.f32 %v4293, 0.0
      %v4440 = vmax.f32 %v4298, 0.0
      %v4441 = vmax.f32 %v4303, 0.0
      %v4442 = vmax.f32 %v4308, 0.0
      %v4443 = vmax.f32 %v4313, 0.0
      %v4444 = vmax.f32 %v4318, 0.0
      %v4445 = vmax.f32 %v4323, 0.0
      %v4446 = vmax.f32 %v4328, 0.0
      %v4447 = vmax.f32 %v4333, 0.0
      %v4448 = vmax.f32 %v4338, 0.0
      %v4449 = vmax.f32 %v4343, 0.0
      %v4450 = vmax.f32 %v4348, 0.0
      %v4451 = vmax.f32 %v4353, 0.0
      %v4452 = vmax.f32 %v4358, 0.0
      %v4453 = vmax.f32 %v4363, 0.0
      %v4454 = vmax.f32 %v4368, 0.0
      %v4455 = vmax.f32 %v4373, 0.0
      %v4456 = vmax.f32 %v4378, 0.0
      %v4457 = vmax.f32 %v4383, 0.0
      %v4458 = vmax.f32 %v4388, 0.0
      %v4459 = vmax.f32 %v4393, 0.0
      %v4460 = vmax.f32 %v4398, 0.0
      %v4461 = vmax.f32 %v4403, 0.0
      %v4462 = vmax.f32 %v4408, 0.0
      %v4463 = vmax.f32 %v4413, 0.0
      %v4464 = vmax.f32 %v4418, 0.0
      %v4465 = vmax.f32 %v4423, 0.0
      %v4466 = vmax.f32 %v4428, 0.0
      %v4467 = vmax.f32 %v4433, 0.0
      %4500 = vrot.lane.b32.xlu0 %v4436, 116
      %v4501 = vpop.permute.xlu0 %4500
      %4502 = vrot.lane.b32.xlu0 %v4437, 116
      %v4503 = vpop.permute.xlu0 %4502
      %4504 = vrot.lane.b32.xlu0 %v4438, 116
      %v4505 = vpop.permute.xlu0 %4504
      %4506 = vrot.lane.b32.xlu0 %v4439, 116
      %v4507 = vpop.permute.xlu0 %4506
      %4508 = vrot.lane.b32.xlu0 %v4440, 116
      %v4509 = vpop.permute.xlu0 %4508
      %4510 = vrot.lane.b32.xlu0 %v4441, 116
      %v4511 = vpop.permute.xlu0 %4510
      %4512 = vrot.lane.b32.xlu0 %v4442, 116
      %v4513 = vpop.permute.xlu0 %4512
      %4514 = vrot.lane.b32.xlu0 %v4443, 116
      %v4515 = vpop.permute.xlu0 %4514
      %4516 = vrot.lane.b32.xlu0 %v4444, 116
      %v4517 = vpop.permute.xlu0 %4516
      %4518 = vrot.lane.b32.xlu0 %v4445, 116
      %v4519 = vpop.permute.xlu0 %4518
      %4520 = vrot.lane.b32.xlu0 %v4446, 116
      %v4521 = vpop.permute.xlu0 %4520
      %4522 = vrot.lane.b32.xlu0 %v4447, 116
      %v4523 = vpop.permute.xlu0 %4522
      %4524 = vrot.lane.b32.xlu0 %v4448, 116
      %v4525 = vpop.permute.xlu0 %4524
      %4526 = vrot.lane.b32.xlu0 %v4449, 116
      %v4527 = vpop.permute.xlu0 %4526
      %4528 = vrot.lane.b32.xlu0 %v4450, 116
      %v4529 = vpop.permute.xlu0 %4528
      %4530 = vrot.lane.b32.xlu0 %v4451, 116
      %v4531 = vpop.permute.xlu0 %4530
      %4532 = vrot.lane.b32.xlu0 %v4452, 116
      %v4533 = vpop.permute.xlu0 %4532
      %4534 = vrot.lane.b32.xlu0 %v4453, 116
      %v4535 = vpop.permute.xlu0 %4534
      %4536 = vrot.lane.b32.xlu0 %v4454, 116
      %v4537 = vpop.permute.xlu0 %4536
      %4538 = vrot.lane.b32.xlu0 %v4455, 116
      %v4539 = vpop.permute.xlu0 %4538
      %4540 = vrot.lane.b32.xlu0 %v4456, 116
      %v4541 = vpop.permute.xlu0 %4540
      %4542 = vrot.lane.b32.xlu0 %v4457, 116
      %v4543 = vpop.permute.xlu0 %4542
      %4544 = vrot.lane.b32.xlu0 %v4458, 116
      %v4545 = vpop.permute.xlu0 %4544
      %4546 = vrot.lane.b32.xlu0 %v4459, 116
      %v4547 = vpop.permute.xlu0 %4546
      %4548 = vrot.lane.b32.xlu0 %v4460, 116
      %v4549 = vpop.permute.xlu0 %4548
      %4550 = vrot.lane.b32.xlu0 %v4461, 116
      %v4551 = vpop.permute.xlu0 %4550
      %4552 = vrot.lane.b32.xlu0 %v4462, 116
      %v4553 = vpop.permute.xlu0 %4552
      %4554 = vrot.lane.b32.xlu0 %v4463, 116
      %v4555 = vpop.permute.xlu0 %4554
      %4556 = vrot.lane.b32.xlu0 %v4464, 116
      %v4557 = vpop.permute.xlu0 %4556
      %4558 = vrot.lane.b32.xlu0 %v4465, 116
      %v4559 = vpop.permute.xlu0 %4558
      %4560 = vrot.lane.b32.xlu0 %v4466, 116
      %v4561 = vpop.permute.xlu0 %4560
      %4562 = vrot.lane.b32.xlu0 %v4467, 116
      %v4563 = vpop.permute.xlu0 %4562
      %4596 = vst.msk [vmem:[%s325] sm:$0xff] %vm3539, %v4436
      %4597 = vst.msk [vmem:[%s325 + $0x8] sm:$0xff] %vm3539, %v4437
      %4598 = vst.msk [vmem:[%s325 + $0x10] sm:$0xff] %vm3539, %v4501
      %4599 = vst.msk [vmem:[%s325 + $0x18] sm:$0xff] %vm3539, %v4503
      %4600 = vst.msk [vmem:[%s325 + $0x20] sm:$0xff] %vm3539, %v4438
      %4601 = vst.msk [vmem:[%s325 + $0x28] sm:$0xff] %vm3539, %v4439
      %4602 = vst.msk [vmem:[%s325 + $0x30] sm:$0xff] %vm3539, %v4505
      %4603 = vst.msk [vmem:[%s325 + $0x38] sm:$0xff] %vm3539, %v4507
      %4604 = vst.msk [vmem:[%s325 + $0x40] sm:$0xff] %vm3539, %v4440
      %4605 = vst.msk [vmem:[%s325 + $0x48] sm:$0xff] %vm3539, %v4441
      %4606 = vst.msk [vmem:[%s325 + $0x50] sm:$0xff] %vm3539, %v4509
      %4607 = vst.msk [vmem:[%s325 + $0x58] sm:$0xff] %vm3539, %v4511
      %4608 = vst.msk [vmem:[%s325 + $0x60] sm:$0xff] %vm3539, %v4442
      %4609 = vst.msk [vmem:[%s325 + $0x68] sm:$0xff] %vm3539, %v4443
      %4610 = vst.msk [vmem:[%s325 + $0x70] sm:$0xff] %vm3539, %v4513
      %4611 = vst.msk [vmem:[%s325 + $0x78] sm:$0xff] %vm3539, %v4515
      %4612 = vst.msk [vmem:[%s325 + $0x80] sm:$0xff] %vm3539, %v4444
      %4613 = vst.msk [vmem:[%s325 + $0x88] sm:$0xff] %vm3539, %v4445
      %4614 = vst.msk [vmem:[%s325 + $0x90] sm:$0xff] %vm3539, %v4517
      %4615 = vst.msk [vmem:[%s325 + $0x98] sm:$0xff] %vm3539, %v4519
      %4616 = vst.msk [vmem:[%s325 + $0xa0] sm:$0xff] %vm3539, %v4446
      %4617 = vst.msk [vmem:[%s325 + $0xa8] sm:$0xff] %vm3539, %v4447
      %4618 = vst.msk [vmem:[%s325 + $0xb0] sm:$0xff] %vm3539, %v4521
      %4619 = vst.msk [vmem:[%s325 + $0xb8] sm:$0xff] %vm3539, %v4523
      %4620 = vst.msk [vmem:[%s325 + $0xc0] sm:$0xff] %vm3539, %v4448
      %4621 = vst.msk [vmem:[%s325 + $0xc8] sm:$0xff] %vm3539, %v4449
      %4622 = vst.msk [vmem:[%s325 + $0xd0] sm:$0xff] %vm3539, %v4525
      %4623 = vst.msk [vmem:[%s325 + $0xd8] sm:$0xff] %vm3539, %v4527
      %4624 = vst.msk [vmem:[%s325 + $0xe0] sm:$0xff] %vm3539, %v4450
      %4625 = vst.msk [vmem:[%s325 + $0xe8] sm:$0xff] %vm3539, %v4451
      %4626 = vst.msk [vmem:[%s325 + $0xf0] sm:$0xff] %vm3539, %v4529
      %4627 = vst.msk [vmem:[%s325 + $0xf8] sm:$0xff] %vm3539, %v4531
      %4628 = vst.msk [vmem:[%s325 + $0x100] sm:$0xff] %vm3539, %v4452
      %4629 = vst.msk [vmem:[%s325 + $0x108] sm:$0xff] %vm3539, %v4453
      %4630 = vst.msk [vmem:[%s325 + $0x110] sm:$0xff] %vm3539, %v4533
      %4631 = vst.msk [vmem:[%s325 + $0x118] sm:$0xff] %vm3539, %v4535
      %4632 = vst.msk [vmem:[%s325 + $0x120] sm:$0xff] %vm3539, %v4454
      %4633 = vst.msk [vmem:[%s325 + $0x128] sm:$0xff] %vm3539, %v4455
      %4634 = vst.msk [vmem:[%s325 + $0x130] sm:$0xff] %vm3539, %v4537
      %4635 = vst.msk [vmem:[%s325 + $0x138] sm:$0xff] %vm3539, %v4539
      %4636 = vst.msk [vmem:[%s325 + $0x140] sm:$0xff] %vm3539, %v4456
      %4637 = vst.msk [vmem:[%s325 + $0x148] sm:$0xff] %vm3539, %v4457
      %4638 = vst.msk [vmem:[%s325 + $0x150] sm:$0xff] %vm3539, %v4541
      %4639 = vst.msk [vmem:[%s325 + $0x158] sm:$0xff] %vm3539, %v4543
      %4640 = vst.msk [vmem:[%s325 + $0x160] sm:$0xff] %vm3539, %v4458
      %4641 = vst.msk [vmem:[%s325 + $0x168] sm:$0xff] %vm3539, %v4459
      %4642 = vst.msk [vmem:[%s325 + $0x170] sm:$0xff] %vm3539, %v4545
      %4643 = vst.msk [vmem:[%s325 + $0x178] sm:$0xff] %vm3539, %v4547
      %4644 = vst.msk [vmem:[%s325 + $0x180] sm:$0xff] %vm3539, %v4460
      %4645 = vst.msk [vmem:[%s325 + $0x188] sm:$0xff] %vm3539, %v4461
      %4646 = vst.msk [vmem:[%s325 + $0x190] sm:$0xff] %vm3539, %v4549
      %4647 = vst.msk [vmem:[%s325 + $0x198] sm:$0xff] %vm3539, %v4551
      %4648 = vst.msk [vmem:[%s325 + $0x1a0] sm:$0xff] %vm3539, %v4462
      %4649 = vst.msk [vmem:[%s325 + $0x1a8] sm:$0xff] %vm3539, %v4463
      %4650 = vst.msk [vmem:[%s325 + $0x1b0] sm:$0xff] %vm3539, %v4553
      %4651 = vst.msk [vmem:[%s325 + $0x1b8] sm:$0xff] %vm3539, %v4555
      %4652 = vst.msk [vmem:[%s325 + $0x1c0] sm:$0xff] %vm3539, %v4464
      %4653 = vst.msk [vmem:[%s325 + $0x1c8] sm:$0xff] %vm3539, %v4465
      %4654 = vst.msk [vmem:[%s325 + $0x1d0] sm:$0xff] %vm3539, %v4557
      %4655 = vst.msk [vmem:[%s325 + $0x1d8] sm:$0xff] %vm3539, %v4559
      %4656 = vst.msk [vmem:[%s325 + $0x1e0] sm:$0xff] %vm3539, %v4466
      %4657 = vst.msk [vmem:[%s325 + $0x1e8] sm:$0xff] %vm3539, %v4467
      %4658 = vst.msk [vmem:[%s325 + $0x1f0] sm:$0xff] %vm3539, %v4561
      %4659 = vst.msk [vmem:[%s325 + $0x1f8] sm:$0xff] %vm3539, %v4563
      %p4660 = scmp.lt.s32.totalorder %s19, 1
      %s4661 = scalar_select %p4660, %s19, 1
      %s4662 = smul.addr %s4661, 64
      %s4663 = smul.addr %s4662, 8
      %s4664 = scalar_lea.vmem %s8, %s4663
      // Predicated region
      $region53: #{tpu_custom_call.1} parent=51 // pred_check
        %p4665 = pneg %p215
      $region54: #{tpu_custom_call.1} parent=51 // pred_check_branch
        %4667 = sbr.rel (%p4665) target = $region56
      $region55: #{tpu_custom_call.1} parent=51 // pred_region
        _
      $region56: #{tpu_custom_call.1} parent=51 // pred_fallthru
        _
    $region52: #{tpu_custom_call.1} parent=5 // pred_fallthru
      _
    %p4668 = scmp.le.s32.totalorder 2, %s14
    // Predicated region
    $region57: #{tpu_custom_call.1} parent=5 // pred_check
      %p4669 = pneg %p4668
    $region58: #{tpu_custom_call.1} parent=5 // pred_check_branch
      %4671 = sbr.rel (%p4669) target = $region60
    $region59: #{tpu_custom_call.1} parent=5 // pred_region
      %s4672 = ssub.s32 %s14, 2
      // Predicated region
      $region61: #{tpu_custom_call.1} parent=59 // pred_check
        %p4673 = pneg %p221
      $region62: #{tpu_custom_call.1} parent=59 // pred_check_branch
        %4675 = sbr.rel (%p4673) target = $region64
      $region63: #{tpu_custom_call.1} parent=59 // pred_region
        %p4676 = scmp.lt.s32.totalorder %s20, 1
        %s4677 = scalar_select %p4676, %s20, 1
        %s4678 = smul.addr %s4677, 64
        %s4679 = smul.addr %s4678, 8
        %s4680 = scalar_lea.vmem %s8, %s4679
      $region64: #{tpu_custom_call.1} parent=59 // pred_fallthru
        _
    $region60: #{tpu_custom_call.1} parent=5 // pred_fallthru
      _
  $region6: #{tpu_custom_call.1} parent=0 // loop_footer
    %s18 = sadd.s32 1, %s14
  $region7: #{tpu_custom_call.1} parent=0 // loop_footer_branch
    %13 = sbr.rel target = $region3
  $region8: #{tpu_custom_call.1} parent=0 // loop_exit
    _

</llo_original>
